<compile_context>
chip_gen: v7x
topology: tpu7x:2x2x1
jax: 0.10.0
libtpu: 0.0.40
codegen_flags: <defaults>
</compile_context>

<pallas_src>
import functools

import jax
import jax.numpy as jnp
from jax import lax
from jax.experimental import pallas as pl
from jax.experimental.pallas import tpu as pltpu


@functools.lru_cache(maxsize=None)
def _vmem_limit_bytes():
    # Leave headroom below physical VMEM (64 MiB on v7x, 128 MiB on v5e/v6e).
    try:
        cap = pltpu.get_tpu_info().vmem_capacity_bytes
    except Exception:
        cap = 64 * 1024 * 1024
    return int(min(max(cap - 16 * 1024 * 1024, 32 * 1024 * 1024),
                   112 * 1024 * 1024))


def _row_tile(H, W, target_rows=512):
    """Largest divisor of H such that th*W ~ target and >=2 row tiles exist."""
    th = max(1, min(H, max(1, target_rows // max(W, 1))))
    if H >= 2:
        th = min(th, (H + 1) // 2)   # >=2 grid steps: pipelining + megacore
    while H % th:
        th -= 1
    return th


# ----------------------------------------------------------------------------
# Stage A: fused 1x1 convs + (3x3 max-pool + 1x1 projection), one read of x
# ----------------------------------------------------------------------------
def _fused_1x1_pool_kernel(x_ref, w1_ref, b1_ref, w4_ref, b4_ref,
                           y1_ref, r2_ref, r3_ref, y4_ref):
    H, W, Cin = x_ref.shape
    th, _, n1 = y1_ref.shape
    n2r = r2_ref.shape[-1]
    n3r = r3_ref.shape[-1]
    r0 = pl.multiple_of(pl.program_id(1) * th, th)

    rows = x_ref[pl.ds(r0, th), :, :]                        # (th, W, Cin) bf16

    # --- fused 1x1 convs: [branch-1 | 3x3-reduce | 5x5-reduce] ----------------
    flat = rows.reshape(th * W, Cin)
    f = jnp.dot(flat, w1_ref[...], preferred_element_type=jnp.float32)
    f = jnp.maximum(f + b1_ref[...], 0.0)
    y1_ref[...] = f[:, :n1].reshape(th, W, n1).astype(y1_ref.dtype)
    r2_ref[...] = f[:, n1:n1 + n2r].reshape(th, W, n2r).astype(r2_ref.dtype)
    r3_ref[...] = f[:, n1 + n2r:n1 + n2r + n3r].reshape(th, W, n3r).astype(r3_ref.dtype)

    # --- branch 4: separable 3x3 s=1 p=1 max-pool (clamped edges == -inf pad) -
    up_row = x_ref[pl.ds(jnp.maximum(r0 - 1, 0), 1), :, :]          # (1, W, Cin)
    dn_row = x_ref[pl.ds(jnp.minimum(r0 + th, H - 1), 1), :, :]     # (1, W, Cin)
    if th > 1:
        up = jnp.concatenate([up_row, rows[:th - 1]], axis=0)
        dn = jnp.concatenate([rows[1:], dn_row], axis=0)
    else:
        up, dn = up_row, dn_row
    vm = jnp.maximum(jnp.maximum(rows, up), dn)                     # vertical max
    if W > 1:
        lf = jnp.concatenate([vm[:, :1], vm[:, :W - 1]], axis=1)
        rt = jnp.concatenate([vm[:, 1:], vm[:, W - 1:]], axis=1)
        pooled = jnp.maximum(jnp.maximum(vm, lf), rt)               # horizontal max
    else:
        pooled = vm
    p = jnp.dot(pooled.reshape(th * W, Cin), w4_ref[...],
                preferred_element_type=jnp.float32)
    p = jnp.maximum(p + b4_ref[...], 0.0)
    y4_ref[...] = p.reshape(th, W, y4_ref.shape[-1]).astype(y4_ref.dtype)


def fused_1x1_pool(x_nhwc, w_cat, b_cat, w4, b4, n1, n2r, n3r, *, th):
    N, H, W, Cin = x_nhwc.shape
    Of = w_cat.shape[1]
    P = w4.shape[1]
    grid = (N, H // th)

    return pl.pallas_call(
        _fused_1x1_pool_kernel,
        out_shape=(
            jax.ShapeDtypeStruct((N, H, W, n1), jnp.float32),
            jax.ShapeDtypeStruct((N, H, W, n2r), jnp.bfloat16),
            jax.ShapeDtypeStruct((N, H, W, n3r), jnp.bfloat16),
            jax.ShapeDtypeStruct((N, H, W, P), jnp.float32),
        ),
        grid_spec=pltpu.PrefetchScalarGridSpec(
            num_scalar_prefetch=0,
            grid=grid,
            in_specs=[
                # x stays block-resident across the row axis (fetched once / n)
                pl.BlockSpec((None, H, W, Cin), lambda n, r: (n, 0, 0, 0)),
                pl.BlockSpec((Cin, Of), lambda n, r: (0, 0)),   # resident weights
                pl.BlockSpec((1, Of), lambda n, r: (0, 0)),     # resident bias
                pl.BlockSpec((Cin, P), lambda n, r: (0, 0)),
                pl.BlockSpec((1, P), lambda n, r: (0, 0)),
            ],
            out_specs=(
                pl.BlockSpec((None, th, W, n1), lambda n, r: (n, r, 0, 0)),
                pl.BlockSpec((None, th, W, n2r), lambda n, r: (n, r, 0, 0)),
                pl.BlockSpec((None, th, W, n3r), lambda n, r: (n, r, 0, 0)),
                pl.BlockSpec((None, th, W, P), lambda n, r: (n, r, 0, 0)),
            ),
        ),
        compiler_params=pltpu.CompilerParams(
            dimension_semantics=("parallel", "parallel"),
            vmem_limit_bytes=_vmem_limit_bytes(),
        ),
    )(x_nhwc, w_cat, b_cat, w4, b4)


# ----------------------------------------------------------------------------
# Stage B: kxk conv (stride 1) + bias + ReLU, dx taps folded into matmul K
# ----------------------------------------------------------------------------
def _conv_kxk_kernel(x_ref, w_ref, b_ref, o_ref):
    th, W, O = o_ref.shape
    C = x_ref.shape[-1]
    kh = w_ref.shape[0]
    kw = w_ref.shape[1] // C
    r0 = pl.multiple_of(pl.program_id(1) * th, th)

    acc = jnp.zeros((th * W, O), jnp.float32)
    for dy in range(kh):                      # kh matmuls with K = kw*C each
        rows = x_ref[pl.ds(r0 + dy, th), :, :]                   # (th, Wp, C)
        win = jnp.concatenate([rows[:, dx:dx + W, :] for dx in range(kw)],
                              axis=-1)                           # (th, W, kw*C)
        acc = acc + jnp.dot(win.reshape(th * W, kw * C), w_ref[dy],
                            preferred_element_type=jnp.float32)
    out = jnp.maximum(acc + b_ref[...], 0.0)
    o_ref[...] = out.reshape(th, W, O).astype(o_ref.dtype)


def conv_kxk_bias_relu(r_nhwc, w_oihw, b, *, pad, th):
    """kxk conv (stride 1, zero pad) + bias + ReLU on bf16 NHWC activations."""
    N, H, W, C = r_nhwc.shape
    O, I, kh, kw = w_oihw.shape
    assert I == C and pad == (kh - 1) // 2 and pad == (kw - 1) // 2
    # TODO(synk): border padding could move in-kernel (zero-filled VMEM scratch)
    # to drop this pass entirely; it only touches the tiny reduce channels.
    xp = jnp.pad(r_nhwc, ((0, 0), (pad, pad), (pad, pad), (0, 0)))
    # weights indexed by dy on a leading dim; rows within a tap ordered (dx, c)
    wf = jnp.transpose(w_oihw, (2, 3, 1, 0)).reshape(kh, kw * C, O)
    wf = wf.astype(jnp.bfloat16)
    bf = b.astype(jnp.float32).reshape(1, O)
    Hp, Wp = H + 2 * pad, W + 2 * pad
    grid = (N, H // th)

    return pl.pallas_call(
        _conv_kxk_kernel,
        out_shape=jax.ShapeDtypeStruct((N, H, W, O), jnp.float32),
        grid_spec=pltpu.PrefetchScalarGridSpec(
            num_scalar_prefetch=0,
            grid=grid,
            in_specs=[
                pl.BlockSpec((None, Hp, Wp, C), lambda n, r: (n, 0, 0, 0)),
                pl.BlockSpec((kh, kw * C, O), lambda n, r: (0, 0, 0)),
                pl.BlockSpec((1, O), lambda n, r: (0, 0)),
            ],
            out_specs=pl.BlockSpec((None, th, W, O), lambda n, r: (n, r, 0, 0)),
        ),
        compiler_params=pltpu.CompilerParams(
            dimension_semantics=("parallel", "parallel"),
            vmem_limit_bytes=_vmem_limit_bytes(),
        ),
    )(xp, wf, bf)


# ----------------------------------------------------------------------------
# Inception block forward (Pallas-backed)
# ----------------------------------------------------------------------------
def inception_block(x_nchw, p):
    """Pallas-backed forward of InceptionBlock. Input/output are NCHW."""
    N, Cin, H, W = x_nchw.shape
    # single f32 -> bf16 cast fused with the NHWC transpose
    x = jnp.transpose(x_nchw, (0, 2, 3, 1)).astype(jnp.bfloat16)

    n1 = p["w1"].shape[0]
    n2r = p["w2r"].shape[0]
    n3r = p["w3r"].shape[0]

    # Fused 1x1 weights: [branch-1 | 3x3-reduce | 5x5-reduce]
    w_cat = jnp.concatenate(
        [p["w1"].reshape(n1, Cin).T,
         p["w2r"].reshape(n2r, Cin).T,
         p["w3r"].reshape(n3r, Cin).T], axis=1).astype(jnp.bfloat16)
    b_cat = jnp.concatenate([p["b1"], p["b2r"], p["b3r"]])
    b_cat = b_cat.astype(jnp.float32).reshape(1, -1)
    w4 = p["w4"].reshape(p["w4"].shape[0], Cin).T.astype(jnp.bfloat16)
    b4 = p["b4"].astype(jnp.float32).reshape(1, -1)

    th = _row_tile(H, W)
    # Stage A: one pass over x -> y1 (branch 1), r2/r3 (bf16 reduces), y4 (pool)
    y1, r2, r3, y4 = fused_1x1_pool(x, w_cat, b_cat, w4, b4, n1, n2r, n3r, th=th)

    # branch 2: 3x3 conv pad=1 (+ ReLU); branch 3: 5x5 conv pad=2 (+ ReLU)
    y2 = conv_kxk_bias_relu(r2, p["w2"], p["b2"], pad=1, th=th)
    y3 = conv_kxk_bias_relu(r3, p["w3"], p["b3"], pad=2, th=th)

    # TODO(synk): have all branches store channel slices of one shared
    # lane-dense (N,H,W,Ctot) output via out_spec offsets to drop this concat.
    out_nhwc = jnp.concatenate([y1, y2, y3, y4], axis=-1)
    return jnp.transpose(out_nhwc, (0, 3, 1, 2))


# ----------------------------------------------------------------------------
# Pure-JAX f32 reference (correctness verification only)
# ----------------------------------------------------------------------------
def _conv_ref(x, w, b, pad):
    out = lax.conv_general_dilated(
        x, w, (1, 1), [(pad, pad), (pad, pad)],
        dimension_numbers=("NCHW", "OIHW", "NCHW"))
    return jax.nn.relu(out + b[None, :, None, None])


def inception_ref(x, p):
    y1 = _conv_ref(x, p["w1"], p["b1"], 0)
    y2 = _conv_ref(_conv_ref(x, p["w2r"], p["b2r"], 0), p["w2"], p["b2"], 1)
    y3 = _conv_ref(_conv_ref(x, p["w3r"], p["b3r"], 0), p["w3"], p["b3"], 2)
    neg = jnp.finfo(x.dtype).min
    pooled = lax.reduce_window(x, neg, lax.max, (1, 1, 3, 3), (1, 1, 1, 1),
                               [(0, 0), (0, 0), (1, 1), (1, 1)])
    y4 = _conv_ref(pooled, p["w4"], p["b4"], 0)
    return jnp.concatenate([y1, y2, y3, y4], axis=1)


# ----------------------------------------------------------------------------
# Deterministic parameter construction (PyTorch OIHW weight layout)
# ----------------------------------------------------------------------------
def make_params(key, in_channels, n1x1, n3x3red, n3x3, n5x5red, n5x5, pool_planes):
    ks = jax.random.split(key, 12)

    def w(k, o, i, kh, kw):
        return 0.1 * jax.random.normal(k, (o, i, kh, kw), dtype=jnp.float32)

    def b(k, o):
        return 0.05 * jax.random.normal(k, (o,), dtype=jnp.float32)

    return {
        "w1": w(ks[0], n1x1, in_channels, 1, 1),         "b1": b(ks[1], n1x1),
        "w2r": w(ks[2], n3x3red, in_channels, 1, 1),     "b2r": b(ks[3], n3x3red),
        "w2": w(ks[4], n3x3, n3x3red, 3, 3),             "b2": b(ks[5], n3x3),
        "w3r": w(ks[6], n5x5red, in_channels, 1, 1),     "b3r": b(ks[7], n5x5red),
        "w3": w(ks[8], n5x5, n5x5red, 5, 5),             "b3": b(ks[9], n5x5),
        "w4": w(ks[10], pool_planes, in_channels, 1, 1), "b4": b(ks[11], pool_planes),
    }


if __name__ == "__main__":
    key = jax.random.PRNGKey(0)
    k_x, k_p = jax.random.split(key)

    # small synthetic shapes: batch=2, in_channels=4, H=W=16
    N, Cin, H, W = 2, 4, 16, 16
    n1x1, n3x3red, n3x3, n5x5red, n5x5, pool_planes = 4, 4, 8, 2, 4, 4

    x = jax.random.normal(k_x, (N, Cin, H, W), dtype=jnp.float32)
    params = make_params(k_p, Cin, n1x1, n3x3red, n3x3, n5x5red, n5x5, pool_planes)

    out = jax.jit(inception_block)(x, params)
    out = jax.block_until_ready(out)

    expected_c = n1x1 + n3x3 + n5x5 + pool_planes
    assert out.shape == (N, expected_c, H, W), out.shape

    ref = jax.block_until_ready(inception_ref(x, params))
    # bf16 operands with f32 accumulation: bf16-level tolerance.
    assert jnp.allclose(out, ref, rtol=2e-2, atol=2e-2), float(jnp.max(jnp.abs(out - ref)))

    print("KERNEL_OK")
</pallas_src>

<mosaic_0001>
module attributes {stable_mosaic.version = 11 : i64} {
  func.func @_fused_1x1_pool_kernel(%arg0: i32, %arg1: i32, %arg2: memref<1x16x16x4xbf16, #tpu.memory_space<vmem>>, %arg3: memref<4x10xbf16, #tpu.memory_space<vmem>>, %arg4: memref<1x10xf32, #tpu.memory_space<vmem>>, %arg5: memref<4x4xbf16, #tpu.memory_space<vmem>>, %arg6: memref<1x4xf32, #tpu.memory_space<vmem>>, %arg7: memref<1x8x16x4xf32, #tpu.memory_space<vmem>>, %arg8: memref<1x8x16x4xbf16, #tpu.memory_space<vmem>>, %arg9: memref<1x8x16x2xbf16, #tpu.memory_space<vmem>>, %arg10: memref<1x8x16x4xf32, #tpu.memory_space<vmem>>) attributes {dimension_semantics = [#tpu.dimension_semantics<parallel>, #tpu.dimension_semantics<parallel>], iteration_bounds = array<i64: 2, 2>, scalar_prefetch = 0 : i64, scratch_operands = 0 : i64, tpu.core_type = #tpu.core_type<tc>, window_params = [{transform_indices = @transform_0, window_bounds = array<i64: 1, 16, 16, 4>}, {pipeline_mode = #tpu.pipeline_mode<synchronous>, transform_indices = @transform_1, window_bounds = array<i64: 4, 10>}, {pipeline_mode = #tpu.pipeline_mode<synchronous>, transform_indices = @transform_2, window_bounds = array<i64: 1, 10>}, {pipeline_mode = #tpu.pipeline_mode<synchronous>, transform_indices = @transform_3, window_bounds = array<i64: 4, 4>}, {pipeline_mode = #tpu.pipeline_mode<synchronous>, transform_indices = @transform_4, window_bounds = array<i64: 1, 4>}, {transform_indices = @transform_5, window_bounds = array<i64: 1, 8, 16, 4>}, {transform_indices = @transform_6, window_bounds = array<i64: 1, 8, 16, 4>}, {transform_indices = @transform_7, window_bounds = array<i64: 1, 8, 16, 2>}, {transform_indices = @transform_8, window_bounds = array<i64: 1, 8, 16, 4>}]} {
    %c8_i32 = arith.constant 8 : i32
    %0 = arith.muli %arg1, %c8_i32 : i32
    %1 = tpu.assume_multiple %0, 8 : i32
    %c0 = arith.constant 0 : index
    %2 = arith.index_cast %1 : i32 to index
    %c0_0 = arith.constant 0 : index
    %c0_1 = arith.constant 0 : index
    %3 = vector.load %arg2[%c0, %2, %c0_0, %c0_1] : memref<1x16x16x4xbf16, #tpu.memory_space<vmem>>, vector<1x8x16x4xbf16>
    %4 = vector.shape_cast %3 : vector<1x8x16x4xbf16> to vector<8x16x4xbf16>
    %5 = vector.shape_cast %4 : vector<8x16x4xbf16> to vector<128x4xbf16>
    %c0_2 = arith.constant 0 : index
    %c0_3 = arith.constant 0 : index
    %6 = vector.load %arg3[%c0_2, %c0_3] : memref<4x10xbf16, #tpu.memory_space<vmem>>, vector<4x10xbf16>
    %cst = arith.constant dense<0.000000e+00> : vector<128x10xf32>
    %7 = tpu.matmul %5, %6, %cst {dimension_numbers = #tpu.dot_dimension_numbers<[1], [0], [0], [1], [0, 0, 1, 1], [], []>} : vector<128x4xbf16>, vector<4x10xbf16>, vector<128x10xf32> -> vector<128x10xf32>
    %c0_4 = arith.constant 0 : index
    %c0_5 = arith.constant 0 : index
    %8 = vector.load %arg4[%c0_4, %c0_5] : memref<1x10xf32, #tpu.memory_space<vmem>>, vector<1x10xf32>
    %9 = vector.broadcast %8 : vector<1x10xf32> to vector<128x10xf32>
    %10 = arith.addf %7, %9 : vector<128x10xf32>
    %cst_6 = arith.constant 0.000000e+00 : f32
    %11 = vector.broadcast %cst_6 : f32 to vector<128x10xf32>
    %12 = arith.maximumf %10, %11 : vector<128x10xf32>
    %13 = vector.extract_strided_slice %12 {offsets = [0, 0], sizes = [128, 4], strides = [1, 1]} : vector<128x10xf32> to vector<128x4xf32>
    %14 = vector.shape_cast %13 : vector<128x4xf32> to vector<8x16x4xf32>
    %c0_7 = arith.constant 0 : index
    %c0_8 = arith.constant 0 : index
    %c0_9 = arith.constant 0 : index
    %c0_10 = arith.constant 0 : index
    %15 = vector.load %arg7[%c0_7, %c0_8, %c0_9, %c0_10] : memref<1x8x16x4xf32, #tpu.memory_space<vmem>>, vector<1x8x16x4xf32>
    %16 = vector.shape_cast %15 : vector<1x8x16x4xf32> to vector<8x16x4xf32>
    %17 = vector.shape_cast %14 : vector<8x16x4xf32> to vector<1x8x16x4xf32>
    tpu.vector_store %arg7[%c0_7, %c0_8, %c0_9, %c0_10], %17 {strides = array<i32>} : memref<1x8x16x4xf32, #tpu.memory_space<vmem>>, vector<1x8x16x4xf32>,
    %18 = vector.extract_strided_slice %12 {offsets = [0, 4], sizes = [128, 4], strides = [1, 1]} : vector<128x10xf32> to vector<128x4xf32>
    %19 = vector.shape_cast %18 : vector<128x4xf32> to vector<8x16x4xf32>
    %20 = arith.truncf %19 : vector<8x16x4xf32> to vector<8x16x4xbf16>
    %c0_11 = arith.constant 0 : index
    %c0_12 = arith.constant 0 : index
    %c0_13 = arith.constant 0 : index
    %c0_14 = arith.constant 0 : index
    %21 = vector.load %arg8[%c0_11, %c0_12, %c0_13, %c0_14] : memref<1x8x16x4xbf16, #tpu.memory_space<vmem>>, vector<1x8x16x4xbf16>
    %22 = vector.shape_cast %21 : vector<1x8x16x4xbf16> to vector<8x16x4xbf16>
    %23 = vector.shape_cast %20 : vector<8x16x4xbf16> to vector<1x8x16x4xbf16>
    tpu.vector_store %arg8[%c0_11, %c0_12, %c0_13, %c0_14], %23 {strides = array<i32>} : memref<1x8x16x4xbf16, #tpu.memory_space<vmem>>, vector<1x8x16x4xbf16>,
    %24 = vector.extract_strided_slice %12 {offsets = [0, 8], sizes = [128, 2], strides = [1, 1]} : vector<128x10xf32> to vector<128x2xf32>
    %25 = vector.shape_cast %24 : vector<128x2xf32> to vector<8x16x2xf32>
    %26 = arith.truncf %25 : vector<8x16x2xf32> to vector<8x16x2xbf16>
    %c0_15 = arith.constant 0 : index
    %c0_16 = arith.constant 0 : index
    %c0_17 = arith.constant 0 : index
    %c0_18 = arith.constant 0 : index
    %27 = vector.load %arg9[%c0_15, %c0_16, %c0_17, %c0_18] : memref<1x8x16x2xbf16, #tpu.memory_space<vmem>>, vector<1x8x16x2xbf16>
    %28 = vector.shape_cast %27 : vector<1x8x16x2xbf16> to vector<8x16x2xbf16>
    %29 = vector.shape_cast %26 : vector<8x16x2xbf16> to vector<1x8x16x2xbf16>
    tpu.vector_store %arg9[%c0_15, %c0_16, %c0_17, %c0_18], %29 {strides = array<i32>} : memref<1x8x16x2xbf16, #tpu.memory_space<vmem>>, vector<1x8x16x2xbf16>,
    %c1_i32 = arith.constant 1 : i32
    %30 = arith.subi %1, %c1_i32 : i32
    %c0_i32 = arith.constant 0 : i32
    %31 = arith.maxsi %30, %c0_i32 : i32
    %c0_19 = arith.constant 0 : index
    %32 = arith.index_cast %31 : i32 to index
    %c0_20 = arith.constant 0 : index
    %c0_21 = arith.constant 0 : index
    %33 = vector.load %arg2[%c0_19, %32, %c0_20, %c0_21] : memref<1x16x16x4xbf16, #tpu.memory_space<vmem>>, vector<1x1x16x4xbf16>
    %34 = vector.shape_cast %33 : vector<1x1x16x4xbf16> to vector<1x16x4xbf16>
    %c8_i32_22 = arith.constant 8 : i32
    %35 = arith.addi %1, %c8_i32_22 : i32
    %c15_i32 = arith.constant 15 : i32
    %36 = arith.minsi %35, %c15_i32 : i32
    %c0_23 = arith.constant 0 : index
    %37 = arith.index_cast %36 : i32 to index
    %c0_24 = arith.constant 0 : index
    %c0_25 = arith.constant 0 : index
    %38 = vector.load %arg2[%c0_23, %37, %c0_24, %c0_25] : memref<1x16x16x4xbf16, #tpu.memory_space<vmem>>, vector<1x1x16x4xbf16>
    %39 = vector.shape_cast %38 : vector<1x1x16x4xbf16> to vector<1x16x4xbf16>
    %40 = vector.extract_strided_slice %4 {offsets = [0, 0, 0], sizes = [7, 16, 4], strides = [1, 1, 1]} : vector<8x16x4xbf16> to vector<7x16x4xbf16>
    %41 = tpu.concatenate %34, %40 in 0 : vector<1x16x4xbf16>, vector<7x16x4xbf16> -> vector<8x16x4xbf16>
    %42 = vector.extract_strided_slice %4 {offsets = [1, 0, 0], sizes = [7, 16, 4], strides = [1, 1, 1]} : vector<8x16x4xbf16> to vector<7x16x4xbf16>
    %43 = tpu.concatenate %42, %39 in 0 : vector<7x16x4xbf16>, vector<1x16x4xbf16> -> vector<8x16x4xbf16>
    %44 = arith.maximumf %4, %41 : vector<8x16x4xbf16>
    %45 = arith.maximumf %44, %43 : vector<8x16x4xbf16>
    %46 = vector.extract_strided_slice %45 {offsets = [0, 0, 0], sizes = [8, 1, 4], strides = [1, 1, 1]} : vector<8x16x4xbf16> to vector<8x1x4xbf16>
    %47 = vector.extract_strided_slice %45 {offsets = [0, 0, 0], sizes = [8, 15, 4], strides = [1, 1, 1]} : vector<8x16x4xbf16> to vector<8x15x4xbf16>
    %48 = tpu.concatenate %46, %47 in 1 : vector<8x1x4xbf16>, vector<8x15x4xbf16> -> vector<8x16x4xbf16>
    %49 = vector.extract_strided_slice %45 {offsets = [0, 1, 0], sizes = [8, 15, 4], strides = [1, 1, 1]} : vector<8x16x4xbf16> to vector<8x15x4xbf16>
    %50 = vector.extract_strided_slice %45 {offsets = [0, 15, 0], sizes = [8, 1, 4], strides = [1, 1, 1]} : vector<8x16x4xbf16> to vector<8x1x4xbf16>
    %51 = tpu.concatenate %49, %50 in 1 : vector<8x15x4xbf16>, vector<8x1x4xbf16> -> vector<8x16x4xbf16>
    %52 = arith.maximumf %45, %48 : vector<8x16x4xbf16>
    %53 = arith.maximumf %52, %51 : vector<8x16x4xbf16>
    %54 = vector.shape_cast %53 : vector<8x16x4xbf16> to vector<128x4xbf16>
    %c0_26 = arith.constant 0 : index
    %c0_27 = arith.constant 0 : index
    %55 = vector.load %arg5[%c0_26, %c0_27] : memref<4x4xbf16, #tpu.memory_space<vmem>>, vector<4x4xbf16>
    %cst_28 = arith.constant dense<0.000000e+00> : vector<128x4xf32>
    %56 = tpu.matmul %54, %55, %cst_28 {dimension_numbers = #tpu.dot_dimension_numbers<[1], [0], [0], [1], [0, 0, 1, 1], [], []>} : vector<128x4xbf16>, vector<4x4xbf16>, vector<128x4xf32> -> vector<128x4xf32>
    %c0_29 = arith.constant 0 : index
    %c0_30 = arith.constant 0 : index
    %57 = vector.load %arg6[%c0_29, %c0_30] : memref<1x4xf32, #tpu.memory_space<vmem>>, vector<1x4xf32>
    %58 = vector.broadcast %57 : vector<1x4xf32> to vector<128x4xf32>
    %59 = arith.addf %56, %58 : vector<128x4xf32>
    %cst_31 = arith.constant 0.000000e+00 : f32
    %60 = vector.broadcast %cst_31 : f32 to vector<128x4xf32>
    %61 = arith.maximumf %59, %60 : vector<128x4xf32>
    %62 = vector.shape_cast %61 : vector<128x4xf32> to vector<8x16x4xf32>
    %c0_32 = arith.constant 0 : index
    %c0_33 = arith.constant 0 : index
    %c0_34 = arith.constant 0 : index
    %c0_35 = arith.constant 0 : index
    %63 = vector.load %arg10[%c0_32, %c0_33, %c0_34, %c0_35] : memref<1x8x16x4xf32, #tpu.memory_space<vmem>>, vector<1x8x16x4xf32>
    %64 = vector.shape_cast %63 : vector<1x8x16x4xf32> to vector<8x16x4xf32>
    %65 = vector.shape_cast %62 : vector<8x16x4xf32> to vector<1x8x16x4xf32>
    tpu.vector_store %arg10[%c0_32, %c0_33, %c0_34, %c0_35], %65 {strides = array<i32>} : memref<1x8x16x4xf32, #tpu.memory_space<vmem>>, vector<1x8x16x4xf32>,
    return
  }
  func.func @transform_0(%arg0: i32, %arg1: i32) -> (i32, i32, i32, i32) {
    %c0_i32 = arith.constant 0 : i32
    %c0_i32_0 = arith.constant 0 : i32
    %c0_i32_1 = arith.constant 0 : i32
    %c0_i32_2 = arith.constant 0 : i32
    return %arg0, %c0_i32, %c0_i32_0, %c0_i32_1 : i32, i32, i32, i32
  }
  func.func @transform_1(%arg0: i32, %arg1: i32) -> (i32, i32) {
    %c0_i32 = arith.constant 0 : i32
    %c0_i32_0 = arith.constant 0 : i32
    %c0_i32_1 = arith.constant 0 : i32
    return %c0_i32, %c0_i32_0 : i32, i32
  }
  func.func @transform_2(%arg0: i32, %arg1: i32) -> (i32, i32) {
    %c0_i32 = arith.constant 0 : i32
    %c0_i32_0 = arith.constant 0 : i32
    %c0_i32_1 = arith.constant 0 : i32
    return %c0_i32, %c0_i32_0 : i32, i32
  }
  func.func @transform_3(%arg0: i32, %arg1: i32) -> (i32, i32) {
    %c0_i32 = arith.constant 0 : i32
    %c0_i32_0 = arith.constant 0 : i32
    %c0_i32_1 = arith.constant 0 : i32
    return %c0_i32, %c0_i32_0 : i32, i32
  }
  func.func @transform_4(%arg0: i32, %arg1: i32) -> (i32, i32) {
    %c0_i32 = arith.constant 0 : i32
    %c0_i32_0 = arith.constant 0 : i32
    %c0_i32_1 = arith.constant 0 : i32
    return %c0_i32, %c0_i32_0 : i32, i32
  }
  func.func @transform_5(%arg0: i32, %arg1: i32) -> (i32, i32, i32, i32) {
    %c0_i32 = arith.constant 0 : i32
    %c0_i32_0 = arith.constant 0 : i32
    %c0_i32_1 = arith.constant 0 : i32
    return %arg0, %arg1, %c0_i32, %c0_i32_0 : i32, i32, i32, i32
  }
  func.func @transform_6(%arg0: i32, %arg1: i32) -> (i32, i32, i32, i32) {
    %c0_i32 = arith.constant 0 : i32
    %c0_i32_0 = arith.constant 0 : i32
    %c0_i32_1 = arith.constant 0 : i32
    return %arg0, %arg1, %c0_i32, %c0_i32_0 : i32, i32, i32, i32
  }
  func.func @transform_7(%arg0: i32, %arg1: i32) -> (i32, i32, i32, i32) {
    %c0_i32 = arith.constant 0 : i32
    %c0_i32_0 = arith.constant 0 : i32
    %c0_i32_1 = arith.constant 0 : i32
    return %arg0, %arg1, %c0_i32, %c0_i32_0 : i32, i32, i32, i32
  }
  func.func @transform_8(%arg0: i32, %arg1: i32) -> (i32, i32, i32, i32) {
    %c0_i32 = arith.constant 0 : i32
    %c0_i32_0 = arith.constant 0 : i32
    %c0_i32_1 = arith.constant 0 : i32
    return %arg0, %arg1, %c0_i32, %c0_i32_0 : i32, i32, i32, i32
  }
}

module attributes {stable_mosaic.version = 11 : i64} {
  func.func @_conv_kxk_kernel(%arg0: i32, %arg1: i32, %arg2: memref<1x20x20x2xbf16, #tpu.memory_space<vmem>>, %arg3: memref<5x10x4xbf16, #tpu.memory_space<vmem>>, %arg4: memref<1x4xf32, #tpu.memory_space<vmem>>, %arg5: memref<1x8x16x4xf32, #tpu.memory_space<vmem>>) attributes {dimension_semantics = [#tpu.dimension_semantics<parallel>, #tpu.dimension_semantics<parallel>], iteration_bounds = array<i64: 2, 2>, scalar_prefetch = 0 : i64, scratch_operands = 0 : i64, tpu.core_type = #tpu.core_type<tc>, window_params = [{transform_indices = @transform_0, window_bounds = array<i64: 1, 20, 20, 2>}, {pipeline_mode = #tpu.pipeline_mode<synchronous>, transform_indices = @transform_1, window_bounds = array<i64: 5, 10, 4>}, {pipeline_mode = #tpu.pipeline_mode<synchronous>, transform_indices = @transform_2, window_bounds = array<i64: 1, 4>}, {transform_indices = @transform_3, window_bounds = array<i64: 1, 8, 16, 4>}]} {
    %c8_i32 = arith.constant 8 : i32
    %0 = arith.muli %arg1, %c8_i32 : i32
    %1 = tpu.assume_multiple %0, 8 : i32
    %cst = arith.constant 0.000000e+00 : f32
    %2 = vector.broadcast %cst : f32 to vector<128x4xf32>
    %c0_i32 = arith.constant 0 : i32
    %3 = arith.addi %1, %c0_i32 : i32
    %c0 = arith.constant 0 : index
    %4 = arith.index_cast %3 : i32 to index
    %c0_0 = arith.constant 0 : index
    %c0_1 = arith.constant 0 : index
    %5 = vector.load %arg2[%c0, %4, %c0_0, %c0_1] : memref<1x20x20x2xbf16, #tpu.memory_space<vmem>>, vector<1x8x20x2xbf16>
    %6 = vector.shape_cast %5 : vector<1x8x20x2xbf16> to vector<8x20x2xbf16>
    %7 = vector.extract_strided_slice %6 {offsets = [0, 0, 0], sizes = [8, 16, 2], strides = [1, 1, 1]} : vector<8x20x2xbf16> to vector<8x16x2xbf16>
    %8 = vector.extract_strided_slice %6 {offsets = [0, 1, 0], sizes = [8, 16, 2], strides = [1, 1, 1]} : vector<8x20x2xbf16> to vector<8x16x2xbf16>
    %9 = vector.extract_strided_slice %6 {offsets = [0, 2, 0], sizes = [8, 16, 2], strides = [1, 1, 1]} : vector<8x20x2xbf16> to vector<8x16x2xbf16>
    %10 = vector.extract_strided_slice %6 {offsets = [0, 3, 0], sizes = [8, 16, 2], strides = [1, 1, 1]} : vector<8x20x2xbf16> to vector<8x16x2xbf16>
    %11 = vector.extract_strided_slice %6 {offsets = [0, 4, 0], sizes = [8, 16, 2], strides = [1, 1, 1]} : vector<8x20x2xbf16> to vector<8x16x2xbf16>
    %12 = tpu.concatenate %7, %8, %9, %10, %11 in 2 : vector<8x16x2xbf16>, vector<8x16x2xbf16>, vector<8x16x2xbf16>, vector<8x16x2xbf16>, vector<8x16x2xbf16> -> vector<8x16x10xbf16>
    %13 = vector.shape_cast %12 : vector<8x16x10xbf16> to vector<128x10xbf16>
    %c0_2 = arith.constant 0 : index
    %c0_3 = arith.constant 0 : index
    %c0_4 = arith.constant 0 : index
    %14 = vector.load %arg3[%c0_2, %c0_3, %c0_4] : memref<5x10x4xbf16, #tpu.memory_space<vmem>>, vector<1x10x4xbf16>
    %15 = vector.shape_cast %14 : vector<1x10x4xbf16> to vector<10x4xbf16>
    %cst_5 = arith.constant dense<0.000000e+00> : vector<128x4xf32>
    %16 = tpu.matmul %13, %15, %cst_5 {dimension_numbers = #tpu.dot_dimension_numbers<[1], [0], [0], [1], [0, 0, 1, 1], [], []>} : vector<128x10xbf16>, vector<10x4xbf16>, vector<128x4xf32> -> vector<128x4xf32>
    %17 = arith.addf %2, %16 : vector<128x4xf32>
    %c1_i32 = arith.constant 1 : i32
    %18 = arith.addi %1, %c1_i32 : i32
    %c0_6 = arith.constant 0 : index
    %19 = arith.index_cast %18 : i32 to index
    %c0_7 = arith.constant 0 : index
    %c0_8 = arith.constant 0 : index
    %20 = vector.load %arg2[%c0_6, %19, %c0_7, %c0_8] : memref<1x20x20x2xbf16, #tpu.memory_space<vmem>>, vector<1x8x20x2xbf16>
    %21 = vector.shape_cast %20 : vector<1x8x20x2xbf16> to vector<8x20x2xbf16>
    %22 = vector.extract_strided_slice %21 {offsets = [0, 0, 0], sizes = [8, 16, 2], strides = [1, 1, 1]} : vector<8x20x2xbf16> to vector<8x16x2xbf16>
    %23 = vector.extract_strided_slice %21 {offsets = [0, 1, 0], sizes = [8, 16, 2], strides = [1, 1, 1]} : vector<8x20x2xbf16> to vector<8x16x2xbf16>
    %24 = vector.extract_strided_slice %21 {offsets = [0, 2, 0], sizes = [8, 16, 2], strides = [1, 1, 1]} : vector<8x20x2xbf16> to vector<8x16x2xbf16>
    %25 = vector.extract_strided_slice %21 {offsets = [0, 3, 0], sizes = [8, 16, 2], strides = [1, 1, 1]} : vector<8x20x2xbf16> to vector<8x16x2xbf16>
    %26 = vector.extract_strided_slice %21 {offsets = [0, 4, 0], sizes = [8, 16, 2], strides = [1, 1, 1]} : vector<8x20x2xbf16> to vector<8x16x2xbf16>
    %27 = tpu.concatenate %22, %23, %24, %25, %26 in 2 : vector<8x16x2xbf16>, vector<8x16x2xbf16>, vector<8x16x2xbf16>, vector<8x16x2xbf16>, vector<8x16x2xbf16> -> vector<8x16x10xbf16>
    %28 = vector.shape_cast %27 : vector<8x16x10xbf16> to vector<128x10xbf16>
    %c1 = arith.constant 1 : index
    %c0_9 = arith.constant 0 : index
    %c0_10 = arith.constant 0 : index
    %29 = vector.load %arg3[%c1, %c0_9, %c0_10] : memref<5x10x4xbf16, #tpu.memory_space<vmem>>, vector<1x10x4xbf16>
    %30 = vector.shape_cast %29 : vector<1x10x4xbf16> to vector<10x4xbf16>
    %cst_11 = arith.constant dense<0.000000e+00> : vector<128x4xf32>
    %31 = tpu.matmul %28, %30, %cst_11 {dimension_numbers = #tpu.dot_dimension_numbers<[1], [0], [0], [1], [0, 0, 1, 1], [], []>} : vector<128x10xbf16>, vector<10x4xbf16>, vector<128x4xf32> -> vector<128x4xf32>
    %32 = arith.addf %17, %31 : vector<128x4xf32>
    %c2_i32 = arith.constant 2 : i32
    %33 = arith.addi %1, %c2_i32 : i32
    %c0_12 = arith.constant 0 : index
    %34 = arith.index_cast %33 : i32 to index
    %c0_13 = arith.constant 0 : index
    %c0_14 = arith.constant 0 : index
    %35 = vector.load %arg2[%c0_12, %34, %c0_13, %c0_14] : memref<1x20x20x2xbf16, #tpu.memory_space<vmem>>, vector<1x8x20x2xbf16>
    %36 = vector.shape_cast %35 : vector<1x8x20x2xbf16> to vector<8x20x2xbf16>
    %37 = vector.extract_strided_slice %36 {offsets = [0, 0, 0], sizes = [8, 16, 2], strides = [1, 1, 1]} : vector<8x20x2xbf16> to vector<8x16x2xbf16>
    %38 = vector.extract_strided_slice %36 {offsets = [0, 1, 0], sizes = [8, 16, 2], strides = [1, 1, 1]} : vector<8x20x2xbf16> to vector<8x16x2xbf16>
    %39 = vector.extract_strided_slice %36 {offsets = [0, 2, 0], sizes = [8, 16, 2], strides = [1, 1, 1]} : vector<8x20x2xbf16> to vector<8x16x2xbf16>
    %40 = vector.extract_strided_slice %36 {offsets = [0, 3, 0], sizes = [8, 16, 2], strides = [1, 1, 1]} : vector<8x20x2xbf16> to vector<8x16x2xbf16>
    %41 = vector.extract_strided_slice %36 {offsets = [0, 4, 0], sizes = [8, 16, 2], strides = [1, 1, 1]} : vector<8x20x2xbf16> to vector<8x16x2xbf16>
    %42 = tpu.concatenate %37, %38, %39, %40, %41 in 2 : vector<8x16x2xbf16>, vector<8x16x2xbf16>, vector<8x16x2xbf16>, vector<8x16x2xbf16>, vector<8x16x2xbf16> -> vector<8x16x10xbf16>
    %43 = vector.shape_cast %42 : vector<8x16x10xbf16> to vector<128x10xbf16>
    %c2 = arith.constant 2 : index
    %c0_15 = arith.constant 0 : index
    %c0_16 = arith.constant 0 : index
    %44 = vector.load %arg3[%c2, %c0_15, %c0_16] : memref<5x10x4xbf16, #tpu.memory_space<vmem>>, vector<1x10x4xbf16>
    %45 = vector.shape_cast %44 : vector<1x10x4xbf16> to vector<10x4xbf16>
    %cst_17 = arith.constant dense<0.000000e+00> : vector<128x4xf32>
    %46 = tpu.matmul %43, %45, %cst_17 {dimension_numbers = #tpu.dot_dimension_numbers<[1], [0], [0], [1], [0, 0, 1, 1], [], []>} : vector<128x10xbf16>, vector<10x4xbf16>, vector<128x4xf32> -> vector<128x4xf32>
    %47 = arith.addf %32, %46 : vector<128x4xf32>
    %c3_i32 = arith.constant 3 : i32
    %48 = arith.addi %1, %c3_i32 : i32
    %c0_18 = arith.constant 0 : index
    %49 = arith.index_cast %48 : i32 to index
    %c0_19 = arith.constant 0 : index
    %c0_20 = arith.constant 0 : index
    %50 = vector.load %arg2[%c0_18, %49, %c0_19, %c0_20] : memref<1x20x20x2xbf16, #tpu.memory_space<vmem>>, vector<1x8x20x2xbf16>
    %51 = vector.shape_cast %50 : vector<1x8x20x2xbf16> to vector<8x20x2xbf16>
    %52 = vector.extract_strided_slice %51 {offsets = [0, 0, 0], sizes = [8, 16, 2], strides = [1, 1, 1]} : vector<8x20x2xbf16> to vector<8x16x2xbf16>
    %53 = vector.extract_strided_slice %51 {offsets = [0, 1, 0], sizes = [8, 16, 2], strides = [1, 1, 1]} : vector<8x20x2xbf16> to vector<8x16x2xbf16>
    %54 = vector.extract_strided_slice %51 {offsets = [0, 2, 0], sizes = [8, 16, 2], strides = [1, 1, 1]} : vector<8x20x2xbf16> to vector<8x16x2xbf16>
    %55 = vector.extract_strided_slice %51 {offsets = [0, 3, 0], sizes = [8, 16, 2], strides = [1, 1, 1]} : vector<8x20x2xbf16> to vector<8x16x2xbf16>
    %56 = vector.extract_strided_slice %51 {offsets = [0, 4, 0], sizes = [8, 16, 2], strides = [1, 1, 1]} : vector<8x20x2xbf16> to vector<8x16x2xbf16>
    %57 = tpu.concatenate %52, %53, %54, %55, %56 in 2 : vector<8x16x2xbf16>, vector<8x16x2xbf16>, vector<8x16x2xbf16>, vector<8x16x2xbf16>, vector<8x16x2xbf16> -> vector<8x16x10xbf16>
    %58 = vector.shape_cast %57 : vector<8x16x10xbf16> to vector<128x10xbf16>
    %c3 = arith.constant 3 : index
    %c0_21 = arith.constant 0 : index
    %c0_22 = arith.constant 0 : index
    %59 = vector.load %arg3[%c3, %c0_21, %c0_22] : memref<5x10x4xbf16, #tpu.memory_space<vmem>>, vector<1x10x4xbf16>
    %60 = vector.shape_cast %59 : vector<1x10x4xbf16> to vector<10x4xbf16>
    %cst_23 = arith.constant dense<0.000000e+00> : vector<128x4xf32>
    %61 = tpu.matmul %58, %60, %cst_23 {dimension_numbers = #tpu.dot_dimension_numbers<[1], [0], [0], [1], [0, 0, 1, 1], [], []>} : vector<128x10xbf16>, vector<10x4xbf16>, vector<128x4xf32> -> vector<128x4xf32>
    %62 = arith.addf %47, %61 : vector<128x4xf32>
    %c4_i32 = arith.constant 4 : i32
    %63 = arith.addi %1, %c4_i32 : i32
    %c0_24 = arith.constant 0 : index
    %64 = arith.index_cast %63 : i32 to index
    %c0_25 = arith.constant 0 : index
    %c0_26 = arith.constant 0 : index
    %65 = vector.load %arg2[%c0_24, %64, %c0_25, %c0_26] : memref<1x20x20x2xbf16, #tpu.memory_space<vmem>>, vector<1x8x20x2xbf16>
    %66 = vector.shape_cast %65 : vector<1x8x20x2xbf16> to vector<8x20x2xbf16>
    %67 = vector.extract_strided_slice %66 {offsets = [0, 0, 0], sizes = [8, 16, 2], strides = [1, 1, 1]} : vector<8x20x2xbf16> to vector<8x16x2xbf16>
    %68 = vector.extract_strided_slice %66 {offsets = [0, 1, 0], sizes = [8, 16, 2], strides = [1, 1, 1]} : vector<8x20x2xbf16> to vector<8x16x2xbf16>
    %69 = vector.extract_strided_slice %66 {offsets = [0, 2, 0], sizes = [8, 16, 2], strides = [1, 1, 1]} : vector<8x20x2xbf16> to vector<8x16x2xbf16>
    %70 = vector.extract_strided_slice %66 {offsets = [0, 3, 0], sizes = [8, 16, 2], strides = [1, 1, 1]} : vector<8x20x2xbf16> to vector<8x16x2xbf16>
    %71 = vector.extract_strided_slice %66 {offsets = [0, 4, 0], sizes = [8, 16, 2], strides = [1, 1, 1]} : vector<8x20x2xbf16> to vector<8x16x2xbf16>
    %72 = tpu.concatenate %67, %68, %69, %70, %71 in 2 : vector<8x16x2xbf16>, vector<8x16x2xbf16>, vector<8x16x2xbf16>, vector<8x16x2xbf16>, vector<8x16x2xbf16> -> vector<8x16x10xbf16>
    %73 = vector.shape_cast %72 : vector<8x16x10xbf16> to vector<128x10xbf16>
    %c4 = arith.constant 4 : index
    %c0_27 = arith.constant 0 : index
    %c0_28 = arith.constant 0 : index
    %74 = vector.load %arg3[%c4, %c0_27, %c0_28] : memref<5x10x4xbf16, #tpu.memory_space<vmem>>, vector<1x10x4xbf16>
    %75 = vector.shape_cast %74 : vector<1x10x4xbf16> to vector<10x4xbf16>
    %cst_29 = arith.constant dense<0.000000e+00> : vector<128x4xf32>
    %76 = tpu.matmul %73, %75, %cst_29 {dimension_numbers = #tpu.dot_dimension_numbers<[1], [0], [0], [1], [0, 0, 1, 1], [], []>} : vector<128x10xbf16>, vector<10x4xbf16>, vector<128x4xf32> -> vector<128x4xf32>
    %77 = arith.addf %62, %76 : vector<128x4xf32>
    %c0_30 = arith.constant 0 : index
    %c0_31 = arith.constant 0 : index
    %78 = vector.load %arg4[%c0_30, %c0_31] : memref<1x4xf32, #tpu.memory_space<vmem>>, vector<1x4xf32>
    %79 = vector.broadcast %78 : vector<1x4xf32> to vector<128x4xf32>
    %80 = arith.addf %77, %79 : vector<128x4xf32>
    %cst_32 = arith.constant 0.000000e+00 : f32
    %81 = vector.broadcast %cst_32 : f32 to vector<128x4xf32>
    %82 = arith.maximumf %80, %81 : vector<128x4xf32>
    %83 = vector.shape_cast %82 : vector<128x4xf32> to vector<8x16x4xf32>
    %c0_33 = arith.constant 0 : index
    %c0_34 = arith.constant 0 : index
    %c0_35 = arith.constant 0 : index
    %c0_36 = arith.constant 0 : index
    %84 = vector.load %arg5[%c0_33, %c0_34, %c0_35, %c0_36] : memref<1x8x16x4xf32, #tpu.memory_space<vmem>>, vector<1x8x16x4xf32>
    %85 = vector.shape_cast %84 : vector<1x8x16x4xf32> to vector<8x16x4xf32>
    %86 = vector.shape_cast %83 : vector<8x16x4xf32> to vector<1x8x16x4xf32>
    tpu.vector_store %arg5[%c0_33, %c0_34, %c0_35, %c0_36], %86 {strides = array<i32>} : memref<1x8x16x4xf32, #tpu.memory_space<vmem>>, vector<1x8x16x4xf32>,
    return
  }
  func.func @transform_0(%arg0: i32, %arg1: i32) -> (i32, i32, i32, i32) {
    %c0_i32 = arith.constant 0 : i32
    %c0_i32_0 = arith.constant 0 : i32
    %c0_i32_1 = arith.constant 0 : i32
    %c0_i32_2 = arith.constant 0 : i32
    return %arg0, %c0_i32, %c0_i32_0, %c0_i32_1 : i32, i32, i32, i32
  }
  func.func @transform_1(%arg0: i32, %arg1: i32) -> (i32, i32, i32) {
    %c0_i32 = arith.constant 0 : i32
    %c0_i32_0 = arith.constant 0 : i32
    %c0_i32_1 = arith.constant 0 : i32
    %c0_i32_2 = arith.constant 0 : i32
    return %c0_i32, %c0_i32_0, %c0_i32_1 : i32, i32, i32
  }
  func.func @transform_2(%arg0: i32, %arg1: i32) -> (i32, i32) {
    %c0_i32 = arith.constant 0 : i32
    %c0_i32_0 = arith.constant 0 : i32
    %c0_i32_1 = arith.constant 0 : i32
    return %c0_i32, %c0_i32_0 : i32, i32
  }
  func.func @transform_3(%arg0: i32, %arg1: i32) -> (i32, i32, i32, i32) {
    %c0_i32 = arith.constant 0 : i32
    %c0_i32_0 = arith.constant 0 : i32
    %c0_i32_1 = arith.constant 0 : i32
    return %arg0, %arg1, %c0_i32, %c0_i32_0 : i32, i32, i32, i32
  }
}

module attributes {stable_mosaic.version = 11 : i64} {
  func.func @_conv_kxk_kernel(%arg0: i32, %arg1: i32, %arg2: memref<1x18x18x4xbf16, #tpu.memory_space<vmem>>, %arg3: memref<3x12x8xbf16, #tpu.memory_space<vmem>>, %arg4: memref<1x8xf32, #tpu.memory_space<vmem>>, %arg5: memref<1x8x16x8xf32, #tpu.memory_space<vmem>>) attributes {dimension_semantics = [#tpu.dimension_semantics<parallel>, #tpu.dimension_semantics<parallel>], iteration_bounds = array<i64: 2, 2>, scalar_prefetch = 0 : i64, scratch_operands = 0 : i64, tpu.core_type = #tpu.core_type<tc>, window_params = [{transform_indices = @transform_0, window_bounds = array<i64: 1, 18, 18, 4>}, {pipeline_mode = #tpu.pipeline_mode<synchronous>, transform_indices = @transform_1, window_bounds = array<i64: 3, 12, 8>}, {pipeline_mode = #tpu.pipeline_mode<synchronous>, transform_indices = @transform_2, window_bounds = array<i64: 1, 8>}, {transform_indices = @transform_3, window_bounds = array<i64: 1, 8, 16, 8>}]} {
    %c8_i32 = arith.constant 8 : i32
    %0 = arith.muli %arg1, %c8_i32 : i32
    %1 = tpu.assume_multiple %0, 8 : i32
    %cst = arith.constant 0.000000e+00 : f32
    %2 = vector.broadcast %cst : f32 to vector<128x8xf32>
    %c0_i32 = arith.constant 0 : i32
    %3 = arith.addi %1, %c0_i32 : i32
    %c0 = arith.constant 0 : index
    %4 = arith.index_cast %3 : i32 to index
    %c0_0 = arith.constant 0 : index
    %c0_1 = arith.constant 0 : index
    %5 = vector.load %arg2[%c0, %4, %c0_0, %c0_1] : memref<1x18x18x4xbf16, #tpu.memory_space<vmem>>, vector<1x8x18x4xbf16>
    %6 = vector.shape_cast %5 : vector<1x8x18x4xbf16> to vector<8x18x4xbf16>
    %7 = vector.extract_strided_slice %6 {offsets = [0, 0, 0], sizes = [8, 16, 4], strides = [1, 1, 1]} : vector<8x18x4xbf16> to vector<8x16x4xbf16>
    %8 = vector.extract_strided_slice %6 {offsets = [0, 1, 0], sizes = [8, 16, 4], strides = [1, 1, 1]} : vector<8x18x4xbf16> to vector<8x16x4xbf16>
    %9 = vector.extract_strided_slice %6 {offsets = [0, 2, 0], sizes = [8, 16, 4], strides = [1, 1, 1]} : vector<8x18x4xbf16> to vector<8x16x4xbf16>
    %10 = tpu.concatenate %7, %8, %9 in 2 : vector<8x16x4xbf16>, vector<8x16x4xbf16>, vector<8x16x4xbf16> -> vector<8x16x12xbf16>
    %11 = vector.shape_cast %10 : vector<8x16x12xbf16> to vector<128x12xbf16>
    %c0_2 = arith.constant 0 : index
    %c0_3 = arith.constant 0 : index
    %c0_4 = arith.constant 0 : index
    %12 = vector.load %arg3[%c0_2, %c0_3, %c0_4] : memref<3x12x8xbf16, #tpu.memory_space<vmem>>, vector<1x12x8xbf16>
    %13 = vector.shape_cast %12 : vector<1x12x8xbf16> to vector<12x8xbf16>
    %cst_5 = arith.constant dense<0.000000e+00> : vector<128x8xf32>
    %14 = tpu.matmul %11, %13, %cst_5 {dimension_numbers = #tpu.dot_dimension_numbers<[1], [0], [0], [1], [0, 0, 1, 1], [], []>} : vector<128x12xbf16>, vector<12x8xbf16>, vector<128x8xf32> -> vector<128x8xf32>
    %15 = arith.addf %2, %14 : vector<128x8xf32>
    %c1_i32 = arith.constant 1 : i32
    %16 = arith.addi %1, %c1_i32 : i32
    %c0_6 = arith.constant 0 : index
    %17 = arith.index_cast %16 : i32 to index
    %c0_7 = arith.constant 0 : index
    %c0_8 = arith.constant 0 : index
    %18 = vector.load %arg2[%c0_6, %17, %c0_7, %c0_8] : memref<1x18x18x4xbf16, #tpu.memory_space<vmem>>, vector<1x8x18x4xbf16>
    %19 = vector.shape_cast %18 : vector<1x8x18x4xbf16> to vector<8x18x4xbf16>
    %20 = vector.extract_strided_slice %19 {offsets = [0, 0, 0], sizes = [8, 16, 4], strides = [1, 1, 1]} : vector<8x18x4xbf16> to vector<8x16x4xbf16>
    %21 = vector.extract_strided_slice %19 {offsets = [0, 1, 0], sizes = [8, 16, 4], strides = [1, 1, 1]} : vector<8x18x4xbf16> to vector<8x16x4xbf16>
    %22 = vector.extract_strided_slice %19 {offsets = [0, 2, 0], sizes = [8, 16, 4], strides = [1, 1, 1]} : vector<8x18x4xbf16> to vector<8x16x4xbf16>
    %23 = tpu.concatenate %20, %21, %22 in 2 : vector<8x16x4xbf16>, vector<8x16x4xbf16>, vector<8x16x4xbf16> -> vector<8x16x12xbf16>
    %24 = vector.shape_cast %23 : vector<8x16x12xbf16> to vector<128x12xbf16>
    %c1 = arith.constant 1 : index
    %c0_9 = arith.constant 0 : index
    %c0_10 = arith.constant 0 : index
    %25 = vector.load %arg3[%c1, %c0_9, %c0_10] : memref<3x12x8xbf16, #tpu.memory_space<vmem>>, vector<1x12x8xbf16>
    %26 = vector.shape_cast %25 : vector<1x12x8xbf16> to vector<12x8xbf16>
    %cst_11 = arith.constant dense<0.000000e+00> : vector<128x8xf32>
    %27 = tpu.matmul %24, %26, %cst_11 {dimension_numbers = #tpu.dot_dimension_numbers<[1], [0], [0], [1], [0, 0, 1, 1], [], []>} : vector<128x12xbf16>, vector<12x8xbf16>, vector<128x8xf32> -> vector<128x8xf32>
    %28 = arith.addf %15, %27 : vector<128x8xf32>
    %c2_i32 = arith.constant 2 : i32
    %29 = arith.addi %1, %c2_i32 : i32
    %c0_12 = arith.constant 0 : index
    %30 = arith.index_cast %29 : i32 to index
    %c0_13 = arith.constant 0 : index
    %c0_14 = arith.constant 0 : index
    %31 = vector.load %arg2[%c0_12, %30, %c0_13, %c0_14] : memref<1x18x18x4xbf16, #tpu.memory_space<vmem>>, vector<1x8x18x4xbf16>
    %32 = vector.shape_cast %31 : vector<1x8x18x4xbf16> to vector<8x18x4xbf16>
    %33 = vector.extract_strided_slice %32 {offsets = [0, 0, 0], sizes = [8, 16, 4], strides = [1, 1, 1]} : vector<8x18x4xbf16> to vector<8x16x4xbf16>
    %34 = vector.extract_strided_slice %32 {offsets = [0, 1, 0], sizes = [8, 16, 4], strides = [1, 1, 1]} : vector<8x18x4xbf16> to vector<8x16x4xbf16>
    %35 = vector.extract_strided_slice %32 {offsets = [0, 2, 0], sizes = [8, 16, 4], strides = [1, 1, 1]} : vector<8x18x4xbf16> to vector<8x16x4xbf16>
    %36 = tpu.concatenate %33, %34, %35 in 2 : vector<8x16x4xbf16>, vector<8x16x4xbf16>, vector<8x16x4xbf16> -> vector<8x16x12xbf16>
    %37 = vector.shape_cast %36 : vector<8x16x12xbf16> to vector<128x12xbf16>
    %c2 = arith.constant 2 : index
    %c0_15 = arith.constant 0 : index
    %c0_16 = arith.constant 0 : index
    %38 = vector.load %arg3[%c2, %c0_15, %c0_16] : memref<3x12x8xbf16, #tpu.memory_space<vmem>>, vector<1x12x8xbf16>
    %39 = vector.shape_cast %38 : vector<1x12x8xbf16> to vector<12x8xbf16>
    %cst_17 = arith.constant dense<0.000000e+00> : vector<128x8xf32>
    %40 = tpu.matmul %37, %39, %cst_17 {dimension_numbers = #tpu.dot_dimension_numbers<[1], [0], [0], [1], [0, 0, 1, 1], [], []>} : vector<128x12xbf16>, vector<12x8xbf16>, vector<128x8xf32> -> vector<128x8xf32>
    %41 = arith.addf %28, %40 : vector<128x8xf32>
    %c0_18 = arith.constant 0 : index
    %c0_19 = arith.constant 0 : index
    %42 = vector.load %arg4[%c0_18, %c0_19] : memref<1x8xf32, #tpu.memory_space<vmem>>, vector<1x8xf32>
    %43 = vector.broadcast %42 : vector<1x8xf32> to vector<128x8xf32>
    %44 = arith.addf %41, %43 : vector<128x8xf32>
    %cst_20 = arith.constant 0.000000e+00 : f32
    %45 = vector.broadcast %cst_20 : f32 to vector<128x8xf32>
    %46 = arith.maximumf %44, %45 : vector<128x8xf32>
    %47 = vector.shape_cast %46 : vector<128x8xf32> to vector<8x16x8xf32>
    %c0_21 = arith.constant 0 : index
    %c0_22 = arith.constant 0 : index
    %c0_23 = arith.constant 0 : index
    %c0_24 = arith.constant 0 : index
    %48 = vector.load %arg5[%c0_21, %c0_22, %c0_23, %c0_24] : memref<1x8x16x8xf32, #tpu.memory_space<vmem>>, vector<1x8x16x8xf32>
    %49 = vector.shape_cast %48 : vector<1x8x16x8xf32> to vector<8x16x8xf32>
    %50 = vector.shape_cast %47 : vector<8x16x8xf32> to vector<1x8x16x8xf32>
    tpu.vector_store %arg5[%c0_21, %c0_22, %c0_23, %c0_24], %50 {strides = array<i32>} : memref<1x8x16x8xf32, #tpu.memory_space<vmem>>, vector<1x8x16x8xf32>,
    return
  }
  func.func @transform_0(%arg0: i32, %arg1: i32) -> (i32, i32, i32, i32) {
    %c0_i32 = arith.constant 0 : i32
    %c0_i32_0 = arith.constant 0 : i32
    %c0_i32_1 = arith.constant 0 : i32
    %c0_i32_2 = arith.constant 0 : i32
    return %arg0, %c0_i32, %c0_i32_0, %c0_i32_1 : i32, i32, i32, i32
  }
  func.func @transform_1(%arg0: i32, %arg1: i32) -> (i32, i32, i32) {
    %c0_i32 = arith.constant 0 : i32
    %c0_i32_0 = arith.constant 0 : i32
    %c0_i32_1 = arith.constant 0 : i32
    %c0_i32_2 = arith.constant 0 : i32
    return %c0_i32, %c0_i32_0, %c0_i32_1 : i32, i32, i32
  }
  func.func @transform_2(%arg0: i32, %arg1: i32) -> (i32, i32) {
    %c0_i32 = arith.constant 0 : i32
    %c0_i32_0 = arith.constant 0 : i32
    %c0_i32_1 = arith.constant 0 : i32
    return %c0_i32, %c0_i32_0 : i32, i32
  }
  func.func @transform_3(%arg0: i32, %arg1: i32) -> (i32, i32, i32, i32) {
    %c0_i32 = arith.constant 0 : i32
    %c0_i32_0 = arith.constant 0 : i32
    %c0_i32_1 = arith.constant 0 : i32
    return %arg0, %arg1, %c0_i32, %c0_i32_0 : i32, i32, i32, i32
  }
}

</mosaic_0001>

<llo_original>
// kernel: inception_block.3
$region0: #{inception_block.3}
  #allocation0 [shape = 'u32[]', space=smem, size = 0x4, offset = 0x4, fixed_abs, tag = 'smem constant byte address 0x4 - core index']
  #allocation1 [shape = 'u32[144,128]{1,0:T(1,128)}', space=vmem, size = 0x12000, scoped, tag = 'internal scratch']
  %s0 = inlined_call_operand.vmem [shape: bf16[2,16,16,4], index: 0, kind: input, shape index: {}]
  %s1 = inlined_call_operand.vmem [shape: bf16[4,10], index: 1, kind: input, shape index: {}]
  %s2 = inlined_call_operand.vmem [shape: f32[1,10], index: 2, kind: input, shape index: {}]
  %s3 = inlined_call_operand.vmem [shape: bf16[4,4], index: 3, kind: input, shape index: {}]
  %s4 = inlined_call_operand.vmem [shape: f32[1,4], index: 4, kind: input, shape index: {}]
  %s5 = inlined_call_operand.vmem [shape: f32[2,16,16,4], index: 5, kind: output, shape index: {0}]
  %s6 = inlined_call_operand.vmem [shape: bf16[2,16,16,4], index: 6, kind: output, shape index: {1}]
  %s7 = inlined_call_operand.vmem [shape: bf16[2,16,16,2], index: 7, kind: output, shape index: {2}]
  %s8 = inlined_call_operand.vmem [shape: f32[2,16,16,4], index: 8, kind: output, shape index: {3}]
  %9 = xla_tuple %s5, %s6, %s7, %s8
  %s10 = sld [smem:[#allocation0]]
  $region77: #{inception_block.3} parent=0
    _
  %s12 = ssub.s32 1, %s10
  %s13 = scalar_select 0, %s12, %s10
  loop: start=0, step=1, limit=6
  $region2: #{inception_block.3} parent=0 // loop_pre_header
    _
  $region3: #{inception_block.3} parent=0 // loop_header
    %s15 = sphi 0, %s19
    %p16 = scmp.ge.s32.totalorder %s15, 6
    %s22 = sphi 0, %s34
    %s23 = sphi 0, %s30
    %s24 = sphi 0, %s22
    %s25 = sphi 0, %s23
    %s26 = sphi 0, %s24
    %s27 = sphi 0, %s25
    %s37 = sphi 0, %s39
    %s40 = sphi 0, %s37
    %s41 = sphi 0, %s40
    %s57 = sphi 0, %s41
    %s61 = sphi 0, %s61
    %s63 = sphi 0, %s61
    %s64 = sphi 0, %s63
    %s78 = sphi 0, %s64
    %s82 = sphi 0, %s82
    %s84 = sphi 0, %s82
    %s85 = sphi 0, %s84
    %s99 = sphi 0, %s85
    %s103 = sphi 0, %s103
    %s105 = sphi 0, %s103
    %s106 = sphi 0, %s105
    %s120 = sphi 0, %s106
    %s124 = sphi 0, %s124
    %s126 = sphi 0, %s124
    %s127 = sphi 0, %s126
    %s141 = sphi 0, %s127
    %s149 = sphi 0, %s151
    %s152 = sphi 0, %s149
    %s153 = sphi 0, %s152
    %s169 = sphi 0, %s153
    %s177 = sphi 0, %s179
    %s180 = sphi 0, %s177
    %s181 = sphi 0, %s180
    %s197 = sphi 0, %s181
    %s205 = sphi 0, %s207
    %s208 = sphi 0, %s205
    %s209 = sphi 0, %s208
    %s225 = sphi 0, %s209
    %s233 = sphi 0, %s235
    %s236 = sphi 0, %s233
    %s237 = sphi 0, %s236
    %s253 = sphi 0, %s237
  $region4: #{inception_block.3} parent=0 // loop_header_branch
    %18 = sbr.rel (%p16) target = $region8
  $region5: #{inception_block.3} parent=0 // loop_body
    %s20 = ssub.s32 %s15, 1
    %s21 = ssub.s32 %s15, 2
    %s28 = sadd.s32 1, %s23
    %p29 = scmp.ge.s32.totalorder %s28, 2
    %s30 = scalar_select %p29, 0, %s28
    %s31 = sadd.s32 1, %s22
    %s32 = scalar_select %p29, %s31, %s22
    %p33 = scmp.ge.s32.totalorder %s32, 2
    %s34 = scalar_select %p33, 0, %s32
    %s35 = ssub.s32 %s22, %s34
    %p36 = scmp.eq.s32.totalorder %s35, 0
    %s38 = sadd.s32 %s37, 1
    %s39 = scalar_select %p36, %s37, %s38
    %p42 = pneg %p36
    %p43 = scmp.eq.s32.totalorder %s15, 3
    %p44 = por %p42, %p43
    %p45 = scmp.ne.s32.totalorder %s37, %s40
    %p46 = scmp.eq.s32.totalorder %s15, 0
    %p47 = por %p45, %p46
    %p48 = scmp.ne.s32.totalorder %s37, %s40
    %p49 = scmp.eq.s32.totalorder %s20, 3
    %p50 = por %p48, %p49
    %p51 = scmp.ne.s32.totalorder %s40, %s41
    %p52 = scmp.eq.s32.totalorder %s20, 0
    %p53 = por %p51, %p52
    %p54 = scmp.ne.s32.totalorder %s40, %s41
    %p55 = scmp.eq.s32.totalorder %s21, 3
    %p56 = por %p54, %p55
    %p58 = scmp.ne.s32.totalorder %s41, %s57
    %p59 = scmp.eq.s32.totalorder %s21, 0
    %p60 = por %p58, %p59
    %s62 = sadd.s32 %s61, 1
    %p65 = scmp.eq.s32.totalorder %s15, 3
    %p66 = scmp.ne.s32.totalorder %s61, %s63
    %p67 = scmp.eq.s32.totalorder %s15, 0
    %p68 = por %p66, %p67
    %p69 = scmp.ne.s32.totalorder %s61, %s63
    %p70 = scmp.eq.s32.totalorder %s20, 3
    %p71 = por %p69, %p70
    %p72 = scmp.ne.s32.totalorder %s63, %s64
    %p73 = scmp.eq.s32.totalorder %s20, 0
    %p74 = por %p72, %p73
    %p75 = scmp.ne.s32.totalorder %s63, %s64
    %p76 = scmp.eq.s32.totalorder %s21, 3
    %p77 = por %p75, %p76
    %p79 = scmp.ne.s32.totalorder %s64, %s78
    %p80 = scmp.eq.s32.totalorder %s21, 0
    %p81 = por %p79, %p80
    %s83 = sadd.s32 %s82, 1
    %p86 = scmp.eq.s32.totalorder %s15, 3
    %p87 = scmp.ne.s32.totalorder %s82, %s84
    %p88 = scmp.eq.s32.totalorder %s15, 0
    %p89 = por %p87, %p88
    %p90 = scmp.ne.s32.totalorder %s82, %s84
    %p91 = scmp.eq.s32.totalorder %s20, 3
    %p92 = por %p90, %p91
    %p93 = scmp.ne.s32.totalorder %s84, %s85
    %p94 = scmp.eq.s32.totalorder %s20, 0
    %p95 = por %p93, %p94
    %p96 = scmp.ne.s32.totalorder %s84, %s85
    %p97 = scmp.eq.s32.totalorder %s21, 3
    %p98 = por %p96, %p97
    %p100 = scmp.ne.s32.totalorder %s85, %s99
    %p101 = scmp.eq.s32.totalorder %s21, 0
    %p102 = por %p100, %p101
    %s104 = sadd.s32 %s103, 1
    %p107 = scmp.eq.s32.totalorder %s15, 3
    %p108 = scmp.ne.s32.totalorder %s103, %s105
    %p109 = scmp.eq.s32.totalorder %s15, 0
    %p110 = por %p108, %p109
    %p111 = scmp.ne.s32.totalorder %s103, %s105
    %p112 = scmp.eq.s32.totalorder %s20, 3
    %p113 = por %p111, %p112
    %p114 = scmp.ne.s32.totalorder %s105, %s106
    %p115 = scmp.eq.s32.totalorder %s20, 0
    %p116 = por %p114, %p115
    %p117 = scmp.ne.s32.totalorder %s105, %s106
    %p118 = scmp.eq.s32.totalorder %s21, 3
    %p119 = por %p117, %p118
    %p121 = scmp.ne.s32.totalorder %s106, %s120
    %p122 = scmp.eq.s32.totalorder %s21, 0
    %p123 = por %p121, %p122
    %s125 = sadd.s32 %s124, 1
    %p128 = scmp.eq.s32.totalorder %s15, 3
    %p129 = scmp.ne.s32.totalorder %s124, %s126
    %p130 = scmp.eq.s32.totalorder %s15, 0
    %p131 = por %p129, %p130
    %p132 = scmp.ne.s32.totalorder %s124, %s126
    %p133 = scmp.eq.s32.totalorder %s20, 3
    %p134 = por %p132, %p133
    %p135 = scmp.ne.s32.totalorder %s126, %s127
    %p136 = scmp.eq.s32.totalorder %s20, 0
    %p137 = por %p135, %p136
    %p138 = scmp.ne.s32.totalorder %s126, %s127
    %p139 = scmp.eq.s32.totalorder %s21, 3
    %p140 = por %p138, %p139
    %p142 = scmp.ne.s32.totalorder %s127, %s141
    %p143 = scmp.eq.s32.totalorder %s21, 0
    %p144 = por %p142, %p143
    %s145 = ssub.s32 %s22, %s34
    %s146 = ssub.s32 %s23, %s30
    %s147 = sor.u32 %s145, %s146
    %p148 = scmp.eq.s32.totalorder %s147, 0
    %s150 = sadd.s32 %s149, 1
    %s151 = scalar_select %p148, %s149, %s150
    %p154 = pneg %p148
    %p155 = scmp.eq.s32.totalorder %s15, 3
    %p156 = por %p154, %p155
    %p157 = scmp.ne.s32.totalorder %s149, %s152
    %p158 = scmp.eq.s32.totalorder %s15, 0
    %p159 = por %p157, %p158
    %p160 = scmp.ne.s32.totalorder %s149, %s152
    %p161 = scmp.eq.s32.totalorder %s20, 3
    %p162 = por %p160, %p161
    %p163 = scmp.ne.s32.totalorder %s152, %s153
    %p164 = scmp.eq.s32.totalorder %s20, 0
    %p165 = por %p163, %p164
    %p166 = scmp.ne.s32.totalorder %s152, %s153
    %p167 = scmp.eq.s32.totalorder %s21, 3
    %p168 = por %p166, %p167
    %p170 = scmp.ne.s32.totalorder %s153, %s169
    %p171 = scmp.eq.s32.totalorder %s21, 0
    %p172 = por %p170, %p171
    %s173 = ssub.s32 %s22, %s34
    %s174 = ssub.s32 %s23, %s30
    %s175 = sor.u32 %s173, %s174
    %p176 = scmp.eq.s32.totalorder %s175, 0
    %s178 = sadd.s32 %s177, 1
    %s179 = scalar_select %p176, %s177, %s178
    %p182 = pneg %p176
    %p183 = scmp.eq.s32.totalorder %s15, 3
    %p184 = por %p182, %p183
    %p185 = scmp.ne.s32.totalorder %s177, %s180
    %p186 = scmp.eq.s32.totalorder %s15, 0
    %p187 = por %p185, %p186
    %p188 = scmp.ne.s32.totalorder %s177, %s180
    %p189 = scmp.eq.s32.totalorder %s20, 3
    %p190 = por %p188, %p189
    %p191 = scmp.ne.s32.totalorder %s180, %s181
    %p192 = scmp.eq.s32.totalorder %s20, 0
    %p193 = por %p191, %p192
    %p194 = scmp.ne.s32.totalorder %s180, %s181
    %p195 = scmp.eq.s32.totalorder %s21, 3
    %p196 = por %p194, %p195
    %p198 = scmp.ne.s32.totalorder %s181, %s197
    %p199 = scmp.eq.s32.totalorder %s21, 0
    %p200 = por %p198, %p199
    %s201 = ssub.s32 %s22, %s34
    %s202 = ssub.s32 %s23, %s30
    %s203 = sor.u32 %s201, %s202
    %p204 = scmp.eq.s32.totalorder %s203, 0
    %s206 = sadd.s32 %s205, 1
    %s207 = scalar_select %p204, %s205, %s206
    %p210 = pneg %p204
    %p211 = scmp.eq.s32.totalorder %s15, 3
    %p212 = por %p210, %p211
    %p213 = scmp.ne.s32.totalorder %s205, %s208
    %p214 = scmp.eq.s32.totalorder %s15, 0
    %p215 = por %p213, %p214
    %p216 = scmp.ne.s32.totalorder %s205, %s208
    %p217 = scmp.eq.s32.totalorder %s20, 3
    %p218 = por %p216, %p217
    %p219 = scmp.ne.s32.totalorder %s208, %s209
    %p220 = scmp.eq.s32.totalorder %s20, 0
    %p221 = por %p219, %p220
    %p222 = scmp.ne.s32.totalorder %s208, %s209
    %p223 = scmp.eq.s32.totalorder %s21, 3
    %p224 = por %p222, %p223
    %p226 = scmp.ne.s32.totalorder %s209, %s225
    %p227 = scmp.eq.s32.totalorder %s21, 0
    %p228 = por %p226, %p227
    %s229 = ssub.s32 %s22, %s34
    %s230 = ssub.s32 %s23, %s30
    %s231 = sor.u32 %s229, %s230
    %p232 = scmp.eq.s32.totalorder %s231, 0
    %s234 = sadd.s32 %s233, 1
    %s235 = scalar_select %p232, %s233, %s234
    %p238 = pneg %p232
    %p239 = scmp.eq.s32.totalorder %s15, 3
    %p240 = por %p238, %p239
    %p241 = scmp.ne.s32.totalorder %s233, %s236
    %p242 = scmp.eq.s32.totalorder %s15, 0
    %p243 = por %p241, %p242
    %p244 = scmp.ne.s32.totalorder %s233, %s236
    %p245 = scmp.eq.s32.totalorder %s20, 3
    %p246 = por %p244, %p245
    %p247 = scmp.ne.s32.totalorder %s236, %s237
    %p248 = scmp.eq.s32.totalorder %s20, 0
    %p249 = por %p247, %p248
    %p250 = scmp.ne.s32.totalorder %s236, %s237
    %p251 = scmp.eq.s32.totalorder %s21, 3
    %p252 = por %p250, %p251
    %p254 = scmp.ne.s32.totalorder %s237, %s253
    %p255 = scmp.eq.s32.totalorder %s21, 0
    %p256 = por %p254, %p255
    %p257 = scmp.le.s32.totalorder 1, %s15
    %p258 = scmp.lt.s32.totalorder %s15, 5
    %p259 = pnand %p257, %p258
    %p260 = pneg %p259
    // Predicated region
    $region9: #{inception_block.3} parent=5 // pred_check
      _
    $region10: #{inception_block.3} parent=5 // pred_check_branch
      %262 = sbr.rel (%p259) target = $region12
    $region11: #{inception_block.3} parent=5 // pred_region
      %s263 = ssub.s32 %s15, 1
      // Predicated region
      $region13: #{inception_block.3} parent=11 // pred_check
        %p264 = pneg %p74
      $region14: #{inception_block.3} parent=11 // pred_check_branch
        %266 = sbr.rel (%p264) target = $region16
      $region15: #{inception_block.3} parent=11 // pred_region
        _
      $region16: #{inception_block.3} parent=11 // pred_fallthru
        _
      // Predicated region
      $region17: #{inception_block.3} parent=11 // pred_check
        %p267 = pneg %p95
      $region18: #{inception_block.3} parent=11 // pred_check_branch
        %269 = sbr.rel (%p267) target = $region20
      $region19: #{inception_block.3} parent=11 // pred_region
        _
      $region20: #{inception_block.3} parent=11 // pred_fallthru
        _
      // Predicated region
      $region21: #{inception_block.3} parent=11 // pred_check
        %p270 = pneg %p116
      $region22: #{inception_block.3} parent=11 // pred_check_branch
        %272 = sbr.rel (%p270) target = $region24
      $region23: #{inception_block.3} parent=11 // pred_region
        _
      $region24: #{inception_block.3} parent=11 // pred_fallthru
        _
      // Predicated region
      $region25: #{inception_block.3} parent=11 // pred_check
        %p273 = pneg %p137
      $region26: #{inception_block.3} parent=11 // pred_check_branch
        %275 = sbr.rel (%p273) target = $region28
      $region27: #{inception_block.3} parent=11 // pred_region
        _
      $region28: #{inception_block.3} parent=11 // pred_fallthru
        _
    $region12: #{inception_block.3} parent=5 // pred_fallthru
      _
    %p276 = scmp.lt.s32.totalorder %s15, 4
    // Predicated region
    $region29: #{inception_block.3} parent=5 // pred_check
      %p277 = pneg %p276
    $region30: #{inception_block.3} parent=5 // pred_check_branch
      %279 = sbr.rel (%p277) target = $region32
    $region31: #{inception_block.3} parent=5 // pred_region
      // Predicated region
      $region33: #{inception_block.3} parent=31 // pred_check
        %p280 = pneg %p47
      $region34: #{inception_block.3} parent=31 // pred_check_branch
        %282 = sbr.rel (%p280) target = $region36
      $region35: #{inception_block.3} parent=31 // pred_region
        %p283 = scmp.lt.s32.totalorder %s22, 1
        %s284 = scalar_select %p283, %s22, 1
        %s285 = smul.addr %s284, 32
        %s286 = smul.addr %s285, 4
        %s287 = scalar_lea.vmem %s0, %s286
      $region36: #{inception_block.3} parent=31 // pred_fallthru
        _
    $region32: #{inception_block.3} parent=5 // pred_fallthru
      _
    %p288 = scmp.le.s32.totalorder 1, %s15
    %p289 = scmp.lt.s32.totalorder %s15, 5
    %p290 = pnand %p288, %p289
    %p291 = pneg %p290
    // Predicated region
    $region37: #{inception_block.3} parent=5 // pred_check
      _
    $region38: #{inception_block.3} parent=5 // pred_check_branch
      %293 = sbr.rel (%p290) target = $region40
    $region39: #{inception_block.3} parent=5 // pred_region
      %s294 = ssub.s32 %s15, 1
      %p295 = scmp.lt.s32.totalorder %s24, 1
      %s296 = scalar_select %p295, %s24, 1
      %s297 = smul.addr %s296, 32
      %s298 = smul.addr %s297, 4
      %s299 = scalar_lea.vmem %s0, %s298
      %p300 = pneg %p53
      %p301 = pneg %p50
      %p302 = pneg %p74
      %p303 = pneg %p71
      %p304 = pneg %p95
      %p305 = pneg %p92
      %p306 = pneg %p116
      %p307 = pneg %p113
      %p308 = pneg %p137
      %p309 = pneg %p134
      %p310 = pneg %p165
      %p311 = pneg %p162
      %s312 = smul.u32 8, %s25
      %p313 = scmp.lt.s32.totalorder %s24, 1
      %s314 = scalar_select %p313, %s24, 1
      %p315 = scmp.lt.s32.totalorder %s312, 15
      %s316 = scalar_select %p315, %s312, 15
      %s317 = smul.addr %s316, 2
      %s318 = smul.addr %s314, 32
      %s319 = sadd.s32 %s317, %s318
      %s320 = smul.addr %s319, 8
      %s321 = scalar_lea.vmem %s5, %s320
      %p322 = pneg %p193
      %p323 = pneg %p190
      %s324 = smul.u32 8, %s25
      %p325 = scmp.lt.s32.totalorder %s24, 1
      %s326 = scalar_select %p325, %s24, 1
      %p327 = scmp.lt.s32.totalorder %s324, 15
      %s328 = scalar_select %p327, %s324, 15
      %s329 = smul.addr %s328, 2
      %s330 = smul.addr %s326, 32
      %s331 = sadd.s32 %s329, %s330
      %s332 = smul.addr %s331, 4
      %s333 = scalar_lea.vmem %s6, %s332
      %p334 = pneg %p221
      %p335 = pneg %p218
      %s336 = smul.u32 8, %s25
      %p337 = scmp.lt.s32.totalorder %s24, 1
      %s338 = scalar_select %p337, %s24, 1
      %p339 = scmp.lt.s32.totalorder %s336, 15
      %s340 = scalar_select %p339, %s336, 15
      %s341 = smul.addr %s340, 2
      %s342 = smul.addr %s338, 32
      %s343 = sadd.s32 %s341, %s342
      %s344 = smul.addr %s343, 4
      %s345 = scalar_lea.vmem %s7, %s344
      %p346 = pneg %p249
      %p347 = pneg %p246
      %s348 = smul.u32 8, %s25
      %p349 = scmp.lt.s32.totalorder %s24, 1
      %s350 = scalar_select %p349, %s24, 1
      %p351 = scmp.lt.s32.totalorder %s348, 15
      %s352 = scalar_select %p351, %s348, 15
      %s353 = smul.addr %s352, 2
      %s354 = smul.addr %s350, 32
      %s355 = sadd.s32 %s353, %s354
      %s356 = smul.addr %s355, 8
      %s357 = scalar_lea.vmem %s8, %s356
      %p358 = scmp.lt.s32.totalorder %s24, 1
      %s359 = scalar_select %p358, %s24, 1
      %s360 = smul.addr %s359, 32
      %s361 = smul.addr %s360, 4
      %s362 = scalar_lea.vmem %s0, %s361
      %s363 = smul.u32 8, %s25
      %p364 = scmp.lt.s32.totalorder %s24, 1
      %s365 = scalar_select %p364, %s24, 1
      %p366 = scmp.lt.s32.totalorder %s363, 15
      %s367 = scalar_select %p366, %s363, 15
      %s368 = smul.addr %s367, 2
      %s369 = smul.addr %s365, 32
      %s370 = sadd.s32 %s368, %s369
      %s371 = smul.addr %s370, 8
      %s372 = scalar_lea.vmem %s5, %s371
      %s373 = smul.u32 8, %s25
      %s374 = smul.u32 8, %s25
      %p375 = scmp.lt.s32.totalorder %s24, 1
      %s376 = scalar_select %p375, %s24, 1
      %p377 = scmp.lt.s32.totalorder %s374, 15
      %s378 = scalar_select %p377, %s374, 15
      %s379 = smul.addr %s378, 2
      %s380 = smul.addr %s376, 32
      %s381 = sadd.s32 %s379, %s380
      %s382 = smul.addr %s381, 4
      %s383 = scalar_lea.vmem %s6, %s382
      %s384 = smul.u32 8, %s25
      %s385 = smul.u32 8, %s25
      %p386 = scmp.lt.s32.totalorder %s24, 1
      %s387 = scalar_select %p386, %s24, 1
      %p388 = scmp.lt.s32.totalorder %s385, 15
      %s389 = scalar_select %p388, %s385, 15
      %s390 = smul.addr %s389, 2
      %s391 = smul.addr %s387, 32
      %s392 = sadd.s32 %s390, %s391
      %s393 = smul.addr %s392, 4
      %s394 = scalar_lea.vmem %s7, %s393
      %s395 = smul.u32 8, %s25
      %s396 = smul.u32 8, %s25
      %p397 = scmp.lt.s32.totalorder %s24, 1
      %s398 = scalar_select %p397, %s24, 1
      %p399 = scmp.lt.s32.totalorder %s396, 15
      %s400 = scalar_select %p399, %s396, 15
      %s401 = smul.addr %s400, 2
      %s402 = smul.addr %s398, 32
      %s403 = sadd.s32 %s401, %s402
      %s404 = smul.addr %s403, 8
      %s405 = scalar_lea.vmem %s8, %s404
      %s406 = smul.u32 8, %s25
      %s408 = smul.u32 %s25, 8
      %s409 = smul.u32 %s408, 2
      %s410 = smul.addr %s409, 4
      %s411 = scalar_lea.vmem %s362, %s410
      %v412 = vld [vmem:[%s411] sm:$0xf]
      %v413 = vld [vmem:[%s411 + $0x4] sm:$0xf]
      %v414 = vld [vmem:[%s411 + $0x8] sm:$0xf]
      %v415 = vld [vmem:[%s411 + $0xc] sm:$0xf]
      %v416 = vld [vmem:[%s411 + $0x10] sm:$0xf]
      %v417 = vld [vmem:[%s411 + $0x14] sm:$0xf]
      %v418 = vld [vmem:[%s411 + $0x18] sm:$0xf]
      %v419 = vld [vmem:[%s411 + $0x1c] sm:$0xf]
      %v420 = vld [vmem:[%s411 + $0x20] sm:$0xf]
      %v421 = vld [vmem:[%s411 + $0x24] sm:$0xf]
      %v422 = vld [vmem:[%s411 + $0x28] sm:$0xf]
      %v423 = vld [vmem:[%s411 + $0x2c] sm:$0xf]
      %v424 = vld [vmem:[%s411 + $0x30] sm:$0xf]
      %v425 = vld [vmem:[%s411 + $0x34] sm:$0xf]
      %v426 = vld [vmem:[%s411 + $0x38] sm:$0xf]
      %v427 = vld [vmem:[%s411 + $0x3c] sm:$0xf]
      %v428 = vld [vmem:[%s1] sm:$0x3]
      %v429 = vld [vmem:[%s2] sm:$0x1]
      %v431 = vlaneseq
      %v432 = vshrl.u32 %v431, 7
      %v433 = vsub.s32 0, %v432
      %v434 = vrot.slane %v429, %v433
      %v452 = vunpack.c.l.b16 %v412
      %v453 = vunpack.c.l.b16 %v413
      %v454 = vunpack.c.l.b16 %v414
      %v455 = vunpack.c.l.b16 %v415
      %v456 = vunpack.c.l.b16 %v416
      %v457 = vunpack.c.l.b16 %v417
      %v458 = vunpack.c.l.b16 %v418
      %v459 = vunpack.c.l.b16 %v419
      %v460 = vunpack.c.l.b16 %v420
      %v461 = vunpack.c.l.b16 %v421
      %v462 = vunpack.c.l.b16 %v422
      %v463 = vunpack.c.l.b16 %v423
      %v464 = vunpack.c.l.b16 %v424
      %v465 = vunpack.c.l.b16 %v425
      %v466 = vunpack.c.l.b16 %v426
      %v467 = vunpack.c.l.b16 %v427
      %v468 = vpack.c.b16 %v453, %v452
      %v469 = vpack.c.b16 %v455, %v454
      %v470 = vpack.c.b16 %v457, %v456
      %v471 = vpack.c.b16 %v459, %v458
      %v472 = vpack.c.b16 %v461, %v460
      %v473 = vpack.c.b16 %v463, %v462
      %v474 = vpack.c.b16 %v465, %v464
      %v475 = vpack.c.b16 %v467, %v466
      %vm476 = vcmask 31744
      %v478 = vsel %vm476, %v468, 0
      %v481 = vsel %vm476, %v469, 0
      %v484 = vsel %vm476, %v470, 0
      %v487 = vsel %vm476, %v471, 0
      %v490 = vsel %vm476, %v472, 0
      %v493 = vsel %vm476, %v473, 0
      %v496 = vsel %vm476, %v474, 0
      %v499 = vsel %vm476, %v475, 0
      %vm501 = vcmask 1041408
      %v503 = vsel %vm501, %v428, 0
      %505 = vmatprep.subr.bf16.mxu0 0
      %506 = vmatpush1.bf16.msra.mxu0 %v503
      %507 = vmatprep.subr.bf16.mxu0 0
      %508 = vmatpush1.bf16.msra.mxu0 0
      %509 = vmatprep.subr.bf16.mxu0 0
      %510 = vmatpush1.bf16.msra.mxu0 0
      %511 = vmatprep.subr.bf16.mxu0 0
      %512 = vmatpush1.bf16.msra.mxu0 0
      %513 = vmatprep.subr.bf16.mxu0 0
      %514 = vmatpush1.bf16.msra.mxu0 0
      %515 = vmatprep.subr.bf16.mxu0 0
      %516 = vmatpush1.bf16.msra.mxu0 0
      %517 = vmatprep.subr.bf16.mxu0 0
      %518 = vmatpush1.bf16.msra.mxu0 0
      %519 = vmatprep.subr.bf16.mxu0 0
      %520 = vmatpush1.bf16.msra.mxu0 0
      %521 = vmatprep.subr.bf16.mxu0 0
      %522 = vmatpush1.bf16.msra.mxu0 0
      %523 = vmatprep.subr.bf16.mxu0 0
      %524 = vmatpush1.bf16.msra.mxu0 0
      %525 = vmatprep.subr.bf16.mxu0 0
      %526 = vmatpush1.bf16.msra.mxu0 0
      %527 = vmatprep.subr.bf16.mxu0 0
      %528 = vmatpush1.bf16.msra.mxu0 0
      %529 = vmatprep.subr.bf16.mxu0 0
      %530 = vmatpush1.bf16.msra.mxu0 0
      %531 = vmatprep.subr.bf16.mxu0 0
      %532 = vmatpush1.bf16.msra.mxu0 0
      %533 = vmatprep.subr.bf16.mxu0 0
      %534 = vmatpush1.bf16.msra.mxu0 0
      %535 = vmatprep.subr.bf16.mxu0 0
      %536 = vmatpush1.bf16.msra.mxu0 0
      %537 = vmatprep.mubr.bf16.mxu0 0
      %538 = vmatmul.mubr.bf16.gmra.mrb[0].mxu0 %v478
      %v539 = vpop.f32.mrb[0].mxu0
      %v540 = vadd.f32 %v434, %v539
      %v541 = vpop.f32.mrb[0].mxu0
      %v542 = vpop.f32.mrb[0].mxu0
      %v543 = vadd.f32 %v434, %v542
      %v544 = vpop.f32.mrb[0].mxu0
      %545 = vmatprep.mubr.bf16.mxu0 0
      %546 = vmatmul.mubr.bf16.gmra.mrb[0].mxu0 %v481
      %v547 = vpop.f32.mrb[0].mxu0
      %v548 = vadd.f32 %v434, %v547
      %v549 = vpop.f32.mrb[0].mxu0
      %v550 = vpop.f32.mrb[0].mxu0
      %v551 = vadd.f32 %v434, %v550
      %v552 = vpop.f32.mrb[0].mxu0
      %553 = vmatprep.mubr.bf16.mxu0 0
      %554 = vmatmul.mubr.bf16.gmra.mrb[0].mxu0 %v484
      %v555 = vpop.f32.mrb[0].mxu0
      %v556 = vadd.f32 %v434, %v555
      %v557 = vpop.f32.mrb[0].mxu0
      %v558 = vpop.f32.mrb[0].mxu0
      %v559 = vadd.f32 %v434, %v558
      %v560 = vpop.f32.mrb[0].mxu0
      %561 = vmatprep.mubr.bf16.mxu0 0
      %562 = vmatmul.mubr.bf16.gmra.mrb[0].mxu0 %v487
      %v563 = vpop.f32.mrb[0].mxu0
      %v564 = vadd.f32 %v434, %v563
      %v565 = vpop.f32.mrb[0].mxu0
      %v566 = vpop.f32.mrb[0].mxu0
      %v567 = vadd.f32 %v434, %v566
      %v568 = vpop.f32.mrb[0].mxu0
      %569 = vmatprep.mubr.bf16.mxu0 0
      %570 = vmatmul.mubr.bf16.gmra.mrb[0].mxu0 %v490
      %v571 = vpop.f32.mrb[0].mxu0
      %v572 = vadd.f32 %v434, %v571
      %v573 = vpop.f32.mrb[0].mxu0
      %v574 = vpop.f32.mrb[0].mxu0
      %v575 = vadd.f32 %v434, %v574
      %v576 = vpop.f32.mrb[0].mxu0
      %577 = vmatprep.mubr.bf16.mxu0 0
      %578 = vmatmul.mubr.bf16.gmra.mrb[0].mxu0 %v493
      %v579 = vpop.f32.mrb[0].mxu0
      %v580 = vadd.f32 %v434, %v579
      %v581 = vpop.f32.mrb[0].mxu0
      %v582 = vpop.f32.mrb[0].mxu0
      %v583 = vadd.f32 %v434, %v582
      %v584 = vpop.f32.mrb[0].mxu0
      %585 = vmatprep.mubr.bf16.mxu0 0
      %586 = vmatmul.mubr.bf16.gmra.mrb[0].mxu0 %v496
      %v587 = vpop.f32.mrb[0].mxu0
      %v588 = vadd.f32 %v434, %v587
      %v589 = vpop.f32.mrb[0].mxu0
      %v590 = vpop.f32.mrb[0].mxu0
      %v591 = vadd.f32 %v434, %v590
      %v592 = vpop.f32.mrb[0].mxu0
      %593 = vmatprep.mubr.bf16.mxu0 0
      %594 = vmatmul.mubr.bf16.gmra.mrb[0].mxu0 %v499
      %v595 = vpop.f32.mrb[0].mxu0
      %v596 = vadd.f32 %v434, %v595
      %v597 = vpop.f32.mrb[0].mxu0
      %v598 = vpop.f32.mrb[0].mxu0
      %v599 = vadd.f32 %v434, %v598
      %v600 = vpop.f32.mrb[0].mxu0
      %601 = vdwg.mxu0
      %v602 = vmax.f32 %v540, 0.0
      %v603 = vmax.f32 %v543, 0.0
      %v604 = vmax.f32 %v548, 0.0
      %v605 = vmax.f32 %v551, 0.0
      %v606 = vmax.f32 %v556, 0.0
      %v607 = vmax.f32 %v559, 0.0
      %v608 = vmax.f32 %v564, 0.0
      %v609 = vmax.f32 %v567, 0.0
      %v610 = vmax.f32 %v572, 0.0
      %v611 = vmax.f32 %v575, 0.0
      %v612 = vmax.f32 %v580, 0.0
      %v613 = vmax.f32 %v583, 0.0
      %v614 = vmax.f32 %v588, 0.0
      %v615 = vmax.f32 %v591, 0.0
      %v616 = vmax.f32 %v596, 0.0
      %v617 = vmax.f32 %v599, 0.0
      %618 = vst.msk [vmem:[%s372] sm:$0xff] %vm476, %v602
      %619 = vst.msk [vmem:[%s372 + $0x8] sm:$0xff] %vm476, %v603
      %620 = vst.msk [vmem:[%s372 + $0x10] sm:$0xff] %vm476, %v604
      %621 = vst.msk [vmem:[%s372 + $0x18] sm:$0xff] %vm476, %v605
      %622 = vst.msk [vmem:[%s372 + $0x20] sm:$0xff] %vm476, %v606
      %623 = vst.msk [vmem:[%s372 + $0x28] sm:$0xff] %vm476, %v607
      %624 = vst.msk [vmem:[%s372 + $0x30] sm:$0xff] %vm476, %v608
      %625 = vst.msk [vmem:[%s372 + $0x38] sm:$0xff] %vm476, %v609
      %626 = vst.msk [vmem:[%s372 + $0x40] sm:$0xff] %vm476, %v610
      %627 = vst.msk [vmem:[%s372 + $0x48] sm:$0xff] %vm476, %v611
      %628 = vst.msk [vmem:[%s372 + $0x50] sm:$0xff] %vm476, %v612
      %629 = vst.msk [vmem:[%s372 + $0x58] sm:$0xff] %vm476, %v613
      %630 = vst.msk [vmem:[%s372 + $0x60] sm:$0xff] %vm476, %v614
      %631 = vst.msk [vmem:[%s372 + $0x68] sm:$0xff] %vm476, %v615
      %632 = vst.msk [vmem:[%s372 + $0x70] sm:$0xff] %vm476, %v616
      %633 = vst.msk [vmem:[%s372 + $0x78] sm:$0xff] %vm476, %v617
      %v634 = vpack.c.bf16 %v603, %v602
      %v635 = vpack.c.bf16 %v605, %v604
      %v636 = vpack.c.bf16 %v607, %v606
      %v637 = vpack.c.bf16 %v609, %v608
      %v638 = vpack.c.bf16 %v611, %v610
      %v639 = vpack.c.bf16 %v613, %v612
      %v640 = vpack.c.bf16 %v615, %v614
      %v641 = vpack.c.bf16 %v617, %v616
      %v650 = vunpack.c.l.b16 %v634
      %v651 = vunpack.c.h.b16 %v634
      %v652 = vunpack.c.l.b16 %v635
      %v653 = vunpack.c.h.b16 %v635
      %v654 = vunpack.c.l.b16 %v636
      %v655 = vunpack.c.h.b16 %v636
      %v656 = vunpack.c.l.b16 %v637
      %v657 = vunpack.c.h.b16 %v637
      %v658 = vunpack.c.l.b16 %v638
      %v659 = vunpack.c.h.b16 %v638
      %v660 = vunpack.c.l.b16 %v639
      %v661 = vunpack.c.h.b16 %v639
      %v662 = vunpack.c.l.b16 %v640
      %v663 = vunpack.c.h.b16 %v640
      %v664 = vunpack.c.l.b16 %v641
      %v665 = vunpack.c.h.b16 %v641
      %v666 = vpack.c.b16 %v650, %v650
      %v667 = vpack.c.b16 %v651, %v651
      %v668 = vpack.c.b16 %v652, %v652
      %v669 = vpack.c.b16 %v653, %v653
      %v670 = vpack.c.b16 %v654, %v654
      %v671 = vpack.c.b16 %v655, %v655
      %v672 = vpack.c.b16 %v656, %v656
      %v673 = vpack.c.b16 %v657, %v657
      %v674 = vpack.c.b16 %v658, %v658
      %v675 = vpack.c.b16 %v659, %v659
      %v676 = vpack.c.b16 %v660, %v660
      %v677 = vpack.c.b16 %v661, %v661
      %v678 = vpack.c.b16 %v662, %v662
      %v679 = vpack.c.b16 %v663, %v663
      %v680 = vpack.c.b16 %v664, %v664
      %v681 = vpack.c.b16 %v665, %v665
      %682 = vrot.lane.b32.xlu0 %v666, 124
      %v683 = vpop.permute.xlu0 %682
      %684 = vrot.lane.b32.xlu0 %v667, 124
      %v685 = vpop.permute.xlu0 %684
      %686 = vrot.lane.b32.xlu0 %v668, 124
      %v687 = vpop.permute.xlu0 %686
      %688 = vrot.lane.b32.xlu0 %v669, 124
      %v689 = vpop.permute.xlu0 %688
      %690 = vrot.lane.b32.xlu0 %v670, 124
      %v691 = vpop.permute.xlu0 %690
      %692 = vrot.lane.b32.xlu0 %v671, 124
      %v693 = vpop.permute.xlu0 %692
      %694 = vrot.lane.b32.xlu0 %v672, 124
      %v695 = vpop.permute.xlu0 %694
      %696 = vrot.lane.b32.xlu0 %v673, 124
      %v697 = vpop.permute.xlu0 %696
      %698 = vrot.lane.b32.xlu0 %v674, 124
      %v699 = vpop.permute.xlu0 %698
      %700 = vrot.lane.b32.xlu0 %v675, 124
      %v701 = vpop.permute.xlu0 %700
      %702 = vrot.lane.b32.xlu0 %v676, 124
      %v703 = vpop.permute.xlu0 %702
      %704 = vrot.lane.b32.xlu0 %v677, 124
      %v705 = vpop.permute.xlu0 %704
      %706 = vrot.lane.b32.xlu0 %v678, 124
      %v707 = vpop.permute.xlu0 %706
      %708 = vrot.lane.b32.xlu0 %v679, 124
      %v709 = vpop.permute.xlu0 %708
      %710 = vrot.lane.b32.xlu0 %v680, 124
      %v711 = vpop.permute.xlu0 %710
      %712 = vrot.lane.b32.xlu0 %v681, 124
      %v713 = vpop.permute.xlu0 %712
      %vm730 = vcmask 27648
      %731 = vst.msk [vmem:[%s383] sm:$0xf] %vm730, %v683
      %732 = vst.msk [vmem:[%s383 + $0x4] sm:$0xf] %vm730, %v685
      %733 = vst.msk [vmem:[%s383 + $0x8] sm:$0xf] %vm730, %v687
      %734 = vst.msk [vmem:[%s383 + $0xc] sm:$0xf] %vm730, %v689
      %735 = vst.msk [vmem:[%s383 + $0x10] sm:$0xf] %vm730, %v691
      %736 = vst.msk [vmem:[%s383 + $0x14] sm:$0xf] %vm730, %v693
      %737 = vst.msk [vmem:[%s383 + $0x18] sm:$0xf] %vm730, %v695
      %738 = vst.msk [vmem:[%s383 + $0x1c] sm:$0xf] %vm730, %v697
      %739 = vst.msk [vmem:[%s383 + $0x20] sm:$0xf] %vm730, %v699
      %740 = vst.msk [vmem:[%s383 + $0x24] sm:$0xf] %vm730, %v701
      %741 = vst.msk [vmem:[%s383 + $0x28] sm:$0xf] %vm730, %v703
      %742 = vst.msk [vmem:[%s383 + $0x2c] sm:$0xf] %vm730, %v705
      %743 = vst.msk [vmem:[%s383 + $0x30] sm:$0xf] %vm730, %v707
      %744 = vst.msk [vmem:[%s383 + $0x34] sm:$0xf] %vm730, %v709
      %745 = vst.msk [vmem:[%s383 + $0x38] sm:$0xf] %vm730, %v711
      %746 = vst.msk [vmem:[%s383 + $0x3c] sm:$0xf] %vm730, %v713
      %747 = vrot.lane.b32.xlu0 %v666, 120
      %v748 = vpop.permute.xlu0 %747
      %749 = vrot.lane.b32.xlu0 %v667, 120
      %v750 = vpop.permute.xlu0 %749
      %751 = vrot.lane.b32.xlu0 %v668, 120
      %v752 = vpop.permute.xlu0 %751
      %753 = vrot.lane.b32.xlu0 %v669, 120
      %v754 = vpop.permute.xlu0 %753
      %755 = vrot.lane.b32.xlu0 %v670, 120
      %v756 = vpop.permute.xlu0 %755
      %757 = vrot.lane.b32.xlu0 %v671, 120
      %v758 = vpop.permute.xlu0 %757
      %759 = vrot.lane.b32.xlu0 %v672, 120
      %v760 = vpop.permute.xlu0 %759
      %761 = vrot.lane.b32.xlu0 %v673, 120
      %v762 = vpop.permute.xlu0 %761
      %763 = vrot.lane.b32.xlu0 %v674, 120
      %v764 = vpop.permute.xlu0 %763
      %765 = vrot.lane.b32.xlu0 %v675, 120
      %v766 = vpop.permute.xlu0 %765
      %767 = vrot.lane.b32.xlu0 %v676, 120
      %v768 = vpop.permute.xlu0 %767
      %769 = vrot.lane.b32.xlu0 %v677, 120
      %v770 = vpop.permute.xlu0 %769
      %771 = vrot.lane.b32.xlu0 %v678, 120
      %v772 = vpop.permute.xlu0 %771
      %773 = vrot.lane.b32.xlu0 %v679, 120
      %v774 = vpop.permute.xlu0 %773
      %775 = vrot.lane.b32.xlu0 %v680, 120
      %v776 = vpop.permute.xlu0 %775
      %777 = vrot.lane.b32.xlu0 %v681, 120
      %v778 = vpop.permute.xlu0 %777
      %vm795 = vcmask 11264
      %796 = vst.msk [vmem:[%s394] sm:$0xf] %vm795, %v748
      %797 = vst.msk [vmem:[%s394 + $0x4] sm:$0xf] %vm795, %v750
      %798 = vst.msk [vmem:[%s394 + $0x8] sm:$0xf] %vm795, %v752
      %799 = vst.msk [vmem:[%s394 + $0xc] sm:$0xf] %vm795, %v754
      %800 = vst.msk [vmem:[%s394 + $0x10] sm:$0xf] %vm795, %v756
      %801 = vst.msk [vmem:[%s394 + $0x14] sm:$0xf] %vm795, %v758
      %802 = vst.msk [vmem:[%s394 + $0x18] sm:$0xf] %vm795, %v760
      %803 = vst.msk [vmem:[%s394 + $0x1c] sm:$0xf] %vm795, %v762
      %804 = vst.msk [vmem:[%s394 + $0x20] sm:$0xf] %vm795, %v764
      %805 = vst.msk [vmem:[%s394 + $0x24] sm:$0xf] %vm795, %v766
      %806 = vst.msk [vmem:[%s394 + $0x28] sm:$0xf] %vm795, %v768
      %807 = vst.msk [vmem:[%s394 + $0x2c] sm:$0xf] %vm795, %v770
      %808 = vst.msk [vmem:[%s394 + $0x30] sm:$0xf] %vm795, %v772
      %809 = vst.msk [vmem:[%s394 + $0x34] sm:$0xf] %vm795, %v774
      %810 = vst.msk [vmem:[%s394 + $0x38] sm:$0xf] %vm795, %v776
      %811 = vst.msk [vmem:[%s394 + $0x3c] sm:$0xf] %vm795, %v778
      %s812 = ssub.s32 %s408, 1
      %p813 = scmp.gt.s32.totalorder %s812, 0
      %s814 = scalar_select %p813, %s812, 0
      %s815 = smul.u32 %s814, 2
      %s816 = smul.addr %s815, 4
      %s817 = scalar_lea.vmem %s362, %s816
      %v818 = vld [vmem:[%s817] sm:$0xf]
      %v819 = vld [vmem:[%s817 + $0x4] sm:$0xf]
      %s820 = sadd.s32 %s408, 8
      %p821 = scmp.lt.s32.totalorder %s820, 15
      %s822 = scalar_select %p821, %s820, 15
      %s823 = smul.u32 %s822, 2
      %s824 = smul.addr %s823, 4
      %s825 = scalar_lea.vmem %s362, %s824
      %v826 = vld [vmem:[%s825] sm:$0xf]
      %v827 = vld [vmem:[%s825 + $0x4] sm:$0xf]
      %v828 = vmax.bf16 %v412, %v818
      %v829 = vmax.bf16 %v413, %v819
      %v830 = vmax.bf16 %v414, %v412
      %v831 = vmax.bf16 %v415, %v413
      %v832 = vmax.bf16 %v416, %v414
      %v833 = vmax.bf16 %v417, %v415
      %v834 = vmax.bf16 %v418, %v416
      %v835 = vmax.bf16 %v419, %v417
      %v836 = vmax.bf16 %v420, %v418
      %v837 = vmax.bf16 %v421, %v419
      %v838 = vmax.bf16 %v422, %v420
      %v839 = vmax.bf16 %v423, %v421
      %v840 = vmax.bf16 %v424, %v422
      %v841 = vmax.bf16 %v425, %v423
      %v842 = vmax.bf16 %v426, %v424
      %v843 = vmax.bf16 %v427, %v425
      %v844 = vmax.bf16 %v828, %v414
      %v845 = vmax.bf16 %v829, %v415
      %v846 = vmax.bf16 %v830, %v416
      %v847 = vmax.bf16 %v831, %v417
      %v848 = vmax.bf16 %v832, %v418
      %v849 = vmax.bf16 %v833, %v419
      %v850 = vmax.bf16 %v834, %v420
      %v851 = vmax.bf16 %v835, %v421
      %v852 = vmax.bf16 %v836, %v422
      %v853 = vmax.bf16 %v837, %v423
      %v854 = vmax.bf16 %v838, %v424
      %v855 = vmax.bf16 %v839, %v425
      %v856 = vmax.bf16 %v840, %v426
      %v857 = vmax.bf16 %v841, %v427
      %v858 = vmax.bf16 %v842, %v826
      %v859 = vmax.bf16 %v843, %v827
      %v876 = vunpack.c.l.b16 %v844
      %v877 = vunpack.c.l.b16 %v845
      %v878 = vunpack.c.l.b16 %v846
      %v879 = vunpack.c.l.b16 %v847
      %v880 = vunpack.c.l.b16 %v848
      %v881 = vunpack.c.l.b16 %v849
      %v882 = vunpack.c.l.b16 %v850
      %v883 = vunpack.c.l.b16 %v851
      %v884 = vunpack.c.l.b16 %v852
      %v885 = vunpack.c.l.b16 %v853
      %v886 = vunpack.c.l.b16 %v854
      %v887 = vunpack.c.l.b16 %v855
      %v888 = vunpack.c.l.b16 %v856
      %v889 = vunpack.c.l.b16 %v857
      %v890 = vunpack.c.l.b16 %v858
      %v891 = vunpack.c.l.b16 %v859
      %v892 = vpack.c.b16 %v877, %v876
      %v893 = vpack.c.b16 %v879, %v878
      %v894 = vpack.c.b16 %v881, %v880
      %v895 = vpack.c.b16 %v883, %v882
      %v896 = vpack.c.b16 %v885, %v884
      %v897 = vpack.c.b16 %v887, %v886
      %v898 = vpack.c.b16 %v889, %v888
      %v899 = vpack.c.b16 %v891, %v890
      %v901 = vshrl.u32 %v892, 16
      %v903 = vrot.slane %v901, 7
      %v904 = vshll.u32 %v892, 16
      %v906 = vor.u32 %v903, %v904
      %v908 = vshrl.u32 %v893, 16
      %v910 = vrot.slane %v908, 7
      %v911 = vshll.u32 %v893, 16
      %v913 = vor.u32 %v910, %v911
      %v915 = vshrl.u32 %v894, 16
      %v917 = vrot.slane %v915, 7
      %v918 = vshll.u32 %v894, 16
      %v920 = vor.u32 %v917, %v918
      %v922 = vshrl.u32 %v895, 16
      %v924 = vrot.slane %v922, 7
      %v925 = vshll.u32 %v895, 16
      %v927 = vor.u32 %v924, %v925
      %v929 = vshrl.u32 %v896, 16
      %v931 = vrot.slane %v929, 7
      %v932 = vshll.u32 %v896, 16
      %v934 = vor.u32 %v931, %v932
      %v936 = vshrl.u32 %v897, 16
      %v938 = vrot.slane %v936, 7
      %v939 = vshll.u32 %v897, 16
      %v941 = vor.u32 %v938, %v939
      %v943 = vshrl.u32 %v898, 16
      %v945 = vrot.slane %v943, 7
      %v946 = vshll.u32 %v898, 16
      %v948 = vor.u32 %v945, %v946
      %v950 = vshrl.u32 %v899, 16
      %v952 = vrot.slane %v950, 7
      %v953 = vshll.u32 %v899, 16
      %v955 = vor.u32 %v952, %v953
      %vm964 = vcmask 1040384
      %vm965 = vsmask.f32 256
      %vm966 = vmand %vm964, %vm965
      %v967 = vsel %vm966, %v844, %v906
      %v968 = vsel %vm966, %v846, %v913
      %v969 = vsel %vm966, %v848, %v920
      %v970 = vsel %vm966, %v850, %v927
      %v971 = vsel %vm966, %v852, %v934
      %v972 = vsel %vm966, %v854, %v941
      %v973 = vsel %vm966, %v856, %v948
      %v974 = vsel %vm966, %v858, %v955
      %v975 = vrot.slane %v904, 1
      %v976 = vor.u32 %v901, %v975
      %v977 = vrot.slane %v911, 1
      %v978 = vor.u32 %v908, %v977
      %v979 = vrot.slane %v918, 1
      %v980 = vor.u32 %v915, %v979
      %v981 = vrot.slane %v925, 1
      %v982 = vor.u32 %v922, %v981
      %v983 = vrot.slane %v932, 1
      %v984 = vor.u32 %v929, %v983
      %v985 = vrot.slane %v939, 1
      %v986 = vor.u32 %v936, %v985
      %v987 = vrot.slane %v946, 1
      %v988 = vor.u32 %v943, %v987
      %v989 = vrot.slane %v953, 1
      %v990 = vor.u32 %v950, %v989
      %v999 = vpack.c.b16 %v877, %v877
      %v1000 = vpack.c.b16 %v879, %v879
      %v1001 = vpack.c.b16 %v881, %v881
      %v1002 = vpack.c.b16 %v883, %v883
      %v1003 = vpack.c.b16 %v885, %v885
      %v1004 = vpack.c.b16 %v887, %v887
      %v1005 = vpack.c.b16 %v889, %v889
      %v1006 = vpack.c.b16 %v891, %v891
      %vm1015 = vcmask 1047552
      %vm1016 = vsmask.f32 7424
      %vm1017 = vmand %vm1015, %vm1016
      %v1018 = vsel %vm1017, %v976, %v999
      %v1019 = vsel %vm1017, %v978, %v1000
      %v1020 = vsel %vm1017, %v980, %v1001
      %v1021 = vsel %vm1017, %v982, %v1002
      %v1022 = vsel %vm1017, %v984, %v1003
      %v1023 = vsel %vm1017, %v986, %v1004
      %v1024 = vsel %vm1017, %v988, %v1005
      %v1025 = vsel %vm1017, %v990, %v1006
      %v1034 = vunpack.c.l.b16 %v967
      %v1035 = vunpack.c.h.b16 %v967
      %v1036 = vunpack.c.l.b16 %v968
      %v1037 = vunpack.c.h.b16 %v968
      %v1038 = vunpack.c.l.b16 %v969
      %v1039 = vunpack.c.h.b16 %v969
      %v1040 = vunpack.c.l.b16 %v970
      %v1041 = vunpack.c.h.b16 %v970
      %v1042 = vunpack.c.l.b16 %v971
      %v1043 = vunpack.c.h.b16 %v971
      %v1044 = vunpack.c.l.b16 %v972
      %v1045 = vunpack.c.h.b16 %v972
      %v1046 = vunpack.c.l.b16 %v973
      %v1047 = vunpack.c.h.b16 %v973
      %v1048 = vunpack.c.l.b16 %v974
      %v1049 = vunpack.c.h.b16 %v974
      %v1050 = vpack.c.b16 %v1034, %v1034
      %v1051 = vpack.c.b16 %v1035, %v1035
      %v1052 = vpack.c.b16 %v1036, %v1036
      %v1053 = vpack.c.b16 %v1037, %v1037
      %v1054 = vpack.c.b16 %v1038, %v1038
      %v1055 = vpack.c.b16 %v1039, %v1039
      %v1056 = vpack.c.b16 %v1040, %v1040
      %v1057 = vpack.c.b16 %v1041, %v1041
      %v1058 = vpack.c.b16 %v1042, %v1042
      %v1059 = vpack.c.b16 %v1043, %v1043
      %v1060 = vpack.c.b16 %v1044, %v1044
      %v1061 = vpack.c.b16 %v1045, %v1045
      %v1062 = vpack.c.b16 %v1046, %v1046
      %v1063 = vpack.c.b16 %v1047, %v1047
      %v1064 = vpack.c.b16 %v1048, %v1048
      %v1065 = vpack.c.b16 %v1049, %v1049
      %v1082 = vmax.bf16 %v844, %v1050
      %v1083 = vmax.bf16 %v845, %v1051
      %v1084 = vmax.bf16 %v846, %v1052
      %v1085 = vmax.bf16 %v847, %v1053
      %v1086 = vmax.bf16 %v848, %v1054
      %v1087 = vmax.bf16 %v849, %v1055
      %v1088 = vmax.bf16 %v850, %v1056
      %v1089 = vmax.bf16 %v851, %v1057
      %v1090 = vmax.bf16 %v852, %v1058
      %v1091 = vmax.bf16 %v853, %v1059
      %v1092 = vmax.bf16 %v854, %v1060
      %v1093 = vmax.bf16 %v855, %v1061
      %v1094 = vmax.bf16 %v856, %v1062
      %v1095 = vmax.bf16 %v857, %v1063
      %v1096 = vmax.bf16 %v858, %v1064
      %v1097 = vmax.bf16 %v859, %v1065
      %v1106 = vunpack.c.l.b16 %v1018
      %v1107 = vunpack.c.h.b16 %v1018
      %v1108 = vunpack.c.l.b16 %v1019
      %v1109 = vunpack.c.h.b16 %v1019
      %v1110 = vunpack.c.l.b16 %v1020
      %v1111 = vunpack.c.h.b16 %v1020
      %v1112 = vunpack.c.l.b16 %v1021
      %v1113 = vunpack.c.h.b16 %v1021
      %v1114 = vunpack.c.l.b16 %v1022
      %v1115 = vunpack.c.h.b16 %v1022
      %v1116 = vunpack.c.l.b16 %v1023
      %v1117 = vunpack.c.h.b16 %v1023
      %v1118 = vunpack.c.l.b16 %v1024
      %v1119 = vunpack.c.h.b16 %v1024
      %v1120 = vunpack.c.l.b16 %v1025
      %v1121 = vunpack.c.h.b16 %v1025
      %v1122 = vpack.c.b16 %v1106, %v1106
      %v1123 = vpack.c.b16 %v1107, %v1107
      %v1124 = vpack.c.b16 %v1108, %v1108
      %v1125 = vpack.c.b16 %v1109, %v1109
      %v1126 = vpack.c.b16 %v1110, %v1110
      %v1127 = vpack.c.b16 %v1111, %v1111
      %v1128 = vpack.c.b16 %v1112, %v1112
      %v1129 = vpack.c.b16 %v1113, %v1113
      %v1130 = vpack.c.b16 %v1114, %v1114
      %v1131 = vpack.c.b16 %v1115, %v1115
      %v1132 = vpack.c.b16 %v1116, %v1116
      %v1133 = vpack.c.b16 %v1117, %v1117
      %v1134 = vpack.c.b16 %v1118, %v1118
      %v1135 = vpack.c.b16 %v1119, %v1119
      %v1136 = vpack.c.b16 %v1120, %v1120
      %v1137 = vpack.c.b16 %v1121, %v1121
      %v1154 = vmax.bf16 %v1082, %v1122
      %v1155 = vmax.bf16 %v1083, %v1123
      %v1156 = vmax.bf16 %v1084, %v1124
      %v1157 = vmax.bf16 %v1085, %v1125
      %v1158 = vmax.bf16 %v1086, %v1126
      %v1159 = vmax.bf16 %v1087, %v1127
      %v1160 = vmax.bf16 %v1088, %v1128
      %v1161 = vmax.bf16 %v1089, %v1129
      %v1162 = vmax.bf16 %v1090, %v1130
      %v1163 = vmax.bf16 %v1091, %v1131
      %v1164 = vmax.bf16 %v1092, %v1132
      %v1165 = vmax.bf16 %v1093, %v1133
      %v1166 = vmax.bf16 %v1094, %v1134
      %v1167 = vmax.bf16 %v1095, %v1135
      %v1168 = vmax.bf16 %v1096, %v1136
      %v1169 = vmax.bf16 %v1097, %v1137
      %v1170 = vld [vmem:[%s3] sm:$0x3]
      %v1171 = vld [vmem:[%s4] sm:$0x1]
      %v1173 = vlaneseq
      %v1174 = vshrl.u32 %v1173, 7
      %v1175 = vsub.s32 0, %v1174
      %v1176 = vrot.slane %v1171, %v1175
      %v1194 = vunpack.c.l.b16 %v1154
      %v1195 = vunpack.c.l.b16 %v1155
      %v1196 = vunpack.c.l.b16 %v1156
      %v1197 = vunpack.c.l.b16 %v1157
      %v1198 = vunpack.c.l.b16 %v1158
      %v1199 = vunpack.c.l.b16 %v1159
      %v1200 = vunpack.c.l.b16 %v1160
      %v1201 = vunpack.c.l.b16 %v1161
      %v1202 = vunpack.c.l.b16 %v1162
      %v1203 = vunpack.c.l.b16 %v1163
      %v1204 = vunpack.c.l.b16 %v1164
      %v1205 = vunpack.c.l.b16 %v1165
      %v1206 = vunpack.c.l.b16 %v1166
      %v1207 = vunpack.c.l.b16 %v1167
      %v1208 = vunpack.c.l.b16 %v1168
      %v1209 = vunpack.c.l.b16 %v1169
      %v1210 = vpack.c.b16 %v1195, %v1194
      %v1211 = vpack.c.b16 %v1197, %v1196
      %v1212 = vpack.c.b16 %v1199, %v1198
      %v1213 = vpack.c.b16 %v1201, %v1200
      %v1214 = vpack.c.b16 %v1203, %v1202
      %v1215 = vpack.c.b16 %v1205, %v1204
      %v1216 = vpack.c.b16 %v1207, %v1206
      %v1217 = vpack.c.b16 %v1209, %v1208
      %v1219 = vsel %vm476, %v1210, 0
      %v1222 = vsel %vm476, %v1211, 0
      %v1225 = vsel %vm476, %v1212, 0
      %v1228 = vsel %vm476, %v1213, 0
      %v1231 = vsel %vm476, %v1214, 0
      %v1234 = vsel %vm476, %v1215, 0
      %v1237 = vsel %vm476, %v1216, 0
      %v1240 = vsel %vm476, %v1217, 0
      %v1243 = vsel %vm501, %v1170, 0
      %1245 = vmatprep.subr.bf16.mxu0 0
      %1246 = vmatpush1.bf16.msra.mxu0 %v1243
      %1247 = vmatprep.subr.bf16.mxu0 0
      %1248 = vmatpush1.bf16.msra.mxu0 0
      %1249 = vmatprep.subr.bf16.mxu0 0
      %1250 = vmatpush1.bf16.msra.mxu0 0
      %1251 = vmatprep.subr.bf16.mxu0 0
      %1252 = vmatpush1.bf16.msra.mxu0 0
      %1253 = vmatprep.subr.bf16.mxu0 0
      %1254 = vmatpush1.bf16.msra.mxu0 0
      %1255 = vmatprep.subr.bf16.mxu0 0
      %1256 = vmatpush1.bf16.msra.mxu0 0
      %1257 = vmatprep.subr.bf16.mxu0 0
      %1258 = vmatpush1.bf16.msra.mxu0 0
      %1259 = vmatprep.subr.bf16.mxu0 0
      %1260 = vmatpush1.bf16.msra.mxu0 0
      %1261 = vmatprep.subr.bf16.mxu0 0
      %1262 = vmatpush1.bf16.msra.mxu0 0
      %1263 = vmatprep.subr.bf16.mxu0 0
      %1264 = vmatpush1.bf16.msra.mxu0 0
      %1265 = vmatprep.subr.bf16.mxu0 0
      %1266 = vmatpush1.bf16.msra.mxu0 0
      %1267 = vmatprep.subr.bf16.mxu0 0
      %1268 = vmatpush1.bf16.msra.mxu0 0
      %1269 = vmatprep.subr.bf16.mxu0 0
      %1270 = vmatpush1.bf16.msra.mxu0 0
      %1271 = vmatprep.subr.bf16.mxu0 0
      %1272 = vmatpush1.bf16.msra.mxu0 0
      %1273 = vmatprep.subr.bf16.mxu0 0
      %1274 = vmatpush1.bf16.msra.mxu0 0
      %1275 = vmatprep.subr.bf16.mxu0 0
      %1276 = vmatpush1.bf16.msra.mxu0 0
      %1277 = vmatprep.mubr.bf16.mxu0 0
      %1278 = vmatmul.mubr.bf16.gmra.mrb[0].mxu0 %v1219
      %v1279 = vpop.f32.mrb[0].mxu0
      %v1280 = vadd.f32 %v1176, %v1279
      %v1281 = vpop.f32.mrb[0].mxu0
      %v1282 = vpop.f32.mrb[0].mxu0
      %v1283 = vadd.f32 %v1176, %v1282
      %v1284 = vpop.f32.mrb[0].mxu0
      %1285 = vmatprep.mubr.bf16.mxu0 0
      %1286 = vmatmul.mubr.bf16.gmra.mrb[0].mxu0 %v1222
      %v1287 = vpop.f32.mrb[0].mxu0
      %v1288 = vadd.f32 %v1176, %v1287
      %v1289 = vpop.f32.mrb[0].mxu0
      %v1290 = vpop.f32.mrb[0].mxu0
      %v1291 = vadd.f32 %v1176, %v1290
      %v1292 = vpop.f32.mrb[0].mxu0
      %1293 = vmatprep.mubr.bf16.mxu0 0
      %1294 = vmatmul.mubr.bf16.gmra.mrb[0].mxu0 %v1225
      %v1295 = vpop.f32.mrb[0].mxu0
      %v1296 = vadd.f32 %v1176, %v1295
      %v1297 = vpop.f32.mrb[0].mxu0
      %v1298 = vpop.f32.mrb[0].mxu0
      %v1299 = vadd.f32 %v1176, %v1298
      %v1300 = vpop.f32.mrb[0].mxu0
      %1301 = vmatprep.mubr.bf16.mxu0 0
      %1302 = vmatmul.mubr.bf16.gmra.mrb[0].mxu0 %v1228
      %v1303 = vpop.f32.mrb[0].mxu0
      %v1304 = vadd.f32 %v1176, %v1303
      %v1305 = vpop.f32.mrb[0].mxu0
      %v1306 = vpop.f32.mrb[0].mxu0
      %v1307 = vadd.f32 %v1176, %v1306
      %v1308 = vpop.f32.mrb[0].mxu0
      %1309 = vmatprep.mubr.bf16.mxu0 0
      %1310 = vmatmul.mubr.bf16.gmra.mrb[0].mxu0 %v1231
      %v1311 = vpop.f32.mrb[0].mxu0
      %v1312 = vadd.f32 %v1176, %v1311
      %v1313 = vpop.f32.mrb[0].mxu0
      %v1314 = vpop.f32.mrb[0].mxu0
      %v1315 = vadd.f32 %v1176, %v1314
      %v1316 = vpop.f32.mrb[0].mxu0
      %1317 = vmatprep.mubr.bf16.mxu0 0
      %1318 = vmatmul.mubr.bf16.gmra.mrb[0].mxu0 %v1234
      %v1319 = vpop.f32.mrb[0].mxu0
      %v1320 = vadd.f32 %v1176, %v1319
      %v1321 = vpop.f32.mrb[0].mxu0
      %v1322 = vpop.f32.mrb[0].mxu0
      %v1323 = vadd.f32 %v1176, %v1322
      %v1324 = vpop.f32.mrb[0].mxu0
      %1325 = vmatprep.mubr.bf16.mxu0 0
      %1326 = vmatmul.mubr.bf16.gmra.mrb[0].mxu0 %v1237
      %v1327 = vpop.f32.mrb[0].mxu0
      %v1328 = vadd.f32 %v1176, %v1327
      %v1329 = vpop.f32.mrb[0].mxu0
      %v1330 = vpop.f32.mrb[0].mxu0
      %v1331 = vadd.f32 %v1176, %v1330
      %v1332 = vpop.f32.mrb[0].mxu0
      %1333 = vmatprep.mubr.bf16.mxu0 0
      %1334 = vmatmul.mubr.bf16.gmra.mrb[0].mxu0 %v1240
      %v1335 = vpop.f32.mrb[0].mxu0
      %v1336 = vadd.f32 %v1176, %v1335
      %v1337 = vpop.f32.mrb[0].mxu0
      %v1338 = vpop.f32.mrb[0].mxu0
      %v1339 = vadd.f32 %v1176, %v1338
      %v1340 = vpop.f32.mrb[0].mxu0
      %1341 = vdwg.mxu0
      %v1342 = vmax.f32 %v1280, 0.0
      %v1343 = vmax.f32 %v1283, 0.0
      %v1344 = vmax.f32 %v1288, 0.0
      %v1345 = vmax.f32 %v1291, 0.0
      %v1346 = vmax.f32 %v1296, 0.0
      %v1347 = vmax.f32 %v1299, 0.0
      %v1348 = vmax.f32 %v1304, 0.0
      %v1349 = vmax.f32 %v1307, 0.0
      %v1350 = vmax.f32 %v1312, 0.0
      %v1351 = vmax.f32 %v1315, 0.0
      %v1352 = vmax.f32 %v1320, 0.0
      %v1353 = vmax.f32 %v1323, 0.0
      %v1354 = vmax.f32 %v1328, 0.0
      %v1355 = vmax.f32 %v1331, 0.0
      %v1356 = vmax.f32 %v1336, 0.0
      %v1357 = vmax.f32 %v1339, 0.0
      %1358 = vst.msk [vmem:[%s405] sm:$0xff] %vm476, %v1342
      %1359 = vst.msk [vmem:[%s405 + $0x8] sm:$0xff] %vm476, %v1343
      %1360 = vst.msk [vmem:[%s405 + $0x10] sm:$0xff] %vm476, %v1344
      %1361 = vst.msk [vmem:[%s405 + $0x18] sm:$0xff] %vm476, %v1345
      %1362 = vst.msk [vmem:[%s405 + $0x20] sm:$0xff] %vm476, %v1346
      %1363 = vst.msk [vmem:[%s405 + $0x28] sm:$0xff] %vm476, %v1347
      %1364 = vst.msk [vmem:[%s405 + $0x30] sm:$0xff] %vm476, %v1348
      %1365 = vst.msk [vmem:[%s405 + $0x38] sm:$0xff] %vm476, %v1349
      %1366 = vst.msk [vmem:[%s405 + $0x40] sm:$0xff] %vm476, %v1350
      %1367 = vst.msk [vmem:[%s405 + $0x48] sm:$0xff] %vm476, %v1351
      %1368 = vst.msk [vmem:[%s405 + $0x50] sm:$0xff] %vm476, %v1352
      %1369 = vst.msk [vmem:[%s405 + $0x58] sm:$0xff] %vm476, %v1353
      %1370 = vst.msk [vmem:[%s405 + $0x60] sm:$0xff] %vm476, %v1354
      %1371 = vst.msk [vmem:[%s405 + $0x68] sm:$0xff] %vm476, %v1355
      %1372 = vst.msk [vmem:[%s405 + $0x70] sm:$0xff] %vm476, %v1356
      %1373 = vst.msk [vmem:[%s405 + $0x78] sm:$0xff] %vm476, %v1357
      %s1374 = smul.u32 8, %s25
      %p1375 = scmp.lt.s32.totalorder %s24, 1
      %s1376 = scalar_select %p1375, %s24, 1
      %p1377 = scmp.lt.s32.totalorder %s1374, 15
      %s1378 = scalar_select %p1377, %s1374, 15
      %s1379 = smul.addr %s1378, 2
      %s1380 = smul.addr %s1376, 32
      %s1381 = sadd.s32 %s1379, %s1380
      %s1382 = smul.addr %s1381, 8
      %s1383 = scalar_lea.vmem %s5, %s1382
      %s1384 = smul.u32 8, %s25
      %p1385 = scmp.lt.s32.totalorder %s24, 1
      %s1386 = scalar_select %p1385, %s24, 1
      %p1387 = scmp.lt.s32.totalorder %s1384, 15
      %s1388 = scalar_select %p1387, %s1384, 15
      %s1389 = smul.addr %s1388, 2
      %s1390 = smul.addr %s1386, 32
      %s1391 = sadd.s32 %s1389, %s1390
      %s1392 = smul.addr %s1391, 4
      %s1393 = scalar_lea.vmem %s6, %s1392
      %s1394 = smul.u32 8, %s25
      %p1395 = scmp.lt.s32.totalorder %s24, 1
      %s1396 = scalar_select %p1395, %s24, 1
      %p1397 = scmp.lt.s32.totalorder %s1394, 15
      %s1398 = scalar_select %p1397, %s1394, 15
      %s1399 = smul.addr %s1398, 2
      %s1400 = smul.addr %s1396, 32
      %s1401 = sadd.s32 %s1399, %s1400
      %s1402 = smul.addr %s1401, 4
      %s1403 = scalar_lea.vmem %s7, %s1402
      %s1404 = smul.u32 8, %s25
      %p1405 = scmp.lt.s32.totalorder %s24, 1
      %s1406 = scalar_select %p1405, %s24, 1
      %p1407 = scmp.lt.s32.totalorder %s1404, 15
      %s1408 = scalar_select %p1407, %s1404, 15
      %s1409 = smul.addr %s1408, 2
      %s1410 = smul.addr %s1406, 32
      %s1411 = sadd.s32 %s1409, %s1410
      %s1412 = smul.addr %s1411, 8
      %s1413 = scalar_lea.vmem %s8, %s1412
      // Predicated region
      $region41: #{inception_block.3} parent=39 // pred_check
        %p1414 = pneg %p162
      $region42: #{inception_block.3} parent=39 // pred_check_branch
        %1416 = sbr.rel (%p1414) target = $region44
      $region43: #{inception_block.3} parent=39 // pred_region
        %s1417 = smul.u32 8, %s25
      $region44: #{inception_block.3} parent=39 // pred_fallthru
        _
      // Predicated region
      $region45: #{inception_block.3} parent=39 // pred_check
        %p1418 = pneg %p190
      $region46: #{inception_block.3} parent=39 // pred_check_branch
        %1420 = sbr.rel (%p1418) target = $region48
      $region47: #{inception_block.3} parent=39 // pred_region
        %s1421 = smul.u32 8, %s25
      $region48: #{inception_block.3} parent=39 // pred_fallthru
        _
      // Predicated region
      $region49: #{inception_block.3} parent=39 // pred_check
        %p1422 = pneg %p218
      $region50: #{inception_block.3} parent=39 // pred_check_branch
        %1424 = sbr.rel (%p1422) target = $region52
      $region51: #{inception_block.3} parent=39 // pred_region
        %s1425 = smul.u32 8, %s25
      $region52: #{inception_block.3} parent=39 // pred_fallthru
        _
      // Predicated region
      $region53: #{inception_block.3} parent=39 // pred_check
        %p1426 = pneg %p246
      $region54: #{inception_block.3} parent=39 // pred_check_branch
        %1428 = sbr.rel (%p1426) target = $region56
      $region55: #{inception_block.3} parent=39 // pred_region
        %s1429 = smul.u32 8, %s25
      $region56: #{inception_block.3} parent=39 // pred_fallthru
        _
    $region40: #{inception_block.3} parent=5 // pred_fallthru
      _
    %p1430 = scmp.le.s32.totalorder 2, %s15
    // Predicated region
    $region57: #{inception_block.3} parent=5 // pred_check
      %p1431 = pneg %p1430
    $region58: #{inception_block.3} parent=5 // pred_check_branch
      %1433 = sbr.rel (%p1431) target = $region60
    $region59: #{inception_block.3} parent=5 // pred_region
      %s1434 = ssub.s32 %s15, 2
      // Predicated region
      $region61: #{inception_block.3} parent=59 // pred_check
        %p1435 = pneg %p168
      $region62: #{inception_block.3} parent=59 // pred_check_branch
        %1437 = sbr.rel (%p1435) target = $region64
      $region63: #{inception_block.3} parent=59 // pred_region
        %s1438 = smul.u32 8, %s27
        %p1439 = scmp.lt.s32.totalorder %s26, 1
        %s1440 = scalar_select %p1439, %s26, 1
        %p1441 = scmp.lt.s32.totalorder %s1438, 15
        %s1442 = scalar_select %p1441, %s1438, 15
        %s1443 = smul.addr %s1442, 2
        %s1444 = smul.addr %s1440, 32
        %s1445 = sadd.s32 %s1443, %s1444
        %s1446 = smul.addr %s1445, 8
        %s1447 = scalar_lea.vmem %s5, %s1446
      $region64: #{inception_block.3} parent=59 // pred_fallthru
        _
      // Predicated region
      $region65: #{inception_block.3} parent=59 // pred_check
        %p1448 = pneg %p196
      $region66: #{inception_block.3} parent=59 // pred_check_branch
        %1450 = sbr.rel (%p1448) target = $region68
      $region67: #{inception_block.3} parent=59 // pred_region
        %s1451 = smul.u32 8, %s27
        %p1452 = scmp.lt.s32.totalorder %s26, 1
        %s1453 = scalar_select %p1452, %s26, 1
        %p1454 = scmp.lt.s32.totalorder %s1451, 15
        %s1455 = scalar_select %p1454, %s1451, 15
        %s1456 = smul.addr %s1455, 2
        %s1457 = smul.addr %s1453, 32
        %s1458 = sadd.s32 %s1456, %s1457
        %s1459 = smul.addr %s1458, 4
        %s1460 = scalar_lea.vmem %s6, %s1459
      $region68: #{inception_block.3} parent=59 // pred_fallthru
        _
      // Predicated region
      $region69: #{inception_block.3} parent=59 // pred_check
        %p1461 = pneg %p224
      $region70: #{inception_block.3} parent=59 // pred_check_branch
        %1463 = sbr.rel (%p1461) target = $region72
      $region71: #{inception_block.3} parent=59 // pred_region
        %s1464 = smul.u32 8, %s27
        %p1465 = scmp.lt.s32.totalorder %s26, 1
        %s1466 = scalar_select %p1465, %s26, 1
        %p1467 = scmp.lt.s32.totalorder %s1464, 15
        %s1468 = scalar_select %p1467, %s1464, 15
        %s1469 = smul.addr %s1468, 2
        %s1470 = smul.addr %s1466, 32
        %s1471 = sadd.s32 %s1469, %s1470
        %s1472 = smul.addr %s1471, 4
        %s1473 = scalar_lea.vmem %s7, %s1472
      $region72: #{inception_block.3} parent=59 // pred_fallthru
        _
      // Predicated region
      $region73: #{inception_block.3} parent=59 // pred_check
        %p1474 = pneg %p252
      $region74: #{inception_block.3} parent=59 // pred_check_branch
        %1476 = sbr.rel (%p1474) target = $region76
      $region75: #{inception_block.3} parent=59 // pred_region
        %s1477 = smul.u32 8, %s27
        %p1478 = scmp.lt.s32.totalorder %s26, 1
        %s1479 = scalar_select %p1478, %s26, 1
        %p1480 = scmp.lt.s32.totalorder %s1477, 15
        %s1481 = scalar_select %p1480, %s1477, 15
        %s1482 = smul.addr %s1481, 2
        %s1483 = smul.addr %s1479, 32
        %s1484 = sadd.s32 %s1482, %s1483
        %s1485 = smul.addr %s1484, 8
        %s1486 = scalar_lea.vmem %s8, %s1485
      $region76: #{inception_block.3} parent=59 // pred_fallthru
        _
    $region60: #{inception_block.3} parent=5 // pred_fallthru
      _
  $region6: #{inception_block.3} parent=0 // loop_footer
    %s19 = sadd.s32 1, %s15
  $region7: #{inception_block.3} parent=0 // loop_footer_branch
    %14 = sbr.rel target = $region3
  $region8: #{inception_block.3} parent=0 // loop_exit
    _

// kernel: inception_block.4
$region0: #{inception_block.4}
  #allocation0 [shape = 'u32[]', space=smem, size = 0x4, offset = 0x4, fixed_abs, tag = 'smem constant byte address 0x4 - core index']
  #allocation1 [shape = 'u32[144,128]{1,0:T(1,128)}', space=vmem, size = 0x12000, scoped, tag = 'internal scratch']
  %s0 = inlined_call_operand.vmem [shape: bf16[2,18,18,4], index: 0, kind: input, shape index: {}]
  %s1 = inlined_call_operand.vmem [shape: bf16[3,12,8], index: 1, kind: input, shape index: {}]
  %s2 = inlined_call_operand.vmem [shape: f32[1,8], index: 2, kind: input, shape index: {}]
  %s3 = inlined_call_operand.vmem [shape: f32[2,16,16,8], index: 3, kind: output, shape index: {}]
  %s4 = sld [smem:[#allocation0]]
  $region45: #{inception_block.4} parent=0
    _
  %s6 = ssub.s32 1, %s4
  %s7 = scalar_select 0, %s6, %s4
  loop: start=0, step=1, limit=6
  $region2: #{inception_block.4} parent=0 // loop_pre_header
    _
  $region3: #{inception_block.4} parent=0 // loop_header
    %s9 = sphi 0, %s13
    %p10 = scmp.ge.s32.totalorder %s9, 6
    %s16 = sphi 0, %s28
    %s17 = sphi 0, %s24
    %s18 = sphi 0, %s16
    %s19 = sphi 0, %s17
    %s20 = sphi 0, %s18
    %s21 = sphi 0, %s19
    %s31 = sphi 0, %s33
    %s34 = sphi 0, %s31
    %s35 = sphi 0, %s34
    %s51 = sphi 0, %s35
    %s55 = sphi 0, %s55
    %s57 = sphi 0, %s55
    %s58 = sphi 0, %s57
    %s72 = sphi 0, %s58
    %s76 = sphi 0, %s76
    %s78 = sphi 0, %s76
    %s79 = sphi 0, %s78
    %s93 = sphi 0, %s79
    %s101 = sphi 0, %s103
    %s104 = sphi 0, %s101
    %s105 = sphi 0, %s104
    %s121 = sphi 0, %s105
  $region4: #{inception_block.4} parent=0 // loop_header_branch
    %12 = sbr.rel (%p10) target = $region8
  $region5: #{inception_block.4} parent=0 // loop_body
    %s14 = ssub.s32 %s9, 1
    %s15 = ssub.s32 %s9, 2
    %s22 = sadd.s32 1, %s17
    %p23 = scmp.ge.s32.totalorder %s22, 2
    %s24 = scalar_select %p23, 0, %s22
    %s25 = sadd.s32 1, %s16
    %s26 = scalar_select %p23, %s25, %s16
    %p27 = scmp.ge.s32.totalorder %s26, 2
    %s28 = scalar_select %p27, 0, %s26
    %s29 = ssub.s32 %s16, %s28
    %p30 = scmp.eq.s32.totalorder %s29, 0
    %s32 = sadd.s32 %s31, 1
    %s33 = scalar_select %p30, %s31, %s32
    %p36 = pneg %p30
    %p37 = scmp.eq.s32.totalorder %s9, 3
    %p38 = por %p36, %p37
    %p39 = scmp.ne.s32.totalorder %s31, %s34
    %p40 = scmp.eq.s32.totalorder %s9, 0
    %p41 = por %p39, %p40
    %p42 = scmp.ne.s32.totalorder %s31, %s34
    %p43 = scmp.eq.s32.totalorder %s14, 3
    %p44 = por %p42, %p43
    %p45 = scmp.ne.s32.totalorder %s34, %s35
    %p46 = scmp.eq.s32.totalorder %s14, 0
    %p47 = por %p45, %p46
    %p48 = scmp.ne.s32.totalorder %s34, %s35
    %p49 = scmp.eq.s32.totalorder %s15, 3
    %p50 = por %p48, %p49
    %p52 = scmp.ne.s32.totalorder %s35, %s51
    %p53 = scmp.eq.s32.totalorder %s15, 0
    %p54 = por %p52, %p53
    %s56 = sadd.s32 %s55, 1
    %p59 = scmp.eq.s32.totalorder %s9, 3
    %p60 = scmp.ne.s32.totalorder %s55, %s57
    %p61 = scmp.eq.s32.totalorder %s9, 0
    %p62 = por %p60, %p61
    %p63 = scmp.ne.s32.totalorder %s55, %s57
    %p64 = scmp.eq.s32.totalorder %s14, 3
    %p65 = por %p63, %p64
    %p66 = scmp.ne.s32.totalorder %s57, %s58
    %p67 = scmp.eq.s32.totalorder %s14, 0
    %p68 = por %p66, %p67
    %p69 = scmp.ne.s32.totalorder %s57, %s58
    %p70 = scmp.eq.s32.totalorder %s15, 3
    %p71 = por %p69, %p70
    %p73 = scmp.ne.s32.totalorder %s58, %s72
    %p74 = scmp.eq.s32.totalorder %s15, 0
    %p75 = por %p73, %p74
    %s77 = sadd.s32 %s76, 1
    %p80 = scmp.eq.s32.totalorder %s9, 3
    %p81 = scmp.ne.s32.totalorder %s76, %s78
    %p82 = scmp.eq.s32.totalorder %s9, 0
    %p83 = por %p81, %p82
    %p84 = scmp.ne.s32.totalorder %s76, %s78
    %p85 = scmp.eq.s32.totalorder %s14, 3
    %p86 = por %p84, %p85
    %p87 = scmp.ne.s32.totalorder %s78, %s79
    %p88 = scmp.eq.s32.totalorder %s14, 0
    %p89 = por %p87, %p88
    %p90 = scmp.ne.s32.totalorder %s78, %s79
    %p91 = scmp.eq.s32.totalorder %s15, 3
    %p92 = por %p90, %p91
    %p94 = scmp.ne.s32.totalorder %s79, %s93
    %p95 = scmp.eq.s32.totalorder %s15, 0
    %p96 = por %p94, %p95
    %s97 = ssub.s32 %s16, %s28
    %s98 = ssub.s32 %s17, %s24
    %s99 = sor.u32 %s97, %s98
    %p100 = scmp.eq.s32.totalorder %s99, 0
    %s102 = sadd.s32 %s101, 1
    %s103 = scalar_select %p100, %s101, %s102
    %p106 = pneg %p100
    %p107 = scmp.eq.s32.totalorder %s9, 3
    %p108 = por %p106, %p107
    %p109 = scmp.ne.s32.totalorder %s101, %s104
    %p110 = scmp.eq.s32.totalorder %s9, 0
    %p111 = por %p109, %p110
    %p112 = scmp.ne.s32.totalorder %s101, %s104
    %p113 = scmp.eq.s32.totalorder %s14, 3
    %p114 = por %p112, %p113
    %p115 = scmp.ne.s32.totalorder %s104, %s105
    %p116 = scmp.eq.s32.totalorder %s14, 0
    %p117 = por %p115, %p116
    %p118 = scmp.ne.s32.totalorder %s104, %s105
    %p119 = scmp.eq.s32.totalorder %s15, 3
    %p120 = por %p118, %p119
    %p122 = scmp.ne.s32.totalorder %s105, %s121
    %p123 = scmp.eq.s32.totalorder %s15, 0
    %p124 = por %p122, %p123
    %p125 = scmp.le.s32.totalorder 1, %s9
    %p126 = scmp.lt.s32.totalorder %s9, 5
    %p127 = pnand %p125, %p126
    %p128 = pneg %p127
    // Predicated region
    $region9: #{inception_block.4} parent=5 // pred_check
      _
    $region10: #{inception_block.4} parent=5 // pred_check_branch
      %130 = sbr.rel (%p127) target = $region12
    $region11: #{inception_block.4} parent=5 // pred_region
      %s131 = ssub.s32 %s9, 1
      // Predicated region
      $region13: #{inception_block.4} parent=11 // pred_check
        %p132 = pneg %p68
      $region14: #{inception_block.4} parent=11 // pred_check_branch
        %134 = sbr.rel (%p132) target = $region16
      $region15: #{inception_block.4} parent=11 // pred_region
        _
      $region16: #{inception_block.4} parent=11 // pred_fallthru
        _
      // Predicated region
      $region17: #{inception_block.4} parent=11 // pred_check
        %p135 = pneg %p89
      $region18: #{inception_block.4} parent=11 // pred_check_branch
        %137 = sbr.rel (%p135) target = $region20
      $region19: #{inception_block.4} parent=11 // pred_region
        _
      $region20: #{inception_block.4} parent=11 // pred_fallthru
        _
    $region12: #{inception_block.4} parent=5 // pred_fallthru
      _
    %p138 = scmp.lt.s32.totalorder %s9, 4
    // Predicated region
    $region21: #{inception_block.4} parent=5 // pred_check
      %p139 = pneg %p138
    $region22: #{inception_block.4} parent=5 // pred_check_branch
      %141 = sbr.rel (%p139) target = $region24
    $region23: #{inception_block.4} parent=5 // pred_region
      // Predicated region
      $region25: #{inception_block.4} parent=23 // pred_check
        %p142 = pneg %p41
      $region26: #{inception_block.4} parent=23 // pred_check_branch
        %144 = sbr.rel (%p142) target = $region28
      $region27: #{inception_block.4} parent=23 // pred_region
        %p145 = scmp.lt.s32.totalorder %s16, 1
        %s146 = scalar_select %p145, %s16, 1
        %s147 = smul.addr %s146, 54
        %s148 = smul.addr %s147, 4
        %s149 = scalar_lea.vmem %s0, %s148
      $region28: #{inception_block.4} parent=23 // pred_fallthru
        _
    $region24: #{inception_block.4} parent=5 // pred_fallthru
      _
    %p150 = scmp.le.s32.totalorder 1, %s9
    %p151 = scmp.lt.s32.totalorder %s9, 5
    %p152 = pnand %p150, %p151
    %p153 = pneg %p152
    // Predicated region
    $region29: #{inception_block.4} parent=5 // pred_check
      _
    $region30: #{inception_block.4} parent=5 // pred_check_branch
      %155 = sbr.rel (%p152) target = $region32
    $region31: #{inception_block.4} parent=5 // pred_region
      %s156 = ssub.s32 %s9, 1
      %p157 = scmp.lt.s32.totalorder %s18, 1
      %s158 = scalar_select %p157, %s18, 1
      %s159 = smul.addr %s158, 54
      %s160 = smul.addr %s159, 4
      %s161 = scalar_lea.vmem %s0, %s160
      %p162 = pneg %p47
      %p163 = pneg %p44
      %p164 = pneg %p68
      %p165 = pneg %p65
      %p166 = pneg %p89
      %p167 = pneg %p86
      %p168 = pneg %p117
      %p169 = pneg %p114
      %s170 = smul.u32 8, %s19
      %p171 = scmp.lt.s32.totalorder %s18, 1
      %s172 = scalar_select %p171, %s18, 1
      %p173 = scmp.lt.s32.totalorder %s170, 15
      %s174 = scalar_select %p173, %s170, 15
      %s175 = smul.addr %s174, 2
      %s176 = smul.addr %s172, 32
      %s177 = sadd.s32 %s175, %s176
      %s178 = smul.addr %s177, 8
      %s179 = scalar_lea.vmem %s3, %s178
      %p180 = scmp.lt.s32.totalorder %s18, 1
      %s181 = scalar_select %p180, %s18, 1
      %s182 = smul.addr %s181, 54
      %s183 = smul.addr %s182, 4
      %s184 = scalar_lea.vmem %s0, %s183
      %s185 = smul.u32 8, %s19
      %p186 = scmp.lt.s32.totalorder %s18, 1
      %s187 = scalar_select %p186, %s18, 1
      %p188 = scmp.lt.s32.totalorder %s185, 15
      %s189 = scalar_select %p188, %s185, 15
      %s190 = smul.addr %s189, 2
      %s191 = smul.addr %s187, 32
      %s192 = sadd.s32 %s190, %s191
      %s193 = smul.addr %s192, 8
      %s194 = scalar_lea.vmem %s3, %s193
      %s195 = smul.u32 8, %s19
      %s197 = smul.u32 %s19, 8
      %s198 = smul.u32 %s197, 3
      %s199 = smul.addr %s198, 4
      %s200 = scalar_lea.vmem %s184, %s199
      %v201 = vld [vmem:[%s200] sm:$0xf]
      %v202 = vld [vmem:[%s200 + $0x4] sm:$0xf]
      %v203 = vld [vmem:[%s200 + $0x8] sm:$0x1]
      %v204 = vld [vmem:[%s200 + $0xc] sm:$0xf]
      %v205 = vld [vmem:[%s200 + $0x10] sm:$0xf]
      %v206 = vld [vmem:[%s200 + $0x14] sm:$0x1]
      %v207 = vld [vmem:[%s200 + $0x18] sm:$0xf]
      %v208 = vld [vmem:[%s200 + $0x1c] sm:$0xf]
      %v209 = vld [vmem:[%s200 + $0x20] sm:$0x1]
      %v210 = vld [vmem:[%s200 + $0x24] sm:$0xf]
      %v211 = vld [vmem:[%s200 + $0x28] sm:$0xf]
      %v212 = vld [vmem:[%s200 + $0x2c] sm:$0x1]
      %v213 = vld [vmem:[%s200 + $0x30] sm:$0xf]
      %v214 = vld [vmem:[%s200 + $0x34] sm:$0xf]
      %v215 = vld [vmem:[%s200 + $0x38] sm:$0x1]
      %v216 = vld [vmem:[%s200 + $0x3c] sm:$0xf]
      %v217 = vld [vmem:[%s200 + $0x40] sm:$0xf]
      %v218 = vld [vmem:[%s200 + $0x44] sm:$0x1]
      %v219 = vld [vmem:[%s200 + $0x48] sm:$0xf]
      %v220 = vld [vmem:[%s200 + $0x4c] sm:$0xf]
      %v221 = vld [vmem:[%s200 + $0x50] sm:$0x1]
      %v222 = vld [vmem:[%s200 + $0x54] sm:$0xf]
      %v223 = vld [vmem:[%s200 + $0x58] sm:$0xf]
      %v224 = vld [vmem:[%s200 + $0x5c] sm:$0x1]
      %v241 = vunpack.c.l.b16 %v201
      %v242 = vunpack.c.l.b16 %v202
      %v243 = vunpack.c.l.b16 %v204
      %v244 = vunpack.c.l.b16 %v205
      %v245 = vunpack.c.l.b16 %v207
      %v246 = vunpack.c.l.b16 %v208
      %v247 = vunpack.c.l.b16 %v210
      %v248 = vunpack.c.l.b16 %v211
      %v249 = vunpack.c.l.b16 %v213
      %v250 = vunpack.c.l.b16 %v214
      %v251 = vunpack.c.l.b16 %v216
      %v252 = vunpack.c.l.b16 %v217
      %v253 = vunpack.c.l.b16 %v219
      %v254 = vunpack.c.l.b16 %v220
      %v255 = vunpack.c.l.b16 %v222
      %v256 = vunpack.c.l.b16 %v223
      %v257 = vpack.c.b16 %v242, %v241
      %v258 = vpack.c.b16 %v244, %v243
      %v259 = vpack.c.b16 %v246, %v245
      %v260 = vpack.c.b16 %v248, %v247
      %v261 = vpack.c.b16 %v250, %v249
      %v262 = vpack.c.b16 %v252, %v251
      %v263 = vpack.c.b16 %v254, %v253
      %v264 = vpack.c.b16 %v256, %v255
      %v273 = vunpack.c.l.b16 %v203
      %v274 = vunpack.c.l.b16 %v206
      %v275 = vunpack.c.l.b16 %v209
      %v276 = vunpack.c.l.b16 %v212
      %v277 = vunpack.c.l.b16 %v215
      %v278 = vunpack.c.l.b16 %v218
      %v279 = vunpack.c.l.b16 %v221
      %v280 = vunpack.c.l.b16 %v224
      %v281 = vpack.c.b16 %v273, %v273
      %v282 = vpack.c.b16 %v274, %v274
      %v283 = vpack.c.b16 %v275, %v275
      %v284 = vpack.c.b16 %v276, %v276
      %v285 = vpack.c.b16 %v277, %v277
      %v286 = vpack.c.b16 %v278, %v278
      %v287 = vpack.c.b16 %v279, %v279
      %v288 = vpack.c.b16 %v280, %v280
      %vm289 = vsmask.f32 7424
      %v291 = vshrl.u32 %v257, 16
      %v293 = vshll.u32 %v257, 16
      %v295 = vrot.slane %v293, 1
      %v296 = vor.u32 %v291, %v295
      %v298 = vshll.u32 %v281, 16
      %v300 = vrot.slane %v298, 1
      %v301 = vsel %vm289, %v296, %v300
      %v303 = vshrl.u32 %v258, 16
      %v305 = vshll.u32 %v258, 16
      %v307 = vrot.slane %v305, 1
      %v308 = vor.u32 %v303, %v307
      %v310 = vshll.u32 %v282, 16
      %v312 = vrot.slane %v310, 1
      %v313 = vsel %vm289, %v308, %v312
      %v315 = vshrl.u32 %v259, 16
      %v317 = vshll.u32 %v259, 16
      %v319 = vrot.slane %v317, 1
      %v320 = vor.u32 %v315, %v319
      %v322 = vshll.u32 %v283, 16
      %v324 = vrot.slane %v322, 1
      %v325 = vsel %vm289, %v320, %v324
      %v327 = vshrl.u32 %v260, 16
      %v329 = vshll.u32 %v260, 16
      %v331 = vrot.slane %v329, 1
      %v332 = vor.u32 %v327, %v331
      %v334 = vshll.u32 %v284, 16
      %v336 = vrot.slane %v334, 1
      %v337 = vsel %vm289, %v332, %v336
      %v339 = vshrl.u32 %v261, 16
      %v341 = vshll.u32 %v261, 16
      %v343 = vrot.slane %v341, 1
      %v344 = vor.u32 %v339, %v343
      %v346 = vshll.u32 %v285, 16
      %v348 = vrot.slane %v346, 1
      %v349 = vsel %vm289, %v344, %v348
      %v351 = vshrl.u32 %v262, 16
      %v353 = vshll.u32 %v262, 16
      %v355 = vrot.slane %v353, 1
      %v356 = vor.u32 %v351, %v355
      %v358 = vshll.u32 %v286, 16
      %v360 = vrot.slane %v358, 1
      %v361 = vsel %vm289, %v356, %v360
      %v363 = vshrl.u32 %v263, 16
      %v365 = vshll.u32 %v263, 16
      %v367 = vrot.slane %v365, 1
      %v368 = vor.u32 %v363, %v367
      %v370 = vshll.u32 %v287, 16
      %v372 = vrot.slane %v370, 1
      %v373 = vsel %vm289, %v368, %v372
      %v375 = vshrl.u32 %v264, 16
      %v377 = vshll.u32 %v264, 16
      %v379 = vrot.slane %v377, 1
      %v380 = vor.u32 %v375, %v379
      %v382 = vshll.u32 %v288, 16
      %v384 = vrot.slane %v382, 1
      %v385 = vsel %vm289, %v380, %v384
      %386 = vrot.lane.b32.xlu0 %v301, 4
      %v387 = vpop.permute.xlu0 %386
      %388 = vrot.lane.b32.xlu0 %v313, 4
      %v389 = vpop.permute.xlu0 %388
      %390 = vrot.lane.b32.xlu0 %v325, 4
      %v391 = vpop.permute.xlu0 %390
      %392 = vrot.lane.b32.xlu0 %v337, 4
      %v393 = vpop.permute.xlu0 %392
      %394 = vrot.lane.b32.xlu0 %v349, 4
      %v395 = vpop.permute.xlu0 %394
      %396 = vrot.lane.b32.xlu0 %v361, 4
      %v397 = vpop.permute.xlu0 %396
      %398 = vrot.lane.b32.xlu0 %v373, 4
      %v399 = vpop.permute.xlu0 %398
      %400 = vrot.lane.b32.xlu0 %v385, 4
      %v401 = vpop.permute.xlu0 %400
      %vm402 = vcmask 1046528
      %v403 = vrot.slane %v257, 1
      %v404 = vrot.slane %v281, 1
      %v405 = vsel %vm402, %v403, %v404
      %v406 = vrot.slane %v258, 1
      %v407 = vrot.slane %v282, 1
      %v408 = vsel %vm402, %v406, %v407
      %v409 = vrot.slane %v259, 1
      %v410 = vrot.slane %v283, 1
      %v411 = vsel %vm402, %v409, %v410
      %v412 = vrot.slane %v260, 1
      %v413 = vrot.slane %v284, 1
      %v414 = vsel %vm402, %v412, %v413
      %v415 = vrot.slane %v261, 1
      %v416 = vrot.slane %v285, 1
      %v417 = vsel %vm402, %v415, %v416
      %v418 = vrot.slane %v262, 1
      %v419 = vrot.slane %v286, 1
      %v420 = vsel %vm402, %v418, %v419
      %v421 = vrot.slane %v263, 1
      %v422 = vrot.slane %v287, 1
      %v423 = vsel %vm402, %v421, %v422
      %v424 = vrot.slane %v264, 1
      %v425 = vrot.slane %v288, 1
      %v426 = vsel %vm402, %v424, %v425
      %427 = vrot.lane.b32.xlu0 %v405, 8
      %v428 = vpop.permute.xlu0 %427
      %429 = vrot.lane.b32.xlu0 %v408, 8
      %v430 = vpop.permute.xlu0 %429
      %431 = vrot.lane.b32.xlu0 %v411, 8
      %v432 = vpop.permute.xlu0 %431
      %433 = vrot.lane.b32.xlu0 %v414, 8
      %v434 = vpop.permute.xlu0 %433
      %435 = vrot.lane.b32.xlu0 %v417, 8
      %v436 = vpop.permute.xlu0 %435
      %437 = vrot.lane.b32.xlu0 %v420, 8
      %v438 = vpop.permute.xlu0 %437
      %439 = vrot.lane.b32.xlu0 %v423, 8
      %v440 = vpop.permute.xlu0 %439
      %441 = vrot.lane.b32.xlu0 %v426, 8
      %v442 = vpop.permute.xlu0 %441
      %vm443 = vcmask 31744
      %v445 = vsel %vm443, %v257, %v387
      %v447 = vsel %vm443, %v258, %v389
      %v449 = vsel %vm443, %v259, %v391
      %v451 = vsel %vm443, %v260, %v393
      %v453 = vsel %vm443, %v261, %v395
      %v455 = vsel %vm443, %v262, %v397
      %v457 = vsel %vm443, %v263, %v399
      %v459 = vsel %vm443, %v264, %v401
      %vm460 = vcmask 64512
      %v462 = vsel %vm460, %v445, %v428
      %v464 = vsel %vm460, %v447, %v430
      %v466 = vsel %vm460, %v449, %v432
      %v468 = vsel %vm460, %v451, %v434
      %v470 = vsel %vm460, %v453, %v436
      %v472 = vsel %vm460, %v455, %v438
      %v474 = vsel %vm460, %v457, %v440
      %v476 = vsel %vm460, %v459, %v442
      %v477 = vld [vmem:[%s1] sm:$0xf]
      %v478 = vld [vmem:[%s1 + $0x4] sm:$0x3]
      %s479 = sadd.s32 %s197, 1
      %s480 = smul.u32 %s479, 3
      %s481 = smul.addr %s480, 4
      %s482 = scalar_lea.vmem %s184, %s481
      %v483 = vld [vmem:[%s482] sm:$0xf]
      %v484 = vld [vmem:[%s482 + $0x4] sm:$0xf]
      %v485 = vld [vmem:[%s482 + $0x8] sm:$0x1]
      %v486 = vld [vmem:[%s482 + $0xc] sm:$0xf]
      %v487 = vld [vmem:[%s482 + $0x10] sm:$0xf]
      %v488 = vld [vmem:[%s482 + $0x14] sm:$0x1]
      %v489 = vld [vmem:[%s482 + $0x18] sm:$0xf]
      %v490 = vld [vmem:[%s482 + $0x1c] sm:$0xf]
      %v491 = vld [vmem:[%s482 + $0x20] sm:$0x1]
      %v492 = vld [vmem:[%s482 + $0x24] sm:$0xf]
      %v493 = vld [vmem:[%s482 + $0x28] sm:$0xf]
      %v494 = vld [vmem:[%s482 + $0x2c] sm:$0x1]
      %v495 = vld [vmem:[%s482 + $0x30] sm:$0xf]
      %v496 = vld [vmem:[%s482 + $0x34] sm:$0xf]
      %v497 = vld [vmem:[%s482 + $0x38] sm:$0x1]
      %v498 = vld [vmem:[%s482 + $0x3c] sm:$0xf]
      %v499 = vld [vmem:[%s482 + $0x40] sm:$0xf]
      %v500 = vld [vmem:[%s482 + $0x44] sm:$0x1]
      %v501 = vld [vmem:[%s482 + $0x48] sm:$0xf]
      %v502 = vld [vmem:[%s482 + $0x4c] sm:$0xf]
      %v503 = vld [vmem:[%s482 + $0x50] sm:$0x1]
      %v504 = vld [vmem:[%s482 + $0x54] sm:$0xf]
      %v505 = vld [vmem:[%s482 + $0x58] sm:$0xf]
      %v506 = vld [vmem:[%s482 + $0x5c] sm:$0x1]
      %v523 = vunpack.c.l.b16 %v483
      %v524 = vunpack.c.l.b16 %v484
      %v525 = vunpack.c.l.b16 %v486
      %v526 = vunpack.c.l.b16 %v487
      %v527 = vunpack.c.l.b16 %v489
      %v528 = vunpack.c.l.b16 %v490
      %v529 = vunpack.c.l.b16 %v492
      %v530 = vunpack.c.l.b16 %v493
      %v531 = vunpack.c.l.b16 %v495
      %v532 = vunpack.c.l.b16 %v496
      %v533 = vunpack.c.l.b16 %v498
      %v534 = vunpack.c.l.b16 %v499
      %v535 = vunpack.c.l.b16 %v501
      %v536 = vunpack.c.l.b16 %v502
      %v537 = vunpack.c.l.b16 %v504
      %v538 = vunpack.c.l.b16 %v505
      %v539 = vpack.c.b16 %v524, %v523
      %v540 = vpack.c.b16 %v526, %v525
      %v541 = vpack.c.b16 %v528, %v527
      %v542 = vpack.c.b16 %v530, %v529
      %v543 = vpack.c.b16 %v532, %v531
      %v544 = vpack.c.b16 %v534, %v533
      %v545 = vpack.c.b16 %v536, %v535
      %v546 = vpack.c.b16 %v538, %v537
      %v555 = vunpack.c.l.b16 %v485
      %v556 = vunpack.c.l.b16 %v488
      %v557 = vunpack.c.l.b16 %v491
      %v558 = vunpack.c.l.b16 %v494
      %v559 = vunpack.c.l.b16 %v497
      %v560 = vunpack.c.l.b16 %v500
      %v561 = vunpack.c.l.b16 %v503
      %v562 = vunpack.c.l.b16 %v506
      %v563 = vpack.c.b16 %v555, %v555
      %v564 = vpack.c.b16 %v556, %v556
      %v565 = vpack.c.b16 %v557, %v557
      %v566 = vpack.c.b16 %v558, %v558
      %v567 = vpack.c.b16 %v559, %v559
      %v568 = vpack.c.b16 %v560, %v560
      %v569 = vpack.c.b16 %v561, %v561
      %v570 = vpack.c.b16 %v562, %v562
      %v572 = vshrl.u32 %v539, 16
      %v574 = vshll.u32 %v539, 16
      %v576 = vrot.slane %v574, 1
      %v577 = vor.u32 %v572, %v576
      %v579 = vshll.u32 %v563, 16
      %v581 = vrot.slane %v579, 1
      %v582 = vsel %vm289, %v577, %v581
      %v584 = vshrl.u32 %v540, 16
      %v586 = vshll.u32 %v540, 16
      %v588 = vrot.slane %v586, 1
      %v589 = vor.u32 %v584, %v588
      %v591 = vshll.u32 %v564, 16
      %v593 = vrot.slane %v591, 1
      %v594 = vsel %vm289, %v589, %v593
      %v596 = vshrl.u32 %v541, 16
      %v598 = vshll.u32 %v541, 16
      %v600 = vrot.slane %v598, 1
      %v601 = vor.u32 %v596, %v600
      %v603 = vshll.u32 %v565, 16
      %v605 = vrot.slane %v603, 1
      %v606 = vsel %vm289, %v601, %v605
      %v608 = vshrl.u32 %v542, 16
      %v610 = vshll.u32 %v542, 16
      %v612 = vrot.slane %v610, 1
      %v613 = vor.u32 %v608, %v612
      %v615 = vshll.u32 %v566, 16
      %v617 = vrot.slane %v615, 1
      %v618 = vsel %vm289, %v613, %v617
      %v620 = vshrl.u32 %v543, 16
      %v622 = vshll.u32 %v543, 16
      %v624 = vrot.slane %v622, 1
      %v625 = vor.u32 %v620, %v624
      %v627 = vshll.u32 %v567, 16
      %v629 = vrot.slane %v627, 1
      %v630 = vsel %vm289, %v625, %v629
      %v632 = vshrl.u32 %v544, 16
      %v634 = vshll.u32 %v544, 16
      %v636 = vrot.slane %v634, 1
      %v637 = vor.u32 %v632, %v636
      %v639 = vshll.u32 %v568, 16
      %v641 = vrot.slane %v639, 1
      %v642 = vsel %vm289, %v637, %v641
      %v644 = vshrl.u32 %v545, 16
      %v646 = vshll.u32 %v545, 16
      %v648 = vrot.slane %v646, 1
      %v649 = vor.u32 %v644, %v648
      %v651 = vshll.u32 %v569, 16
      %v653 = vrot.slane %v651, 1
      %v654 = vsel %vm289, %v649, %v653
      %v656 = vshrl.u32 %v546, 16
      %v658 = vshll.u32 %v546, 16
      %v660 = vrot.slane %v658, 1
      %v661 = vor.u32 %v656, %v660
      %v663 = vshll.u32 %v570, 16
      %v665 = vrot.slane %v663, 1
      %v666 = vsel %vm289, %v661, %v665
      %667 = vrot.lane.b32.xlu0 %v582, 4
      %v668 = vpop.permute.xlu0 %667
      %669 = vrot.lane.b32.xlu0 %v594, 4
      %v670 = vpop.permute.xlu0 %669
      %671 = vrot.lane.b32.xlu0 %v606, 4
      %v672 = vpop.permute.xlu0 %671
      %673 = vrot.lane.b32.xlu0 %v618, 4
      %v674 = vpop.permute.xlu0 %673
      %675 = vrot.lane.b32.xlu0 %v630, 4
      %v676 = vpop.permute.xlu0 %675
      %677 = vrot.lane.b32.xlu0 %v642, 4
      %v678 = vpop.permute.xlu0 %677
      %679 = vrot.lane.b32.xlu0 %v654, 4
      %v680 = vpop.permute.xlu0 %679
      %681 = vrot.lane.b32.xlu0 %v666, 4
      %v682 = vpop.permute.xlu0 %681
      %v683 = vrot.slane %v539, 1
      %v684 = vrot.slane %v563, 1
      %v685 = vsel %vm402, %v683, %v684
      %v686 = vrot.slane %v540, 1
      %v687 = vrot.slane %v564, 1
      %v688 = vsel %vm402, %v686, %v687
      %v689 = vrot.slane %v541, 1
      %v690 = vrot.slane %v565, 1
      %v691 = vsel %vm402, %v689, %v690
      %v692 = vrot.slane %v542, 1
      %v693 = vrot.slane %v566, 1
      %v694 = vsel %vm402, %v692, %v693
      %v695 = vrot.slane %v543, 1
      %v696 = vrot.slane %v567, 1
      %v697 = vsel %vm402, %v695, %v696
      %v698 = vrot.slane %v544, 1
      %v699 = vrot.slane %v568, 1
      %v700 = vsel %vm402, %v698, %v699
      %v701 = vrot.slane %v545, 1
      %v702 = vrot.slane %v569, 1
      %v703 = vsel %vm402, %v701, %v702
      %v704 = vrot.slane %v546, 1
      %v705 = vrot.slane %v570, 1
      %v706 = vsel %vm402, %v704, %v705
      %707 = vrot.lane.b32.xlu0 %v685, 8
      %v708 = vpop.permute.xlu0 %707
      %709 = vrot.lane.b32.xlu0 %v688, 8
      %v710 = vpop.permute.xlu0 %709
      %711 = vrot.lane.b32.xlu0 %v691, 8
      %v712 = vpop.permute.xlu0 %711
      %713 = vrot.lane.b32.xlu0 %v694, 8
      %v714 = vpop.permute.xlu0 %713
      %715 = vrot.lane.b32.xlu0 %v697, 8
      %v716 = vpop.permute.xlu0 %715
      %717 = vrot.lane.b32.xlu0 %v700, 8
      %v718 = vpop.permute.xlu0 %717
      %719 = vrot.lane.b32.xlu0 %v703, 8
      %v720 = vpop.permute.xlu0 %719
      %721 = vrot.lane.b32.xlu0 %v706, 8
      %v722 = vpop.permute.xlu0 %721
      %v724 = vsel %vm443, %v539, %v668
      %v726 = vsel %vm443, %v540, %v670
      %v728 = vsel %vm443, %v541, %v672
      %v730 = vsel %vm443, %v542, %v674
      %v732 = vsel %vm443, %v543, %v676
      %v734 = vsel %vm443, %v544, %v678
      %v736 = vsel %vm443, %v545, %v680
      %v738 = vsel %vm443, %v546, %v682
      %v740 = vsel %vm460, %v724, %v708
      %v742 = vsel %vm460, %v726, %v710
      %v744 = vsel %vm460, %v728, %v712
      %v746 = vsel %vm460, %v730, %v714
      %v748 = vsel %vm460, %v732, %v716
      %v750 = vsel %vm460, %v734, %v718
      %v752 = vsel %vm460, %v736, %v720
      %v754 = vsel %vm460, %v738, %v722
      %s755 = scalar_lea.vmem %s1, 8
      %v756 = vld [vmem:[%s755] sm:$0xf]
      %v757 = vld [vmem:[%s755 + $0x4] sm:$0x3]
      %v760 = vunpack.c.l.b16 %v756
      %v761 = vunpack.c.l.b16 %v757
      %v762 = vpack.c.b16 %v761, %v760
      %vm763 = vcmask 97280
      %v764 = vsel %vm763, %v740, 0
      %v766 = vsel %vm763, %v742, 0
      %v768 = vsel %vm763, %v744, 0
      %v770 = vsel %vm763, %v746, 0
      %v772 = vsel %vm763, %v748, 0
      %v774 = vsel %vm763, %v750, 0
      %v776 = vsel %vm763, %v752, 0
      %v778 = vsel %vm763, %v754, 0
      %vm780 = vcmask 1045504
      %v782 = vsel %vm780, %v762, 0
      %784 = vmatprep.subr.bf16.mxu0 0
      %785 = vmatpush1.bf16.msra.mxu0 %v782
      %786 = vmatprep.subr.bf16.mxu0 0
      %787 = vmatpush1.bf16.msra.mxu0 0
      %788 = vmatprep.subr.bf16.mxu0 0
      %789 = vmatpush1.bf16.msra.mxu0 0
      %790 = vmatprep.subr.bf16.mxu0 0
      %791 = vmatpush1.bf16.msra.mxu0 0
      %792 = vmatprep.subr.bf16.mxu0 0
      %793 = vmatpush1.bf16.msra.mxu0 0
      %794 = vmatprep.subr.bf16.mxu0 0
      %795 = vmatpush1.bf16.msra.mxu0 0
      %796 = vmatprep.subr.bf16.mxu0 0
      %797 = vmatpush1.bf16.msra.mxu0 0
      %798 = vmatprep.subr.bf16.mxu0 0
      %799 = vmatpush1.bf16.msra.mxu0 0
      %800 = vmatprep.subr.bf16.mxu0 0
      %801 = vmatpush1.bf16.msra.mxu0 0
      %802 = vmatprep.subr.bf16.mxu0 0
      %803 = vmatpush1.bf16.msra.mxu0 0
      %804 = vmatprep.subr.bf16.mxu0 0
      %805 = vmatpush1.bf16.msra.mxu0 0
      %806 = vmatprep.subr.bf16.mxu0 0
      %807 = vmatpush1.bf16.msra.mxu0 0
      %808 = vmatprep.subr.bf16.mxu0 0
      %809 = vmatpush1.bf16.msra.mxu0 0
      %810 = vmatprep.subr.bf16.mxu0 0
      %811 = vmatpush1.bf16.msra.mxu0 0
      %812 = vmatprep.subr.bf16.mxu0 0
      %813 = vmatpush1.bf16.msra.mxu0 0
      %814 = vmatprep.subr.bf16.mxu0 0
      %815 = vmatpush1.bf16.msra.mxu0 0
      %816 = vmatprep.mubr.bf16.mxu0 0
      %817 = vmatmul.mubr.bf16.gmra.mrb[0].mxu0 %v764
      %v818 = vpop.f32.mrb[0].mxu0
      %v819 = vadd.f32 0.0, %v818
      %v820 = vpop.f32.mrb[0].mxu0
      %v821 = vpop.f32.mrb[0].mxu0
      %v822 = vadd.f32 0.0, %v821
      %v823 = vpop.f32.mrb[0].mxu0
      %824 = vmatprep.mubr.bf16.mxu0 0
      %825 = vmatmul.mubr.bf16.gmra.mrb[0].mxu0 %v766
      %v826 = vpop.f32.mrb[0].mxu0
      %v827 = vadd.f32 0.0, %v826
      %v828 = vpop.f32.mrb[0].mxu0
      %v829 = vpop.f32.mrb[0].mxu0
      %v830 = vadd.f32 0.0, %v829
      %v831 = vpop.f32.mrb[0].mxu0
      %832 = vmatprep.mubr.bf16.mxu0 0
      %833 = vmatmul.mubr.bf16.gmra.mrb[0].mxu0 %v768
      %v834 = vpop.f32.mrb[0].mxu0
      %v835 = vadd.f32 0.0, %v834
      %v836 = vpop.f32.mrb[0].mxu0
      %v837 = vpop.f32.mrb[0].mxu0
      %v838 = vadd.f32 0.0, %v837
      %v839 = vpop.f32.mrb[0].mxu0
      %840 = vmatprep.mubr.bf16.mxu0 0
      %841 = vmatmul.mubr.bf16.gmra.mrb[0].mxu0 %v770
      %v842 = vpop.f32.mrb[0].mxu0
      %v843 = vadd.f32 0.0, %v842
      %v844 = vpop.f32.mrb[0].mxu0
      %v845 = vpop.f32.mrb[0].mxu0
      %v846 = vadd.f32 0.0, %v845
      %v847 = vpop.f32.mrb[0].mxu0
      %848 = vmatprep.mubr.bf16.mxu0 0
      %849 = vmatmul.mubr.bf16.gmra.mrb[0].mxu0 %v772
      %v850 = vpop.f32.mrb[0].mxu0
      %v851 = vadd.f32 0.0, %v850
      %v852 = vpop.f32.mrb[0].mxu0
      %v853 = vpop.f32.mrb[0].mxu0
      %v854 = vadd.f32 0.0, %v853
      %v855 = vpop.f32.mrb[0].mxu0
      %856 = vmatprep.mubr.bf16.mxu0 0
      %857 = vmatmul.mubr.bf16.gmra.mrb[0].mxu0 %v774
      %v858 = vpop.f32.mrb[0].mxu0
      %v859 = vadd.f32 0.0, %v858
      %v860 = vpop.f32.mrb[0].mxu0
      %v861 = vpop.f32.mrb[0].mxu0
      %v862 = vadd.f32 0.0, %v861
      %v863 = vpop.f32.mrb[0].mxu0
      %864 = vmatprep.mubr.bf16.mxu0 0
      %865 = vmatmul.mubr.bf16.gmra.mrb[0].mxu0 %v776
      %v866 = vpop.f32.mrb[0].mxu0
      %v867 = vadd.f32 0.0, %v866
      %v868 = vpop.f32.mrb[0].mxu0
      %v869 = vpop.f32.mrb[0].mxu0
      %v870 = vadd.f32 0.0, %v869
      %v871 = vpop.f32.mrb[0].mxu0
      %872 = vmatprep.mubr.bf16.mxu0 0
      %873 = vmatmul.mubr.bf16.gmra.mrb[0].mxu0 %v778
      %v874 = vpop.f32.mrb[0].mxu0
      %v875 = vadd.f32 0.0, %v874
      %v876 = vpop.f32.mrb[0].mxu0
      %v877 = vpop.f32.mrb[0].mxu0
      %v878 = vadd.f32 0.0, %v877
      %v879 = vpop.f32.mrb[0].mxu0
      %880 = vdwg.mxu0
      %v883 = vunpack.c.l.b16 %v477
      %v884 = vunpack.c.l.b16 %v478
      %v885 = vpack.c.b16 %v884, %v883
      %v886 = vsel %vm763, %v462, 0
      %v888 = vsel %vm763, %v464, 0
      %v890 = vsel %vm763, %v466, 0
      %v892 = vsel %vm763, %v468, 0
      %v894 = vsel %vm763, %v470, 0
      %v896 = vsel %vm763, %v472, 0
      %v898 = vsel %vm763, %v474, 0
      %v900 = vsel %vm763, %v476, 0
      %v903 = vsel %vm780, %v885, 0
      %905 = vmatprep.subr.bf16.mxu0 0
      %906 = vmatpush1.bf16.msra.mxu0 %v903
      %907 = vmatprep.subr.bf16.mxu0 0
      %908 = vmatpush1.bf16.msra.mxu0 0
      %909 = vmatprep.subr.bf16.mxu0 0
      %910 = vmatpush1.bf16.msra.mxu0 0
      %911 = vmatprep.subr.bf16.mxu0 0
      %912 = vmatpush1.bf16.msra.mxu0 0
      %913 = vmatprep.subr.bf16.mxu0 0
      %914 = vmatpush1.bf16.msra.mxu0 0
      %915 = vmatprep.subr.bf16.mxu0 0
      %916 = vmatpush1.bf16.msra.mxu0 0
      %917 = vmatprep.subr.bf16.mxu0 0
      %918 = vmatpush1.bf16.msra.mxu0 0
      %919 = vmatprep.subr.bf16.mxu0 0
      %920 = vmatpush1.bf16.msra.mxu0 0
      %921 = vmatprep.subr.bf16.mxu0 0
      %922 = vmatpush1.bf16.msra.mxu0 0
      %923 = vmatprep.subr.bf16.mxu0 0
      %924 = vmatpush1.bf16.msra.mxu0 0
      %925 = vmatprep.subr.bf16.mxu0 0
      %926 = vmatpush1.bf16.msra.mxu0 0
      %927 = vmatprep.subr.bf16.mxu0 0
      %928 = vmatpush1.bf16.msra.mxu0 0
      %929 = vmatprep.subr.bf16.mxu0 0
      %930 = vmatpush1.bf16.msra.mxu0 0
      %931 = vmatprep.subr.bf16.mxu0 0
      %932 = vmatpush1.bf16.msra.mxu0 0
      %933 = vmatprep.subr.bf16.mxu0 0
      %934 = vmatpush1.bf16.msra.mxu0 0
      %935 = vmatprep.subr.bf16.mxu0 0
      %936 = vmatpush1.bf16.msra.mxu0 0
      %937 = vmatprep.mubr.bf16.mxu0 0
      %938 = vmatmul.mubr.bf16.gmra.mrb[0].mxu0 %v886
      %v939 = vpop.f32.mrb[0].mxu0
      %v940 = vadd.f32 %v819, %v939
      %v941 = vpop.f32.mrb[0].mxu0
      %v942 = vpop.f32.mrb[0].mxu0
      %v943 = vadd.f32 %v822, %v942
      %v944 = vpop.f32.mrb[0].mxu0
      %945 = vmatprep.mubr.bf16.mxu0 0
      %946 = vmatmul.mubr.bf16.gmra.mrb[0].mxu0 %v888
      %v947 = vpop.f32.mrb[0].mxu0
      %v948 = vadd.f32 %v827, %v947
      %v949 = vpop.f32.mrb[0].mxu0
      %v950 = vpop.f32.mrb[0].mxu0
      %v951 = vadd.f32 %v830, %v950
      %v952 = vpop.f32.mrb[0].mxu0
      %953 = vmatprep.mubr.bf16.mxu0 0
      %954 = vmatmul.mubr.bf16.gmra.mrb[0].mxu0 %v890
      %v955 = vpop.f32.mrb[0].mxu0
      %v956 = vadd.f32 %v835, %v955
      %v957 = vpop.f32.mrb[0].mxu0
      %v958 = vpop.f32.mrb[0].mxu0
      %v959 = vadd.f32 %v838, %v958
      %v960 = vpop.f32.mrb[0].mxu0
      %961 = vmatprep.mubr.bf16.mxu0 0
      %962 = vmatmul.mubr.bf16.gmra.mrb[0].mxu0 %v892
      %v963 = vpop.f32.mrb[0].mxu0
      %v964 = vadd.f32 %v843, %v963
      %v965 = vpop.f32.mrb[0].mxu0
      %v966 = vpop.f32.mrb[0].mxu0
      %v967 = vadd.f32 %v846, %v966
      %v968 = vpop.f32.mrb[0].mxu0
      %969 = vmatprep.mubr.bf16.mxu0 0
      %970 = vmatmul.mubr.bf16.gmra.mrb[0].mxu0 %v894
      %v971 = vpop.f32.mrb[0].mxu0
      %v972 = vadd.f32 %v851, %v971
      %v973 = vpop.f32.mrb[0].mxu0
      %v974 = vpop.f32.mrb[0].mxu0
      %v975 = vadd.f32 %v854, %v974
      %v976 = vpop.f32.mrb[0].mxu0
      %977 = vmatprep.mubr.bf16.mxu0 0
      %978 = vmatmul.mubr.bf16.gmra.mrb[0].mxu0 %v896
      %v979 = vpop.f32.mrb[0].mxu0
      %v980 = vadd.f32 %v859, %v979
      %v981 = vpop.f32.mrb[0].mxu0
      %v982 = vpop.f32.mrb[0].mxu0
      %v983 = vadd.f32 %v862, %v982
      %v984 = vpop.f32.mrb[0].mxu0
      %985 = vmatprep.mubr.bf16.mxu0 0
      %986 = vmatmul.mubr.bf16.gmra.mrb[0].mxu0 %v898
      %v987 = vpop.f32.mrb[0].mxu0
      %v988 = vadd.f32 %v867, %v987
      %v989 = vpop.f32.mrb[0].mxu0
      %v990 = vpop.f32.mrb[0].mxu0
      %v991 = vadd.f32 %v870, %v990
      %v992 = vpop.f32.mrb[0].mxu0
      %993 = vmatprep.mubr.bf16.mxu0 0
      %994 = vmatmul.mubr.bf16.gmra.mrb[0].mxu0 %v900
      %v995 = vpop.f32.mrb[0].mxu0
      %v996 = vadd.f32 %v875, %v995
      %v997 = vpop.f32.mrb[0].mxu0
      %v998 = vpop.f32.mrb[0].mxu0
      %v999 = vadd.f32 %v878, %v998
      %v1000 = vpop.f32.mrb[0].mxu0
      %1001 = vdwg.mxu0
      %s1002 = sadd.s32 %s197, 2
      %s1003 = smul.u32 %s1002, 3
      %s1004 = smul.addr %s1003, 4
      %s1005 = scalar_lea.vmem %s184, %s1004
      %v1006 = vld [vmem:[%s1005] sm:$0xf]
      %v1007 = vld [vmem:[%s1005 + $0x4] sm:$0xf]
      %v1008 = vld [vmem:[%s1005 + $0x8] sm:$0x1]
      %v1009 = vld [vmem:[%s1005 + $0xc] sm:$0xf]
      %v1010 = vld [vmem:[%s1005 + $0x10] sm:$0xf]
      %v1011 = vld [vmem:[%s1005 + $0x14] sm:$0x1]
      %v1012 = vld [vmem:[%s1005 + $0x18] sm:$0xf]
      %v1013 = vld [vmem:[%s1005 + $0x1c] sm:$0xf]
      %v1014 = vld [vmem:[%s1005 + $0x20] sm:$0x1]
      %v1015 = vld [vmem:[%s1005 + $0x24] sm:$0xf]
      %v1016 = vld [vmem:[%s1005 + $0x28] sm:$0xf]
      %v1017 = vld [vmem:[%s1005 + $0x2c] sm:$0x1]
      %v1018 = vld [vmem:[%s1005 + $0x30] sm:$0xf]
      %v1019 = vld [vmem:[%s1005 + $0x34] sm:$0xf]
      %v1020 = vld [vmem:[%s1005 + $0x38] sm:$0x1]
      %v1021 = vld [vmem:[%s1005 + $0x3c] sm:$0xf]
      %v1022 = vld [vmem:[%s1005 + $0x40] sm:$0xf]
      %v1023 = vld [vmem:[%s1005 + $0x44] sm:$0x1]
      %v1024 = vld [vmem:[%s1005 + $0x48] sm:$0xf]
      %v1025 = vld [vmem:[%s1005 + $0x4c] sm:$0xf]
      %v1026 = vld [vmem:[%s1005 + $0x50] sm:$0x1]
      %v1027 = vld [vmem:[%s1005 + $0x54] sm:$0xf]
      %v1028 = vld [vmem:[%s1005 + $0x58] sm:$0xf]
      %v1029 = vld [vmem:[%s1005 + $0x5c] sm:$0x1]
      %v1046 = vunpack.c.l.b16 %v1006
      %v1047 = vunpack.c.l.b16 %v1007
      %v1048 = vunpack.c.l.b16 %v1009
      %v1049 = vunpack.c.l.b16 %v1010
      %v1050 = vunpack.c.l.b16 %v1012
      %v1051 = vunpack.c.l.b16 %v1013
      %v1052 = vunpack.c.l.b16 %v1015
      %v1053 = vunpack.c.l.b16 %v1016
      %v1054 = vunpack.c.l.b16 %v1018
      %v1055 = vunpack.c.l.b16 %v1019
      %v1056 = vunpack.c.l.b16 %v1021
      %v1057 = vunpack.c.l.b16 %v1022
      %v1058 = vunpack.c.l.b16 %v1024
      %v1059 = vunpack.c.l.b16 %v1025
      %v1060 = vunpack.c.l.b16 %v1027
      %v1061 = vunpack.c.l.b16 %v1028
      %v1062 = vpack.c.b16 %v1047, %v1046
      %v1063 = vpack.c.b16 %v1049, %v1048
      %v1064 = vpack.c.b16 %v1051, %v1050
      %v1065 = vpack.c.b16 %v1053, %v1052
      %v1066 = vpack.c.b16 %v1055, %v1054
      %v1067 = vpack.c.b16 %v1057, %v1056
      %v1068 = vpack.c.b16 %v1059, %v1058
      %v1069 = vpack.c.b16 %v1061, %v1060
      %v1078 = vunpack.c.l.b16 %v1008
      %v1079 = vunpack.c.l.b16 %v1011
      %v1080 = vunpack.c.l.b16 %v1014
      %v1081 = vunpack.c.l.b16 %v1017
      %v1082 = vunpack.c.l.b16 %v1020
      %v1083 = vunpack.c.l.b16 %v1023
      %v1084 = vunpack.c.l.b16 %v1026
      %v1085 = vunpack.c.l.b16 %v1029
      %v1086 = vpack.c.b16 %v1078, %v1078
      %v1087 = vpack.c.b16 %v1079, %v1079
      %v1088 = vpack.c.b16 %v1080, %v1080
      %v1089 = vpack.c.b16 %v1081, %v1081
      %v1090 = vpack.c.b16 %v1082, %v1082
      %v1091 = vpack.c.b16 %v1083, %v1083
      %v1092 = vpack.c.b16 %v1084, %v1084
      %v1093 = vpack.c.b16 %v1085, %v1085
      %v1095 = vshrl.u32 %v1062, 16
      %v1097 = vshll.u32 %v1062, 16
      %v1099 = vrot.slane %v1097, 1
      %v1100 = vor.u32 %v1095, %v1099
      %v1102 = vshll.u32 %v1086, 16
      %v1104 = vrot.slane %v1102, 1
      %v1105 = vsel %vm289, %v1100, %v1104
      %v1107 = vshrl.u32 %v1063, 16
      %v1109 = vshll.u32 %v1063, 16
      %v1111 = vrot.slane %v1109, 1
      %v1112 = vor.u32 %v1107, %v1111
      %v1114 = vshll.u32 %v1087, 16
      %v1116 = vrot.slane %v1114, 1
      %v1117 = vsel %vm289, %v1112, %v1116
      %v1119 = vshrl.u32 %v1064, 16
      %v1121 = vshll.u32 %v1064, 16
      %v1123 = vrot.slane %v1121, 1
      %v1124 = vor.u32 %v1119, %v1123
      %v1126 = vshll.u32 %v1088, 16
      %v1128 = vrot.slane %v1126, 1
      %v1129 = vsel %vm289, %v1124, %v1128
      %v1131 = vshrl.u32 %v1065, 16
      %v1133 = vshll.u32 %v1065, 16
      %v1135 = vrot.slane %v1133, 1
      %v1136 = vor.u32 %v1131, %v1135
      %v1138 = vshll.u32 %v1089, 16
      %v1140 = vrot.slane %v1138, 1
      %v1141 = vsel %vm289, %v1136, %v1140
      %v1143 = vshrl.u32 %v1066, 16
      %v1145 = vshll.u32 %v1066, 16
      %v1147 = vrot.slane %v1145, 1
      %v1148 = vor.u32 %v1143, %v1147
      %v1150 = vshll.u32 %v1090, 16
      %v1152 = vrot.slane %v1150, 1
      %v1153 = vsel %vm289, %v1148, %v1152
      %v1155 = vshrl.u32 %v1067, 16
      %v1157 = vshll.u32 %v1067, 16
      %v1159 = vrot.slane %v1157, 1
      %v1160 = vor.u32 %v1155, %v1159
      %v1162 = vshll.u32 %v1091, 16
      %v1164 = vrot.slane %v1162, 1
      %v1165 = vsel %vm289, %v1160, %v1164
      %v1167 = vshrl.u32 %v1068, 16
      %v1169 = vshll.u32 %v1068, 16
      %v1171 = vrot.slane %v1169, 1
      %v1172 = vor.u32 %v1167, %v1171
      %v1174 = vshll.u32 %v1092, 16
      %v1176 = vrot.slane %v1174, 1
      %v1177 = vsel %vm289, %v1172, %v1176
      %v1179 = vshrl.u32 %v1069, 16
      %v1181 = vshll.u32 %v1069, 16
      %v1183 = vrot.slane %v1181, 1
      %v1184 = vor.u32 %v1179, %v1183
      %v1186 = vshll.u32 %v1093, 16
      %v1188 = vrot.slane %v1186, 1
      %v1189 = vsel %vm289, %v1184, %v1188
      %1190 = vrot.lane.b32.xlu0 %v1105, 4
      %v1191 = vpop.permute.xlu0 %1190
      %1192 = vrot.lane.b32.xlu0 %v1117, 4
      %v1193 = vpop.permute.xlu0 %1192
      %1194 = vrot.lane.b32.xlu0 %v1129, 4
      %v1195 = vpop.permute.xlu0 %1194
      %1196 = vrot.lane.b32.xlu0 %v1141, 4
      %v1197 = vpop.permute.xlu0 %1196
      %1198 = vrot.lane.b32.xlu0 %v1153, 4
      %v1199 = vpop.permute.xlu0 %1198
      %1200 = vrot.lane.b32.xlu0 %v1165, 4
      %v1201 = vpop.permute.xlu0 %1200
      %1202 = vrot.lane.b32.xlu0 %v1177, 4
      %v1203 = vpop.permute.xlu0 %1202
      %1204 = vrot.lane.b32.xlu0 %v1189, 4
      %v1205 = vpop.permute.xlu0 %1204
      %v1206 = vrot.slane %v1062, 1
      %v1207 = vrot.slane %v1086, 1
      %v1208 = vsel %vm402, %v1206, %v1207
      %v1209 = vrot.slane %v1063, 1
      %v1210 = vrot.slane %v1087, 1
      %v1211 = vsel %vm402, %v1209, %v1210
      %v1212 = vrot.slane %v1064, 1
      %v1213 = vrot.slane %v1088, 1
      %v1214 = vsel %vm402, %v1212, %v1213
      %v1215 = vrot.slane %v1065, 1
      %v1216 = vrot.slane %v1089, 1
      %v1217 = vsel %vm402, %v1215, %v1216
      %v1218 = vrot.slane %v1066, 1
      %v1219 = vrot.slane %v1090, 1
      %v1220 = vsel %vm402, %v1218, %v1219
      %v1221 = vrot.slane %v1067, 1
      %v1222 = vrot.slane %v1091, 1
      %v1223 = vsel %vm402, %v1221, %v1222
      %v1224 = vrot.slane %v1068, 1
      %v1225 = vrot.slane %v1092, 1
      %v1226 = vsel %vm402, %v1224, %v1225
      %v1227 = vrot.slane %v1069, 1
      %v1228 = vrot.slane %v1093, 1
      %v1229 = vsel %vm402, %v1227, %v1228
      %1230 = vrot.lane.b32.xlu0 %v1208, 8
      %v1231 = vpop.permute.xlu0 %1230
      %1232 = vrot.lane.b32.xlu0 %v1211, 8
      %v1233 = vpop.permute.xlu0 %1232
      %1234 = vrot.lane.b32.xlu0 %v1214, 8
      %v1235 = vpop.permute.xlu0 %1234
      %1236 = vrot.lane.b32.xlu0 %v1217, 8
      %v1237 = vpop.permute.xlu0 %1236
      %1238 = vrot.lane.b32.xlu0 %v1220, 8
      %v1239 = vpop.permute.xlu0 %1238
      %1240 = vrot.lane.b32.xlu0 %v1223, 8
      %v1241 = vpop.permute.xlu0 %1240
      %1242 = vrot.lane.b32.xlu0 %v1226, 8
      %v1243 = vpop.permute.xlu0 %1242
      %1244 = vrot.lane.b32.xlu0 %v1229, 8
      %v1245 = vpop.permute.xlu0 %1244
      %v1247 = vsel %vm443, %v1062, %v1191
      %v1249 = vsel %vm443, %v1063, %v1193
      %v1251 = vsel %vm443, %v1064, %v1195
      %v1253 = vsel %vm443, %v1065, %v1197
      %v1255 = vsel %vm443, %v1066, %v1199
      %v1257 = vsel %vm443, %v1067, %v1201
      %v1259 = vsel %vm443, %v1068, %v1203
      %v1261 = vsel %vm443, %v1069, %v1205
      %v1263 = vsel %vm460, %v1247, %v1231
      %v1265 = vsel %vm460, %v1249, %v1233
      %v1267 = vsel %vm460, %v1251, %v1235
      %v1269 = vsel %vm460, %v1253, %v1237
      %v1271 = vsel %vm460, %v1255, %v1239
      %v1273 = vsel %vm460, %v1257, %v1241
      %v1275 = vsel %vm460, %v1259, %v1243
      %v1277 = vsel %vm460, %v1261, %v1245
      %s1278 = scalar_lea.vmem %s1, 16
      %v1279 = vld [vmem:[%s1278] sm:$0xf]
      %v1280 = vld [vmem:[%s1278 + $0x4] sm:$0x3]
      %v1283 = vunpack.c.l.b16 %v1279
      %v1284 = vunpack.c.l.b16 %v1280
      %v1285 = vpack.c.b16 %v1284, %v1283
      %v1286 = vsel %vm763, %v1263, 0
      %v1288 = vsel %vm763, %v1265, 0
      %v1290 = vsel %vm763, %v1267, 0
      %v1292 = vsel %vm763, %v1269, 0
      %v1294 = vsel %vm763, %v1271, 0
      %v1296 = vsel %vm763, %v1273, 0
      %v1298 = vsel %vm763, %v1275, 0
      %v1300 = vsel %vm763, %v1277, 0
      %v1303 = vsel %vm780, %v1285, 0
      %1305 = vmatprep.subr.bf16.mxu0 0
      %1306 = vmatpush1.bf16.msra.mxu0 %v1303
      %1307 = vmatprep.subr.bf16.mxu0 0
      %1308 = vmatpush1.bf16.msra.mxu0 0
      %1309 = vmatprep.subr.bf16.mxu0 0
      %1310 = vmatpush1.bf16.msra.mxu0 0
      %1311 = vmatprep.subr.bf16.mxu0 0
      %1312 = vmatpush1.bf16.msra.mxu0 0
      %1313 = vmatprep.subr.bf16.mxu0 0
      %1314 = vmatpush1.bf16.msra.mxu0 0
      %1315 = vmatprep.subr.bf16.mxu0 0
      %1316 = vmatpush1.bf16.msra.mxu0 0
      %1317 = vmatprep.subr.bf16.mxu0 0
      %1318 = vmatpush1.bf16.msra.mxu0 0
      %1319 = vmatprep.subr.bf16.mxu0 0
      %1320 = vmatpush1.bf16.msra.mxu0 0
      %1321 = vmatprep.subr.bf16.mxu0 0
      %1322 = vmatpush1.bf16.msra.mxu0 0
      %1323 = vmatprep.subr.bf16.mxu0 0
      %1324 = vmatpush1.bf16.msra.mxu0 0
      %1325 = vmatprep.subr.bf16.mxu0 0
      %1326 = vmatpush1.bf16.msra.mxu0 0
      %1327 = vmatprep.subr.bf16.mxu0 0
      %1328 = vmatpush1.bf16.msra.mxu0 0
      %1329 = vmatprep.subr.bf16.mxu0 0
      %1330 = vmatpush1.bf16.msra.mxu0 0
      %1331 = vmatprep.subr.bf16.mxu0 0
      %1332 = vmatpush1.bf16.msra.mxu0 0
      %1333 = vmatprep.subr.bf16.mxu0 0
      %1334 = vmatpush1.bf16.msra.mxu0 0
      %1335 = vmatprep.subr.bf16.mxu0 0
      %1336 = vmatpush1.bf16.msra.mxu0 0
      %1337 = vmatprep.mubr.bf16.mxu0 0
      %1338 = vmatmul.mubr.bf16.gmra.mrb[0].mxu0 %v1286
      %v1339 = vpop.f32.mrb[0].mxu0
      %v1340 = vadd.f32 0.0, %v1339
      %v1341 = vpop.f32.mrb[0].mxu0
      %v1342 = vpop.f32.mrb[0].mxu0
      %v1343 = vadd.f32 0.0, %v1342
      %v1344 = vpop.f32.mrb[0].mxu0
      %1345 = vmatprep.mubr.bf16.mxu0 0
      %1346 = vmatmul.mubr.bf16.gmra.mrb[0].mxu0 %v1288
      %v1347 = vpop.f32.mrb[0].mxu0
      %v1348 = vadd.f32 0.0, %v1347
      %v1349 = vpop.f32.mrb[0].mxu0
      %v1350 = vpop.f32.mrb[0].mxu0
      %v1351 = vadd.f32 0.0, %v1350
      %v1352 = vpop.f32.mrb[0].mxu0
      %1353 = vmatprep.mubr.bf16.mxu0 0
      %1354 = vmatmul.mubr.bf16.gmra.mrb[0].mxu0 %v1290
      %v1355 = vpop.f32.mrb[0].mxu0
      %v1356 = vadd.f32 0.0, %v1355
      %v1357 = vpop.f32.mrb[0].mxu0
      %v1358 = vpop.f32.mrb[0].mxu0
      %v1359 = vadd.f32 0.0, %v1358
      %v1360 = vpop.f32.mrb[0].mxu0
      %1361 = vmatprep.mubr.bf16.mxu0 0
      %1362 = vmatmul.mubr.bf16.gmra.mrb[0].mxu0 %v1292
      %v1363 = vpop.f32.mrb[0].mxu0
      %v1364 = vadd.f32 0.0, %v1363
      %v1365 = vpop.f32.mrb[0].mxu0
      %v1366 = vpop.f32.mrb[0].mxu0
      %v1367 = vadd.f32 0.0, %v1366
      %v1368 = vpop.f32.mrb[0].mxu0
      %1369 = vmatprep.mubr.bf16.mxu0 0
      %1370 = vmatmul.mubr.bf16.gmra.mrb[0].mxu0 %v1294
      %v1371 = vpop.f32.mrb[0].mxu0
      %v1372 = vadd.f32 0.0, %v1371
      %v1373 = vpop.f32.mrb[0].mxu0
      %v1374 = vpop.f32.mrb[0].mxu0
      %v1375 = vadd.f32 0.0, %v1374
      %v1376 = vpop.f32.mrb[0].mxu0
      %1377 = vmatprep.mubr.bf16.mxu0 0
      %1378 = vmatmul.mubr.bf16.gmra.mrb[0].mxu0 %v1296
      %v1379 = vpop.f32.mrb[0].mxu0
      %v1380 = vadd.f32 0.0, %v1379
      %v1381 = vpop.f32.mrb[0].mxu0
      %v1382 = vpop.f32.mrb[0].mxu0
      %v1383 = vadd.f32 0.0, %v1382
      %v1384 = vpop.f32.mrb[0].mxu0
      %1385 = vmatprep.mubr.bf16.mxu0 0
      %1386 = vmatmul.mubr.bf16.gmra.mrb[0].mxu0 %v1298
      %v1387 = vpop.f32.mrb[0].mxu0
      %v1388 = vadd.f32 0.0, %v1387
      %v1389 = vpop.f32.mrb[0].mxu0
      %v1390 = vpop.f32.mrb[0].mxu0
      %v1391 = vadd.f32 0.0, %v1390
      %v1392 = vpop.f32.mrb[0].mxu0
      %1393 = vmatprep.mubr.bf16.mxu0 0
      %1394 = vmatmul.mubr.bf16.gmra.mrb[0].mxu0 %v1300
      %v1395 = vpop.f32.mrb[0].mxu0
      %v1396 = vadd.f32 0.0, %v1395
      %v1397 = vpop.f32.mrb[0].mxu0
      %v1398 = vpop.f32.mrb[0].mxu0
      %v1399 = vadd.f32 0.0, %v1398
      %v1400 = vpop.f32.mrb[0].mxu0
      %1401 = vdwg.mxu0
      %v1402 = vadd.f32 %v940, %v1340
      %v1403 = vadd.f32 %v943, %v1343
      %v1404 = vadd.f32 %v948, %v1348
      %v1405 = vadd.f32 %v951, %v1351
      %v1406 = vadd.f32 %v956, %v1356
      %v1407 = vadd.f32 %v959, %v1359
      %v1408 = vadd.f32 %v964, %v1364
      %v1409 = vadd.f32 %v967, %v1367
      %v1410 = vadd.f32 %v972, %v1372
      %v1411 = vadd.f32 %v975, %v1375
      %v1412 = vadd.f32 %v980, %v1380
      %v1413 = vadd.f32 %v983, %v1383
      %v1414 = vadd.f32 %v988, %v1388
      %v1415 = vadd.f32 %v991, %v1391
      %v1416 = vadd.f32 %v996, %v1396
      %v1417 = vadd.f32 %v999, %v1399
      %v1418 = vld [vmem:[%s2] sm:$0x1]
      %v1420 = vlaneseq
      %v1421 = vshrl.u32 %v1420, 7
      %v1422 = vsub.s32 0, %v1421
      %v1423 = vrot.slane %v1418, %v1422
      %v1425 = vadd.f32 %v1402, %v1423
      %v1426 = vadd.f32 %v1403, %v1423
      %v1427 = vadd.f32 %v1404, %v1423
      %v1428 = vadd.f32 %v1405, %v1423
      %v1429 = vadd.f32 %v1406, %v1423
      %v1430 = vadd.f32 %v1407, %v1423
      %v1431 = vadd.f32 %v1408, %v1423
      %v1432 = vadd.f32 %v1409, %v1423
      %v1433 = vadd.f32 %v1410, %v1423
      %v1434 = vadd.f32 %v1411, %v1423
      %v1435 = vadd.f32 %v1412, %v1423
      %v1436 = vadd.f32 %v1413, %v1423
      %v1437 = vadd.f32 %v1414, %v1423
      %v1438 = vadd.f32 %v1415, %v1423
      %v1439 = vadd.f32 %v1416, %v1423
      %v1440 = vadd.f32 %v1417, %v1423
      %v1441 = vmax.f32 %v1425, 0.0
      %v1442 = vmax.f32 %v1426, 0.0
      %v1443 = vmax.f32 %v1427, 0.0
      %v1444 = vmax.f32 %v1428, 0.0
      %v1445 = vmax.f32 %v1429, 0.0
      %v1446 = vmax.f32 %v1430, 0.0
      %v1447 = vmax.f32 %v1431, 0.0
      %v1448 = vmax.f32 %v1432, 0.0
      %v1449 = vmax.f32 %v1433, 0.0
      %v1450 = vmax.f32 %v1434, 0.0
      %v1451 = vmax.f32 %v1435, 0.0
      %v1452 = vmax.f32 %v1436, 0.0
      %v1453 = vmax.f32 %v1437, 0.0
      %v1454 = vmax.f32 %v1438, 0.0
      %v1455 = vmax.f32 %v1439, 0.0
      %v1456 = vmax.f32 %v1440, 0.0
      %1457 = vst.msk [vmem:[%s194] sm:$0xff] %vm460, %v1441
      %1458 = vst.msk [vmem:[%s194 + $0x8] sm:$0xff] %vm460, %v1442
      %1459 = vst.msk [vmem:[%s194 + $0x10] sm:$0xff] %vm460, %v1443
      %1460 = vst.msk [vmem:[%s194 + $0x18] sm:$0xff] %vm460, %v1444
      %1461 = vst.msk [vmem:[%s194 + $0x20] sm:$0xff] %vm460, %v1445
      %1462 = vst.msk [vmem:[%s194 + $0x28] sm:$0xff] %vm460, %v1446
      %1463 = vst.msk [vmem:[%s194 + $0x30] sm:$0xff] %vm460, %v1447
      %1464 = vst.msk [vmem:[%s194 + $0x38] sm:$0xff] %vm460, %v1448
      %1465 = vst.msk [vmem:[%s194 + $0x40] sm:$0xff] %vm460, %v1449
      %1466 = vst.msk [vmem:[%s194 + $0x48] sm:$0xff] %vm460, %v1450
      %1467 = vst.msk [vmem:[%s194 + $0x50] sm:$0xff] %vm460, %v1451
      %1468 = vst.msk [vmem:[%s194 + $0x58] sm:$0xff] %vm460, %v1452
      %1469 = vst.msk [vmem:[%s194 + $0x60] sm:$0xff] %vm460, %v1453
      %1470 = vst.msk [vmem:[%s194 + $0x68] sm:$0xff] %vm460, %v1454
      %1471 = vst.msk [vmem:[%s194 + $0x70] sm:$0xff] %vm460, %v1455
      %1472 = vst.msk [vmem:[%s194 + $0x78] sm:$0xff] %vm460, %v1456
      %s1473 = smul.u32 8, %s19
      %p1474 = scmp.lt.s32.totalorder %s18, 1
      %s1475 = scalar_select %p1474, %s18, 1
      %p1476 = scmp.lt.s32.totalorder %s1473, 15
      %s1477 = scalar_select %p1476, %s1473, 15
      %s1478 = smul.addr %s1477, 2
      %s1479 = smul.addr %s1475, 32
      %s1480 = sadd.s32 %s1478, %s1479
      %s1481 = smul.addr %s1480, 8
      %s1482 = scalar_lea.vmem %s3, %s1481
      // Predicated region
      $region33: #{inception_block.4} parent=31 // pred_check
        %p1483 = pneg %p114
      $region34: #{inception_block.4} parent=31 // pred_check_branch
        %1485 = sbr.rel (%p1483) target = $region36
      $region35: #{inception_block.4} parent=31 // pred_region
        %s1486 = smul.u32 8, %s19
      $region36: #{inception_block.4} parent=31 // pred_fallthru
        _
    $region32: #{inception_block.4} parent=5 // pred_fallthru
      _
    %p1487 = scmp.le.s32.totalorder 2, %s9
    // Predicated region
    $region37: #{inception_block.4} parent=5 // pred_check
      %p1488 = pneg %p1487
    $region38: #{inception_block.4} parent=5 // pred_check_branch
      %1490 = sbr.rel (%p1488) target = $region40
    $region39: #{inception_block.4} parent=5 // pred_region
      %s1491 = ssub.s32 %s9, 2
      // Predicated region
      $region41: #{inception_block.4} parent=39 // pred_check
        %p1492 = pneg %p120
      $region42: #{inception_block.4} parent=39 // pred_check_branch
        %1494 = sbr.rel (%p1492) target = $region44
      $region43: #{inception_block.4} parent=39 // pred_region
        %s1495 = smul.u32 8, %s21
        %p1496 = scmp.lt.s32.totalorder %s20, 1
        %s1497 = scalar_select %p1496, %s20, 1
        %p1498 = scmp.lt.s32.totalorder %s1495, 15
        %s1499 = scalar_select %p1498, %s1495, 15
        %s1500 = smul.addr %s1499, 2
        %s1501 = smul.addr %s1497, 32
        %s1502 = sadd.s32 %s1500, %s1501
        %s1503 = smul.addr %s1502, 8
        %s1504 = scalar_lea.vmem %s3, %s1503
      $region44: #{inception_block.4} parent=39 // pred_fallthru
        _
    $region40: #{inception_block.4} parent=5 // pred_fallthru
      _
  $region6: #{inception_block.4} parent=0 // loop_footer
    %s13 = sadd.s32 1, %s9
  $region7: #{inception_block.4} parent=0 // loop_footer_branch
    %8 = sbr.rel target = $region3
  $region8: #{inception_block.4} parent=0 // loop_exit
    _

// kernel: inception_block.5
$region0: #{inception_block.5}
  #allocation0 [shape = 'u32[]', space=smem, size = 0x4, offset = 0x4, fixed_abs, tag = 'smem constant byte address 0x4 - core index']
  #allocation1 [shape = 'u32[144,128]{1,0:T(1,128)}', space=vmem, size = 0x12000, scoped, tag = 'internal scratch']
  %s0 = inlined_call_operand.vmem [shape: bf16[2,20,20,2], index: 0, kind: input, shape index: {}]
  %s1 = inlined_call_operand.vmem [shape: bf16[5,10,4], index: 1, kind: input, shape index: {}]
  %s2 = inlined_call_operand.vmem [shape: f32[1,4], index: 2, kind: input, shape index: {}]
  %s3 = inlined_call_operand.vmem [shape: f32[2,16,16,4], index: 3, kind: output, shape index: {}]
  %s4 = sld [smem:[#allocation0]]
  $region45: #{inception_block.5} parent=0
    _
  %s6 = ssub.s32 1, %s4
  %s7 = scalar_select 0, %s6, %s4
  loop: start=0, step=1, limit=6
  $region2: #{inception_block.5} parent=0 // loop_pre_header
    _
  $region3: #{inception_block.5} parent=0 // loop_header
    %s9 = sphi 0, %s13
    %p10 = scmp.ge.s32.totalorder %s9, 6
    %s16 = sphi 0, %s28
    %s17 = sphi 0, %s24
    %s18 = sphi 0, %s16
    %s19 = sphi 0, %s17
    %s20 = sphi 0, %s18
    %s21 = sphi 0, %s19
    %s31 = sphi 0, %s33
    %s34 = sphi 0, %s31
    %s35 = sphi 0, %s34
    %s51 = sphi 0, %s35
    %s55 = sphi 0, %s55
    %s57 = sphi 0, %s55
    %s58 = sphi 0, %s57
    %s72 = sphi 0, %s58
    %s76 = sphi 0, %s76
    %s78 = sphi 0, %s76
    %s79 = sphi 0, %s78
    %s93 = sphi 0, %s79
    %s101 = sphi 0, %s103
    %s104 = sphi 0, %s101
    %s105 = sphi 0, %s104
    %s121 = sphi 0, %s105
  $region4: #{inception_block.5} parent=0 // loop_header_branch
    %12 = sbr.rel (%p10) target = $region8
  $region5: #{inception_block.5} parent=0 // loop_body
    %s14 = ssub.s32 %s9, 1
    %s15 = ssub.s32 %s9, 2
    %s22 = sadd.s32 1, %s17
    %p23 = scmp.ge.s32.totalorder %s22, 2
    %s24 = scalar_select %p23, 0, %s22
    %s25 = sadd.s32 1, %s16
    %s26 = scalar_select %p23, %s25, %s16
    %p27 = scmp.ge.s32.totalorder %s26, 2
    %s28 = scalar_select %p27, 0, %s26
    %s29 = ssub.s32 %s16, %s28
    %p30 = scmp.eq.s32.totalorder %s29, 0
    %s32 = sadd.s32 %s31, 1
    %s33 = scalar_select %p30, %s31, %s32
    %p36 = pneg %p30
    %p37 = scmp.eq.s32.totalorder %s9, 3
    %p38 = por %p36, %p37
    %p39 = scmp.ne.s32.totalorder %s31, %s34
    %p40 = scmp.eq.s32.totalorder %s9, 0
    %p41 = por %p39, %p40
    %p42 = scmp.ne.s32.totalorder %s31, %s34
    %p43 = scmp.eq.s32.totalorder %s14, 3
    %p44 = por %p42, %p43
    %p45 = scmp.ne.s32.totalorder %s34, %s35
    %p46 = scmp.eq.s32.totalorder %s14, 0
    %p47 = por %p45, %p46
    %p48 = scmp.ne.s32.totalorder %s34, %s35
    %p49 = scmp.eq.s32.totalorder %s15, 3
    %p50 = por %p48, %p49
    %p52 = scmp.ne.s32.totalorder %s35, %s51
    %p53 = scmp.eq.s32.totalorder %s15, 0
    %p54 = por %p52, %p53
    %s56 = sadd.s32 %s55, 1
    %p59 = scmp.eq.s32.totalorder %s9, 3
    %p60 = scmp.ne.s32.totalorder %s55, %s57
    %p61 = scmp.eq.s32.totalorder %s9, 0
    %p62 = por %p60, %p61
    %p63 = scmp.ne.s32.totalorder %s55, %s57
    %p64 = scmp.eq.s32.totalorder %s14, 3
    %p65 = por %p63, %p64
    %p66 = scmp.ne.s32.totalorder %s57, %s58
    %p67 = scmp.eq.s32.totalorder %s14, 0
    %p68 = por %p66, %p67
    %p69 = scmp.ne.s32.totalorder %s57, %s58
    %p70 = scmp.eq.s32.totalorder %s15, 3
    %p71 = por %p69, %p70
    %p73 = scmp.ne.s32.totalorder %s58, %s72
    %p74 = scmp.eq.s32.totalorder %s15, 0
    %p75 = por %p73, %p74
    %s77 = sadd.s32 %s76, 1
    %p80 = scmp.eq.s32.totalorder %s9, 3
    %p81 = scmp.ne.s32.totalorder %s76, %s78
    %p82 = scmp.eq.s32.totalorder %s9, 0
    %p83 = por %p81, %p82
    %p84 = scmp.ne.s32.totalorder %s76, %s78
    %p85 = scmp.eq.s32.totalorder %s14, 3
    %p86 = por %p84, %p85
    %p87 = scmp.ne.s32.totalorder %s78, %s79
    %p88 = scmp.eq.s32.totalorder %s14, 0
    %p89 = por %p87, %p88
    %p90 = scmp.ne.s32.totalorder %s78, %s79
    %p91 = scmp.eq.s32.totalorder %s15, 3
    %p92 = por %p90, %p91
    %p94 = scmp.ne.s32.totalorder %s79, %s93
    %p95 = scmp.eq.s32.totalorder %s15, 0
    %p96 = por %p94, %p95
    %s97 = ssub.s32 %s16, %s28
    %s98 = ssub.s32 %s17, %s24
    %s99 = sor.u32 %s97, %s98
    %p100 = scmp.eq.s32.totalorder %s99, 0
    %s102 = sadd.s32 %s101, 1
    %s103 = scalar_select %p100, %s101, %s102
    %p106 = pneg %p100
    %p107 = scmp.eq.s32.totalorder %s9, 3
    %p108 = por %p106, %p107
    %p109 = scmp.ne.s32.totalorder %s101, %s104
    %p110 = scmp.eq.s32.totalorder %s9, 0
    %p111 = por %p109, %p110
    %p112 = scmp.ne.s32.totalorder %s101, %s104
    %p113 = scmp.eq.s32.totalorder %s14, 3
    %p114 = por %p112, %p113
    %p115 = scmp.ne.s32.totalorder %s104, %s105
    %p116 = scmp.eq.s32.totalorder %s14, 0
    %p117 = por %p115, %p116
    %p118 = scmp.ne.s32.totalorder %s104, %s105
    %p119 = scmp.eq.s32.totalorder %s15, 3
    %p120 = por %p118, %p119
    %p122 = scmp.ne.s32.totalorder %s105, %s121
    %p123 = scmp.eq.s32.totalorder %s15, 0
    %p124 = por %p122, %p123
    %p125 = scmp.le.s32.totalorder 1, %s9
    %p126 = scmp.lt.s32.totalorder %s9, 5
    %p127 = pnand %p125, %p126
    %p128 = pneg %p127
    // Predicated region
    $region9: #{inception_block.5} parent=5 // pred_check
      _
    $region10: #{inception_block.5} parent=5 // pred_check_branch
      %130 = sbr.rel (%p127) target = $region12
    $region11: #{inception_block.5} parent=5 // pred_region
      %s131 = ssub.s32 %s9, 1
      // Predicated region
      $region13: #{inception_block.5} parent=11 // pred_check
        %p132 = pneg %p68
      $region14: #{inception_block.5} parent=11 // pred_check_branch
        %134 = sbr.rel (%p132) target = $region16
      $region15: #{inception_block.5} parent=11 // pred_region
        _
      $region16: #{inception_block.5} parent=11 // pred_fallthru
        _
      // Predicated region
      $region17: #{inception_block.5} parent=11 // pred_check
        %p135 = pneg %p89
      $region18: #{inception_block.5} parent=11 // pred_check_branch
        %137 = sbr.rel (%p135) target = $region20
      $region19: #{inception_block.5} parent=11 // pred_region
        _
      $region20: #{inception_block.5} parent=11 // pred_fallthru
        _
    $region12: #{inception_block.5} parent=5 // pred_fallthru
      _
    %p138 = scmp.lt.s32.totalorder %s9, 4
    // Predicated region
    $region21: #{inception_block.5} parent=5 // pred_check
      %p139 = pneg %p138
    $region22: #{inception_block.5} parent=5 // pred_check_branch
      %141 = sbr.rel (%p139) target = $region24
    $region23: #{inception_block.5} parent=5 // pred_region
      // Predicated region
      $region25: #{inception_block.5} parent=23 // pred_check
        %p142 = pneg %p41
      $region26: #{inception_block.5} parent=23 // pred_check_branch
        %144 = sbr.rel (%p142) target = $region28
      $region27: #{inception_block.5} parent=23 // pred_region
        %p145 = scmp.lt.s32.totalorder %s16, 1
        %s146 = scalar_select %p145, %s16, 1
        %s147 = smul.addr %s146, 60
        %s148 = smul.addr %s147, 4
        %s149 = scalar_lea.vmem %s0, %s148
      $region28: #{inception_block.5} parent=23 // pred_fallthru
        _
    $region24: #{inception_block.5} parent=5 // pred_fallthru
      _
    %p150 = scmp.le.s32.totalorder 1, %s9
    %p151 = scmp.lt.s32.totalorder %s9, 5
    %p152 = pnand %p150, %p151
    %p153 = pneg %p152
    // Predicated region
    $region29: #{inception_block.5} parent=5 // pred_check
      _
    $region30: #{inception_block.5} parent=5 // pred_check_branch
      %155 = sbr.rel (%p152) target = $region32
    $region31: #{inception_block.5} parent=5 // pred_region
      %s156 = ssub.s32 %s9, 1
      %p157 = scmp.lt.s32.totalorder %s18, 1
      %s158 = scalar_select %p157, %s18, 1
      %s159 = smul.addr %s158, 60
      %s160 = smul.addr %s159, 4
      %s161 = scalar_lea.vmem %s0, %s160
      %p162 = pneg %p47
      %p163 = pneg %p44
      %p164 = pneg %p68
      %p165 = pneg %p65
      %p166 = pneg %p89
      %p167 = pneg %p86
      %p168 = pneg %p117
      %p169 = pneg %p114
      %s170 = smul.u32 8, %s19
      %p171 = scmp.lt.s32.totalorder %s18, 1
      %s172 = scalar_select %p171, %s18, 1
      %p173 = scmp.lt.s32.totalorder %s170, 15
      %s174 = scalar_select %p173, %s170, 15
      %s175 = smul.addr %s174, 2
      %s176 = smul.addr %s172, 32
      %s177 = sadd.s32 %s175, %s176
      %s178 = smul.addr %s177, 8
      %s179 = scalar_lea.vmem %s3, %s178
      %p180 = scmp.lt.s32.totalorder %s18, 1
      %s181 = scalar_select %p180, %s18, 1
      %s182 = smul.addr %s181, 60
      %s183 = smul.addr %s182, 4
      %s184 = scalar_lea.vmem %s0, %s183
      %s185 = smul.u32 8, %s19
      %p186 = scmp.lt.s32.totalorder %s18, 1
      %s187 = scalar_select %p186, %s18, 1
      %p188 = scmp.lt.s32.totalorder %s185, 15
      %s189 = scalar_select %p188, %s185, 15
      %s190 = smul.addr %s189, 2
      %s191 = smul.addr %s187, 32
      %s192 = sadd.s32 %s190, %s191
      %s193 = smul.addr %s192, 8
      %s194 = scalar_lea.vmem %s3, %s193
      %s195 = smul.u32 8, %s19
      %s197 = smul.u32 %s19, 8
      %s198 = smul.u32 %s197, 3
      %s199 = smul.addr %s198, 4
      %s200 = scalar_lea.vmem %s184, %s199
      %v201 = vld [vmem:[%s200] sm:$0xf]
      %v202 = vld [vmem:[%s200 + $0x4] sm:$0xf]
      %v203 = vld [vmem:[%s200 + $0x8] sm:$0x3]
      %v204 = vld [vmem:[%s200 + $0xc] sm:$0xf]
      %v205 = vld [vmem:[%s200 + $0x10] sm:$0xf]
      %v206 = vld [vmem:[%s200 + $0x14] sm:$0x3]
      %v207 = vld [vmem:[%s200 + $0x18] sm:$0xf]
      %v208 = vld [vmem:[%s200 + $0x1c] sm:$0xf]
      %v209 = vld [vmem:[%s200 + $0x20] sm:$0x3]
      %v210 = vld [vmem:[%s200 + $0x24] sm:$0xf]
      %v211 = vld [vmem:[%s200 + $0x28] sm:$0xf]
      %v212 = vld [vmem:[%s200 + $0x2c] sm:$0x3]
      %v213 = vld [vmem:[%s200 + $0x30] sm:$0xf]
      %v214 = vld [vmem:[%s200 + $0x34] sm:$0xf]
      %v215 = vld [vmem:[%s200 + $0x38] sm:$0x3]
      %v216 = vld [vmem:[%s200 + $0x3c] sm:$0xf]
      %v217 = vld [vmem:[%s200 + $0x40] sm:$0xf]
      %v218 = vld [vmem:[%s200 + $0x44] sm:$0x3]
      %v219 = vld [vmem:[%s200 + $0x48] sm:$0xf]
      %v220 = vld [vmem:[%s200 + $0x4c] sm:$0xf]
      %v221 = vld [vmem:[%s200 + $0x50] sm:$0x3]
      %v222 = vld [vmem:[%s200 + $0x54] sm:$0xf]
      %v223 = vld [vmem:[%s200 + $0x58] sm:$0xf]
      %v224 = vld [vmem:[%s200 + $0x5c] sm:$0x3]
      %v241 = vunpack.c.l.b16 %v201
      %v242 = vunpack.c.l.b16 %v202
      %v243 = vunpack.c.l.b16 %v204
      %v244 = vunpack.c.l.b16 %v205
      %v245 = vunpack.c.l.b16 %v207
      %v246 = vunpack.c.l.b16 %v208
      %v247 = vunpack.c.l.b16 %v210
      %v248 = vunpack.c.l.b16 %v211
      %v249 = vunpack.c.l.b16 %v213
      %v250 = vunpack.c.l.b16 %v214
      %v251 = vunpack.c.l.b16 %v216
      %v252 = vunpack.c.l.b16 %v217
      %v253 = vunpack.c.l.b16 %v219
      %v254 = vunpack.c.l.b16 %v220
      %v255 = vunpack.c.l.b16 %v222
      %v256 = vunpack.c.l.b16 %v223
      %v257 = vpack.c.b16 %v242, %v241
      %v258 = vpack.c.b16 %v244, %v243
      %v259 = vpack.c.b16 %v246, %v245
      %v260 = vpack.c.b16 %v248, %v247
      %v261 = vpack.c.b16 %v250, %v249
      %v262 = vpack.c.b16 %v252, %v251
      %v263 = vpack.c.b16 %v254, %v253
      %v264 = vpack.c.b16 %v256, %v255
      %v273 = vunpack.c.l.b16 %v203
      %v274 = vunpack.c.l.b16 %v206
      %v275 = vunpack.c.l.b16 %v209
      %v276 = vunpack.c.l.b16 %v212
      %v277 = vunpack.c.l.b16 %v215
      %v278 = vunpack.c.l.b16 %v218
      %v279 = vunpack.c.l.b16 %v221
      %v280 = vunpack.c.l.b16 %v224
      %v281 = vpack.c.b16 %v273, %v273
      %v282 = vpack.c.b16 %v274, %v274
      %v283 = vpack.c.b16 %v275, %v275
      %v284 = vpack.c.b16 %v276, %v276
      %v285 = vpack.c.b16 %v277, %v277
      %v286 = vpack.c.b16 %v278, %v278
      %v287 = vpack.c.b16 %v279, %v279
      %v288 = vpack.c.b16 %v280, %v280
      %vm289 = vsmask.f32 7424
      %v291 = vshrl.u32 %v257, 16
      %v293 = vshll.u32 %v257, 16
      %v295 = vrot.slane %v293, 1
      %v296 = vor.u32 %v291, %v295
      %v298 = vshll.u32 %v281, 16
      %v300 = vrot.slane %v298, 1
      %v301 = vsel %vm289, %v296, %v300
      %v303 = vshrl.u32 %v258, 16
      %v305 = vshll.u32 %v258, 16
      %v307 = vrot.slane %v305, 1
      %v308 = vor.u32 %v303, %v307
      %v310 = vshll.u32 %v282, 16
      %v312 = vrot.slane %v310, 1
      %v313 = vsel %vm289, %v308, %v312
      %v315 = vshrl.u32 %v259, 16
      %v317 = vshll.u32 %v259, 16
      %v319 = vrot.slane %v317, 1
      %v320 = vor.u32 %v315, %v319
      %v322 = vshll.u32 %v283, 16
      %v324 = vrot.slane %v322, 1
      %v325 = vsel %vm289, %v320, %v324
      %v327 = vshrl.u32 %v260, 16
      %v329 = vshll.u32 %v260, 16
      %v331 = vrot.slane %v329, 1
      %v332 = vor.u32 %v327, %v331
      %v334 = vshll.u32 %v284, 16
      %v336 = vrot.slane %v334, 1
      %v337 = vsel %vm289, %v332, %v336
      %v339 = vshrl.u32 %v261, 16
      %v341 = vshll.u32 %v261, 16
      %v343 = vrot.slane %v341, 1
      %v344 = vor.u32 %v339, %v343
      %v346 = vshll.u32 %v285, 16
      %v348 = vrot.slane %v346, 1
      %v349 = vsel %vm289, %v344, %v348
      %v351 = vshrl.u32 %v262, 16
      %v353 = vshll.u32 %v262, 16
      %v355 = vrot.slane %v353, 1
      %v356 = vor.u32 %v351, %v355
      %v358 = vshll.u32 %v286, 16
      %v360 = vrot.slane %v358, 1
      %v361 = vsel %vm289, %v356, %v360
      %v363 = vshrl.u32 %v263, 16
      %v365 = vshll.u32 %v263, 16
      %v367 = vrot.slane %v365, 1
      %v368 = vor.u32 %v363, %v367
      %v370 = vshll.u32 %v287, 16
      %v372 = vrot.slane %v370, 1
      %v373 = vsel %vm289, %v368, %v372
      %v375 = vshrl.u32 %v264, 16
      %v377 = vshll.u32 %v264, 16
      %v379 = vrot.slane %v377, 1
      %v380 = vor.u32 %v375, %v379
      %v382 = vshll.u32 %v288, 16
      %v384 = vrot.slane %v382, 1
      %v385 = vsel %vm289, %v380, %v384
      %386 = vrot.lane.b32.xlu0 %v301, 2
      %v387 = vpop.permute.xlu0 %386
      %388 = vrot.lane.b32.xlu0 %v313, 2
      %v389 = vpop.permute.xlu0 %388
      %390 = vrot.lane.b32.xlu0 %v325, 2
      %v391 = vpop.permute.xlu0 %390
      %392 = vrot.lane.b32.xlu0 %v337, 2
      %v393 = vpop.permute.xlu0 %392
      %394 = vrot.lane.b32.xlu0 %v349, 2
      %v395 = vpop.permute.xlu0 %394
      %396 = vrot.lane.b32.xlu0 %v361, 2
      %v397 = vpop.permute.xlu0 %396
      %398 = vrot.lane.b32.xlu0 %v373, 2
      %v399 = vpop.permute.xlu0 %398
      %400 = vrot.lane.b32.xlu0 %v385, 2
      %v401 = vpop.permute.xlu0 %400
      %vm402 = vcmask 1046528
      %v403 = vrot.slane %v257, 1
      %v404 = vrot.slane %v281, 1
      %v405 = vsel %vm402, %v403, %v404
      %v406 = vrot.slane %v258, 1
      %v407 = vrot.slane %v282, 1
      %v408 = vsel %vm402, %v406, %v407
      %v409 = vrot.slane %v259, 1
      %v410 = vrot.slane %v283, 1
      %v411 = vsel %vm402, %v409, %v410
      %v412 = vrot.slane %v260, 1
      %v413 = vrot.slane %v284, 1
      %v414 = vsel %vm402, %v412, %v413
      %v415 = vrot.slane %v261, 1
      %v416 = vrot.slane %v285, 1
      %v417 = vsel %vm402, %v415, %v416
      %v418 = vrot.slane %v262, 1
      %v419 = vrot.slane %v286, 1
      %v420 = vsel %vm402, %v418, %v419
      %v421 = vrot.slane %v263, 1
      %v422 = vrot.slane %v287, 1
      %v423 = vsel %vm402, %v421, %v422
      %v424 = vrot.slane %v264, 1
      %v425 = vrot.slane %v288, 1
      %v426 = vsel %vm402, %v424, %v425
      %427 = vrot.lane.b32.xlu0 %v405, 4
      %v428 = vpop.permute.xlu0 %427
      %429 = vrot.lane.b32.xlu0 %v408, 4
      %v430 = vpop.permute.xlu0 %429
      %431 = vrot.lane.b32.xlu0 %v411, 4
      %v432 = vpop.permute.xlu0 %431
      %433 = vrot.lane.b32.xlu0 %v414, 4
      %v434 = vpop.permute.xlu0 %433
      %435 = vrot.lane.b32.xlu0 %v417, 4
      %v436 = vpop.permute.xlu0 %435
      %437 = vrot.lane.b32.xlu0 %v420, 4
      %v438 = vpop.permute.xlu0 %437
      %439 = vrot.lane.b32.xlu0 %v423, 4
      %v440 = vpop.permute.xlu0 %439
      %441 = vrot.lane.b32.xlu0 %v426, 4
      %v442 = vpop.permute.xlu0 %441
      %vm443 = vsmask.f32 6400
      %v444 = vrot.slane %v291, 1
      %v445 = vrot.slane %v293, 2
      %v446 = vor.u32 %v444, %v445
      %v447 = vshrl.u32 %v281, 16
      %v449 = vrot.slane %v447, 1
      %v450 = vrot.slane %v298, 2
      %v451 = vor.u32 %v449, %v450
      %v452 = vsel %vm443, %v446, %v451
      %v453 = vrot.slane %v303, 1
      %v454 = vrot.slane %v305, 2
      %v455 = vor.u32 %v453, %v454
      %v456 = vshrl.u32 %v282, 16
      %v458 = vrot.slane %v456, 1
      %v459 = vrot.slane %v310, 2
      %v460 = vor.u32 %v458, %v459
      %v461 = vsel %vm443, %v455, %v460
      %v462 = vrot.slane %v315, 1
      %v463 = vrot.slane %v317, 2
      %v464 = vor.u32 %v462, %v463
      %v465 = vshrl.u32 %v283, 16
      %v467 = vrot.slane %v465, 1
      %v468 = vrot.slane %v322, 2
      %v469 = vor.u32 %v467, %v468
      %v470 = vsel %vm443, %v464, %v469
      %v471 = vrot.slane %v327, 1
      %v472 = vrot.slane %v329, 2
      %v473 = vor.u32 %v471, %v472
      %v474 = vshrl.u32 %v284, 16
      %v476 = vrot.slane %v474, 1
      %v477 = vrot.slane %v334, 2
      %v478 = vor.u32 %v476, %v477
      %v479 = vsel %vm443, %v473, %v478
      %v480 = vrot.slane %v339, 1
      %v481 = vrot.slane %v341, 2
      %v482 = vor.u32 %v480, %v481
      %v483 = vshrl.u32 %v285, 16
      %v485 = vrot.slane %v483, 1
      %v486 = vrot.slane %v346, 2
      %v487 = vor.u32 %v485, %v486
      %v488 = vsel %vm443, %v482, %v487
      %v489 = vrot.slane %v351, 1
      %v490 = vrot.slane %v353, 2
      %v491 = vor.u32 %v489, %v490
      %v492 = vshrl.u32 %v286, 16
      %v494 = vrot.slane %v492, 1
      %v495 = vrot.slane %v358, 2
      %v496 = vor.u32 %v494, %v495
      %v497 = vsel %vm443, %v491, %v496
      %v498 = vrot.slane %v363, 1
      %v499 = vrot.slane %v365, 2
      %v500 = vor.u32 %v498, %v499
      %v501 = vshrl.u32 %v287, 16
      %v503 = vrot.slane %v501, 1
      %v504 = vrot.slane %v370, 2
      %v505 = vor.u32 %v503, %v504
      %v506 = vsel %vm443, %v500, %v505
      %v507 = vrot.slane %v375, 1
      %v508 = vrot.slane %v377, 2
      %v509 = vor.u32 %v507, %v508
      %v510 = vshrl.u32 %v288, 16
      %v512 = vrot.slane %v510, 1
      %v513 = vrot.slane %v382, 2
      %v514 = vor.u32 %v512, %v513
      %v515 = vsel %vm443, %v509, %v514
      %516 = vrot.lane.b32.xlu0 %v452, 6
      %v517 = vpop.permute.xlu0 %516
      %518 = vrot.lane.b32.xlu0 %v461, 6
      %v519 = vpop.permute.xlu0 %518
      %520 = vrot.lane.b32.xlu0 %v470, 6
      %v521 = vpop.permute.xlu0 %520
      %522 = vrot.lane.b32.xlu0 %v479, 6
      %v523 = vpop.permute.xlu0 %522
      %524 = vrot.lane.b32.xlu0 %v488, 6
      %v525 = vpop.permute.xlu0 %524
      %526 = vrot.lane.b32.xlu0 %v497, 6
      %v527 = vpop.permute.xlu0 %526
      %528 = vrot.lane.b32.xlu0 %v506, 6
      %v529 = vpop.permute.xlu0 %528
      %530 = vrot.lane.b32.xlu0 %v515, 6
      %v531 = vpop.permute.xlu0 %530
      %vm532 = vcmask 1045504
      %v533 = vrot.slane %v257, 2
      %v534 = vrot.slane %v281, 2
      %v535 = vsel %vm532, %v533, %v534
      %v536 = vrot.slane %v258, 2
      %v537 = vrot.slane %v282, 2
      %v538 = vsel %vm532, %v536, %v537
      %v539 = vrot.slane %v259, 2
      %v540 = vrot.slane %v283, 2
      %v541 = vsel %vm532, %v539, %v540
      %v542 = vrot.slane %v260, 2
      %v543 = vrot.slane %v284, 2
      %v544 = vsel %vm532, %v542, %v543
      %v545 = vrot.slane %v261, 2
      %v546 = vrot.slane %v285, 2
      %v547 = vsel %vm532, %v545, %v546
      %v548 = vrot.slane %v262, 2
      %v549 = vrot.slane %v286, 2
      %v550 = vsel %vm532, %v548, %v549
      %v551 = vrot.slane %v263, 2
      %v552 = vrot.slane %v287, 2
      %v553 = vsel %vm532, %v551, %v552
      %v554 = vrot.slane %v264, 2
      %v555 = vrot.slane %v288, 2
      %v556 = vsel %vm532, %v554, %v555
      %557 = vrot.lane.b32.xlu0 %v535, 8
      %v558 = vpop.permute.xlu0 %557
      %559 = vrot.lane.b32.xlu0 %v538, 8
      %v560 = vpop.permute.xlu0 %559
      %561 = vrot.lane.b32.xlu0 %v541, 8
      %v562 = vpop.permute.xlu0 %561
      %563 = vrot.lane.b32.xlu0 %v544, 8
      %v564 = vpop.permute.xlu0 %563
      %565 = vrot.lane.b32.xlu0 %v547, 8
      %v566 = vpop.permute.xlu0 %565
      %567 = vrot.lane.b32.xlu0 %v550, 8
      %v568 = vpop.permute.xlu0 %567
      %569 = vrot.lane.b32.xlu0 %v553, 8
      %v570 = vpop.permute.xlu0 %569
      %571 = vrot.lane.b32.xlu0 %v556, 8
      %v572 = vpop.permute.xlu0 %571
      %vm573 = vcmask 15360
      %v575 = vsel %vm573, %v257, %v387
      %v577 = vsel %vm573, %v258, %v389
      %v579 = vsel %vm573, %v259, %v391
      %v581 = vsel %vm573, %v260, %v393
      %v583 = vsel %vm573, %v261, %v395
      %v585 = vsel %vm573, %v262, %v397
      %v587 = vsel %vm573, %v263, %v399
      %v589 = vsel %vm573, %v264, %v401
      %vm590 = vcmask 31744
      %v592 = vsel %vm590, %v575, %v428
      %v594 = vsel %vm590, %v577, %v430
      %v596 = vsel %vm590, %v579, %v432
      %v598 = vsel %vm590, %v581, %v434
      %v600 = vsel %vm590, %v583, %v436
      %v602 = vsel %vm590, %v585, %v438
      %v604 = vsel %vm590, %v587, %v440
      %v606 = vsel %vm590, %v589, %v442
      %vm607 = vcmask 48128
      %v609 = vsel %vm607, %v592, %v517
      %v611 = vsel %vm607, %v594, %v519
      %v613 = vsel %vm607, %v596, %v521
      %v615 = vsel %vm607, %v598, %v523
      %v617 = vsel %vm607, %v600, %v525
      %v619 = vsel %vm607, %v602, %v527
      %v621 = vsel %vm607, %v604, %v529
      %v623 = vsel %vm607, %v606, %v531
      %vm624 = vcmask 64512
      %v626 = vsel %vm624, %v609, %v558
      %v628 = vsel %vm624, %v611, %v560
      %v630 = vsel %vm624, %v613, %v562
      %v632 = vsel %vm624, %v615, %v564
      %v634 = vsel %vm624, %v617, %v566
      %v636 = vsel %vm624, %v619, %v568
      %v638 = vsel %vm624, %v621, %v570
      %v640 = vsel %vm624, %v623, %v572
      %v641 = vld [vmem:[%s1] sm:$0xf]
      %v642 = vld [vmem:[%s1 + $0x4] sm:$0x1]
      %s643 = sadd.s32 %s197, 1
      %s644 = smul.u32 %s643, 3
      %s645 = smul.addr %s644, 4
      %s646 = scalar_lea.vmem %s184, %s645
      %v647 = vld [vmem:[%s646] sm:$0xf]
      %v648 = vld [vmem:[%s646 + $0x4] sm:$0xf]
      %v649 = vld [vmem:[%s646 + $0x8] sm:$0x3]
      %v650 = vld [vmem:[%s646 + $0xc] sm:$0xf]
      %v651 = vld [vmem:[%s646 + $0x10] sm:$0xf]
      %v652 = vld [vmem:[%s646 + $0x14] sm:$0x3]
      %v653 = vld [vmem:[%s646 + $0x18] sm:$0xf]
      %v654 = vld [vmem:[%s646 + $0x1c] sm:$0xf]
      %v655 = vld [vmem:[%s646 + $0x20] sm:$0x3]
      %v656 = vld [vmem:[%s646 + $0x24] sm:$0xf]
      %v657 = vld [vmem:[%s646 + $0x28] sm:$0xf]
      %v658 = vld [vmem:[%s646 + $0x2c] sm:$0x3]
      %v659 = vld [vmem:[%s646 + $0x30] sm:$0xf]
      %v660 = vld [vmem:[%s646 + $0x34] sm:$0xf]
      %v661 = vld [vmem:[%s646 + $0x38] sm:$0x3]
      %v662 = vld [vmem:[%s646 + $0x3c] sm:$0xf]
      %v663 = vld [vmem:[%s646 + $0x40] sm:$0xf]
      %v664 = vld [vmem:[%s646 + $0x44] sm:$0x3]
      %v665 = vld [vmem:[%s646 + $0x48] sm:$0xf]
      %v666 = vld [vmem:[%s646 + $0x4c] sm:$0xf]
      %v667 = vld [vmem:[%s646 + $0x50] sm:$0x3]
      %v668 = vld [vmem:[%s646 + $0x54] sm:$0xf]
      %v669 = vld [vmem:[%s646 + $0x58] sm:$0xf]
      %v670 = vld [vmem:[%s646 + $0x5c] sm:$0x3]
      %v687 = vunpack.c.l.b16 %v647
      %v688 = vunpack.c.l.b16 %v648
      %v689 = vunpack.c.l.b16 %v650
      %v690 = vunpack.c.l.b16 %v651
      %v691 = vunpack.c.l.b16 %v653
      %v692 = vunpack.c.l.b16 %v654
      %v693 = vunpack.c.l.b16 %v656
      %v694 = vunpack.c.l.b16 %v657
      %v695 = vunpack.c.l.b16 %v659
      %v696 = vunpack.c.l.b16 %v660
      %v697 = vunpack.c.l.b16 %v662
      %v698 = vunpack.c.l.b16 %v663
      %v699 = vunpack.c.l.b16 %v665
      %v700 = vunpack.c.l.b16 %v666
      %v701 = vunpack.c.l.b16 %v668
      %v702 = vunpack.c.l.b16 %v669
      %v703 = vpack.c.b16 %v688, %v687
      %v704 = vpack.c.b16 %v690, %v689
      %v705 = vpack.c.b16 %v692, %v691
      %v706 = vpack.c.b16 %v694, %v693
      %v707 = vpack.c.b16 %v696, %v695
      %v708 = vpack.c.b16 %v698, %v697
      %v709 = vpack.c.b16 %v700, %v699
      %v710 = vpack.c.b16 %v702, %v701
      %v719 = vunpack.c.l.b16 %v649
      %v720 = vunpack.c.l.b16 %v652
      %v721 = vunpack.c.l.b16 %v655
      %v722 = vunpack.c.l.b16 %v658
      %v723 = vunpack.c.l.b16 %v661
      %v724 = vunpack.c.l.b16 %v664
      %v725 = vunpack.c.l.b16 %v667
      %v726 = vunpack.c.l.b16 %v670
      %v727 = vpack.c.b16 %v719, %v719
      %v728 = vpack.c.b16 %v720, %v720
      %v729 = vpack.c.b16 %v721, %v721
      %v730 = vpack.c.b16 %v722, %v722
      %v731 = vpack.c.b16 %v723, %v723
      %v732 = vpack.c.b16 %v724, %v724
      %v733 = vpack.c.b16 %v725, %v725
      %v734 = vpack.c.b16 %v726, %v726
      %v736 = vshrl.u32 %v703, 16
      %v738 = vshll.u32 %v703, 16
      %v740 = vrot.slane %v738, 1
      %v741 = vor.u32 %v736, %v740
      %v743 = vshll.u32 %v727, 16
      %v745 = vrot.slane %v743, 1
      %v746 = vsel %vm289, %v741, %v745
      %v748 = vshrl.u32 %v704, 16
      %v750 = vshll.u32 %v704, 16
      %v752 = vrot.slane %v750, 1
      %v753 = vor.u32 %v748, %v752
      %v755 = vshll.u32 %v728, 16
      %v757 = vrot.slane %v755, 1
      %v758 = vsel %vm289, %v753, %v757
      %v760 = vshrl.u32 %v705, 16
      %v762 = vshll.u32 %v705, 16
      %v764 = vrot.slane %v762, 1
      %v765 = vor.u32 %v760, %v764
      %v767 = vshll.u32 %v729, 16
      %v769 = vrot.slane %v767, 1
      %v770 = vsel %vm289, %v765, %v769
      %v772 = vshrl.u32 %v706, 16
      %v774 = vshll.u32 %v706, 16
      %v776 = vrot.slane %v774, 1
      %v777 = vor.u32 %v772, %v776
      %v779 = vshll.u32 %v730, 16
      %v781 = vrot.slane %v779, 1
      %v782 = vsel %vm289, %v777, %v781
      %v784 = vshrl.u32 %v707, 16
      %v786 = vshll.u32 %v707, 16
      %v788 = vrot.slane %v786, 1
      %v789 = vor.u32 %v784, %v788
      %v791 = vshll.u32 %v731, 16
      %v793 = vrot.slane %v791, 1
      %v794 = vsel %vm289, %v789, %v793
      %v796 = vshrl.u32 %v708, 16
      %v798 = vshll.u32 %v708, 16
      %v800 = vrot.slane %v798, 1
      %v801 = vor.u32 %v796, %v800
      %v803 = vshll.u32 %v732, 16
      %v805 = vrot.slane %v803, 1
      %v806 = vsel %vm289, %v801, %v805
      %v808 = vshrl.u32 %v709, 16
      %v810 = vshll.u32 %v709, 16
      %v812 = vrot.slane %v810, 1
      %v813 = vor.u32 %v808, %v812
      %v815 = vshll.u32 %v733, 16
      %v817 = vrot.slane %v815, 1
      %v818 = vsel %vm289, %v813, %v817
      %v820 = vshrl.u32 %v710, 16
      %v822 = vshll.u32 %v710, 16
      %v824 = vrot.slane %v822, 1
      %v825 = vor.u32 %v820, %v824
      %v827 = vshll.u32 %v734, 16
      %v829 = vrot.slane %v827, 1
      %v830 = vsel %vm289, %v825, %v829
      %831 = vrot.lane.b32.xlu0 %v746, 2
      %v832 = vpop.permute.xlu0 %831
      %833 = vrot.lane.b32.xlu0 %v758, 2
      %v834 = vpop.permute.xlu0 %833
      %835 = vrot.lane.b32.xlu0 %v770, 2
      %v836 = vpop.permute.xlu0 %835
      %837 = vrot.lane.b32.xlu0 %v782, 2
      %v838 = vpop.permute.xlu0 %837
      %839 = vrot.lane.b32.xlu0 %v794, 2
      %v840 = vpop.permute.xlu0 %839
      %841 = vrot.lane.b32.xlu0 %v806, 2
      %v842 = vpop.permute.xlu0 %841
      %843 = vrot.lane.b32.xlu0 %v818, 2
      %v844 = vpop.permute.xlu0 %843
      %845 = vrot.lane.b32.xlu0 %v830, 2
      %v846 = vpop.permute.xlu0 %845
      %v847 = vrot.slane %v703, 1
      %v848 = vrot.slane %v727, 1
      %v849 = vsel %vm402, %v847, %v848
      %v850 = vrot.slane %v704, 1
      %v851 = vrot.slane %v728, 1
      %v852 = vsel %vm402, %v850, %v851
      %v853 = vrot.slane %v705, 1
      %v854 = vrot.slane %v729, 1
      %v855 = vsel %vm402, %v853, %v854
      %v856 = vrot.slane %v706, 1
      %v857 = vrot.slane %v730, 1
      %v858 = vsel %vm402, %v856, %v857
      %v859 = vrot.slane %v707, 1
      %v860 = vrot.slane %v731, 1
      %v861 = vsel %vm402, %v859, %v860
      %v862 = vrot.slane %v708, 1
      %v863 = vrot.slane %v732, 1
      %v864 = vsel %vm402, %v862, %v863
      %v865 = vrot.slane %v709, 1
      %v866 = vrot.slane %v733, 1
      %v867 = vsel %vm402, %v865, %v866
      %v868 = vrot.slane %v710, 1
      %v869 = vrot.slane %v734, 1
      %v870 = vsel %vm402, %v868, %v869
      %871 = vrot.lane.b32.xlu0 %v849, 4
      %v872 = vpop.permute.xlu0 %871
      %873 = vrot.lane.b32.xlu0 %v852, 4
      %v874 = vpop.permute.xlu0 %873
      %875 = vrot.lane.b32.xlu0 %v855, 4
      %v876 = vpop.permute.xlu0 %875
      %877 = vrot.lane.b32.xlu0 %v858, 4
      %v878 = vpop.permute.xlu0 %877
      %879 = vrot.lane.b32.xlu0 %v861, 4
      %v880 = vpop.permute.xlu0 %879
      %881 = vrot.lane.b32.xlu0 %v864, 4
      %v882 = vpop.permute.xlu0 %881
      %883 = vrot.lane.b32.xlu0 %v867, 4
      %v884 = vpop.permute.xlu0 %883
      %885 = vrot.lane.b32.xlu0 %v870, 4
      %v886 = vpop.permute.xlu0 %885
      %v887 = vrot.slane %v736, 1
      %v888 = vrot.slane %v738, 2
      %v889 = vor.u32 %v887, %v888
      %v890 = vshrl.u32 %v727, 16
      %v892 = vrot.slane %v890, 1
      %v893 = vrot.slane %v743, 2
      %v894 = vor.u32 %v892, %v893
      %v895 = vsel %vm443, %v889, %v894
      %v896 = vrot.slane %v748, 1
      %v897 = vrot.slane %v750, 2
      %v898 = vor.u32 %v896, %v897
      %v899 = vshrl.u32 %v728, 16
      %v901 = vrot.slane %v899, 1
      %v902 = vrot.slane %v755, 2
      %v903 = vor.u32 %v901, %v902
      %v904 = vsel %vm443, %v898, %v903
      %v905 = vrot.slane %v760, 1
      %v906 = vrot.slane %v762, 2
      %v907 = vor.u32 %v905, %v906
      %v908 = vshrl.u32 %v729, 16
      %v910 = vrot.slane %v908, 1
      %v911 = vrot.slane %v767, 2
      %v912 = vor.u32 %v910, %v911
      %v913 = vsel %vm443, %v907, %v912
      %v914 = vrot.slane %v772, 1
      %v915 = vrot.slane %v774, 2
      %v916 = vor.u32 %v914, %v915
      %v917 = vshrl.u32 %v730, 16
      %v919 = vrot.slane %v917, 1
      %v920 = vrot.slane %v779, 2
      %v921 = vor.u32 %v919, %v920
      %v922 = vsel %vm443, %v916, %v921
      %v923 = vrot.slane %v784, 1
      %v924 = vrot.slane %v786, 2
      %v925 = vor.u32 %v923, %v924
      %v926 = vshrl.u32 %v731, 16
      %v928 = vrot.slane %v926, 1
      %v929 = vrot.slane %v791, 2
      %v930 = vor.u32 %v928, %v929
      %v931 = vsel %vm443, %v925, %v930
      %v932 = vrot.slane %v796, 1
      %v933 = vrot.slane %v798, 2
      %v934 = vor.u32 %v932, %v933
      %v935 = vshrl.u32 %v732, 16
      %v937 = vrot.slane %v935, 1
      %v938 = vrot.slane %v803, 2
      %v939 = vor.u32 %v937, %v938
      %v940 = vsel %vm443, %v934, %v939
      %v941 = vrot.slane %v808, 1
      %v942 = vrot.slane %v810, 2
      %v943 = vor.u32 %v941, %v942
      %v944 = vshrl.u32 %v733, 16
      %v946 = vrot.slane %v944, 1
      %v947 = vrot.slane %v815, 2
      %v948 = vor.u32 %v946, %v947
      %v949 = vsel %vm443, %v943, %v948
      %v950 = vrot.slane %v820, 1
      %v951 = vrot.slane %v822, 2
      %v952 = vor.u32 %v950, %v951
      %v953 = vshrl.u32 %v734, 16
      %v955 = vrot.slane %v953, 1
      %v956 = vrot.slane %v827, 2
      %v957 = vor.u32 %v955, %v956
      %v958 = vsel %vm443, %v952, %v957
      %959 = vrot.lane.b32.xlu0 %v895, 6
      %v960 = vpop.permute.xlu0 %959
      %961 = vrot.lane.b32.xlu0 %v904, 6
      %v962 = vpop.permute.xlu0 %961
      %963 = vrot.lane.b32.xlu0 %v913, 6
      %v964 = vpop.permute.xlu0 %963
      %965 = vrot.lane.b32.xlu0 %v922, 6
      %v966 = vpop.permute.xlu0 %965
      %967 = vrot.lane.b32.xlu0 %v931, 6
      %v968 = vpop.permute.xlu0 %967
      %969 = vrot.lane.b32.xlu0 %v940, 6
      %v970 = vpop.permute.xlu0 %969
      %971 = vrot.lane.b32.xlu0 %v949, 6
      %v972 = vpop.permute.xlu0 %971
      %973 = vrot.lane.b32.xlu0 %v958, 6
      %v974 = vpop.permute.xlu0 %973
      %v975 = vrot.slane %v703, 2
      %v976 = vrot.slane %v727, 2
      %v977 = vsel %vm532, %v975, %v976
      %v978 = vrot.slane %v704, 2
      %v979 = vrot.slane %v728, 2
      %v980 = vsel %vm532, %v978, %v979
      %v981 = vrot.slane %v705, 2
      %v982 = vrot.slane %v729, 2
      %v983 = vsel %vm532, %v981, %v982
      %v984 = vrot.slane %v706, 2
      %v985 = vrot.slane %v730, 2
      %v986 = vsel %vm532, %v984, %v985
      %v987 = vrot.slane %v707, 2
      %v988 = vrot.slane %v731, 2
      %v989 = vsel %vm532, %v987, %v988
      %v990 = vrot.slane %v708, 2
      %v991 = vrot.slane %v732, 2
      %v992 = vsel %vm532, %v990, %v991
      %v993 = vrot.slane %v709, 2
      %v994 = vrot.slane %v733, 2
      %v995 = vsel %vm532, %v993, %v994
      %v996 = vrot.slane %v710, 2
      %v997 = vrot.slane %v734, 2
      %v998 = vsel %vm532, %v996, %v997
      %999 = vrot.lane.b32.xlu0 %v977, 8
      %v1000 = vpop.permute.xlu0 %999
      %1001 = vrot.lane.b32.xlu0 %v980, 8
      %v1002 = vpop.permute.xlu0 %1001
      %1003 = vrot.lane.b32.xlu0 %v983, 8
      %v1004 = vpop.permute.xlu0 %1003
      %1005 = vrot.lane.b32.xlu0 %v986, 8
      %v1006 = vpop.permute.xlu0 %1005
      %1007 = vrot.lane.b32.xlu0 %v989, 8
      %v1008 = vpop.permute.xlu0 %1007
      %1009 = vrot.lane.b32.xlu0 %v992, 8
      %v1010 = vpop.permute.xlu0 %1009
      %1011 = vrot.lane.b32.xlu0 %v995, 8
      %v1012 = vpop.permute.xlu0 %1011
      %1013 = vrot.lane.b32.xlu0 %v998, 8
      %v1014 = vpop.permute.xlu0 %1013
      %v1016 = vsel %vm573, %v703, %v832
      %v1018 = vsel %vm573, %v704, %v834
      %v1020 = vsel %vm573, %v705, %v836
      %v1022 = vsel %vm573, %v706, %v838
      %v1024 = vsel %vm573, %v707, %v840
      %v1026 = vsel %vm573, %v708, %v842
      %v1028 = vsel %vm573, %v709, %v844
      %v1030 = vsel %vm573, %v710, %v846
      %v1032 = vsel %vm590, %v1016, %v872
      %v1034 = vsel %vm590, %v1018, %v874
      %v1036 = vsel %vm590, %v1020, %v876
      %v1038 = vsel %vm590, %v1022, %v878
      %v1040 = vsel %vm590, %v1024, %v880
      %v1042 = vsel %vm590, %v1026, %v882
      %v1044 = vsel %vm590, %v1028, %v884
      %v1046 = vsel %vm590, %v1030, %v886
      %v1048 = vsel %vm607, %v1032, %v960
      %v1050 = vsel %vm607, %v1034, %v962
      %v1052 = vsel %vm607, %v1036, %v964
      %v1054 = vsel %vm607, %v1038, %v966
      %v1056 = vsel %vm607, %v1040, %v968
      %v1058 = vsel %vm607, %v1042, %v970
      %v1060 = vsel %vm607, %v1044, %v972
      %v1062 = vsel %vm607, %v1046, %v974
      %v1064 = vsel %vm624, %v1048, %v1000
      %v1066 = vsel %vm624, %v1050, %v1002
      %v1068 = vsel %vm624, %v1052, %v1004
      %v1070 = vsel %vm624, %v1054, %v1006
      %v1072 = vsel %vm624, %v1056, %v1008
      %v1074 = vsel %vm624, %v1058, %v1010
      %v1076 = vsel %vm624, %v1060, %v1012
      %v1078 = vsel %vm624, %v1062, %v1014
      %s1079 = scalar_lea.vmem %s1, 8
      %v1080 = vld [vmem:[%s1079] sm:$0xf]
      %v1081 = vld [vmem:[%s1079 + $0x4] sm:$0x1]
      %v1084 = vunpack.c.l.b16 %v1080
      %v1085 = vunpack.c.l.b16 %v1081
      %v1086 = vpack.c.b16 %v1085, %v1084
      %vm1087 = vcmask 80896
      %v1088 = vsel %vm1087, %v1064, 0
      %v1090 = vsel %vm1087, %v1066, 0
      %v1092 = vsel %vm1087, %v1068, 0
      %v1094 = vsel %vm1087, %v1070, 0
      %v1096 = vsel %vm1087, %v1072, 0
      %v1098 = vsel %vm1087, %v1074, 0
      %v1100 = vsel %vm1087, %v1076, 0
      %v1102 = vsel %vm1087, %v1078, 0
      %vm1104 = vcmask 1044480
      %v1106 = vsel %vm1104, %v1086, 0
      %1108 = vmatprep.subr.bf16.mxu0 0
      %1109 = vmatpush1.bf16.msra.mxu0 %v1106
      %1110 = vmatprep.subr.bf16.mxu0 0
      %1111 = vmatpush1.bf16.msra.mxu0 0
      %1112 = vmatprep.subr.bf16.mxu0 0
      %1113 = vmatpush1.bf16.msra.mxu0 0
      %1114 = vmatprep.subr.bf16.mxu0 0
      %1115 = vmatpush1.bf16.msra.mxu0 0
      %1116 = vmatprep.subr.bf16.mxu0 0
      %1117 = vmatpush1.bf16.msra.mxu0 0
      %1118 = vmatprep.subr.bf16.mxu0 0
      %1119 = vmatpush1.bf16.msra.mxu0 0
      %1120 = vmatprep.subr.bf16.mxu0 0
      %1121 = vmatpush1.bf16.msra.mxu0 0
      %1122 = vmatprep.subr.bf16.mxu0 0
      %1123 = vmatpush1.bf16.msra.mxu0 0
      %1124 = vmatprep.subr.bf16.mxu0 0
      %1125 = vmatpush1.bf16.msra.mxu0 0
      %1126 = vmatprep.subr.bf16.mxu0 0
      %1127 = vmatpush1.bf16.msra.mxu0 0
      %1128 = vmatprep.subr.bf16.mxu0 0
      %1129 = vmatpush1.bf16.msra.mxu0 0
      %1130 = vmatprep.subr.bf16.mxu0 0
      %1131 = vmatpush1.bf16.msra.mxu0 0
      %1132 = vmatprep.subr.bf16.mxu0 0
      %1133 = vmatpush1.bf16.msra.mxu0 0
      %1134 = vmatprep.subr.bf16.mxu0 0
      %1135 = vmatpush1.bf16.msra.mxu0 0
      %1136 = vmatprep.subr.bf16.mxu0 0
      %1137 = vmatpush1.bf16.msra.mxu0 0
      %1138 = vmatprep.subr.bf16.mxu0 0
      %1139 = vmatpush1.bf16.msra.mxu0 0
      %1140 = vmatprep.mubr.bf16.mxu0 0
      %1141 = vmatmul.mubr.bf16.gmra.mrb[0].mxu0 %v1088
      %v1142 = vpop.f32.mrb[0].mxu0
      %v1143 = vadd.f32 0.0, %v1142
      %v1144 = vpop.f32.mrb[0].mxu0
      %v1145 = vpop.f32.mrb[0].mxu0
      %v1146 = vadd.f32 0.0, %v1145
      %v1147 = vpop.f32.mrb[0].mxu0
      %1148 = vmatprep.mubr.bf16.mxu0 0
      %1149 = vmatmul.mubr.bf16.gmra.mrb[0].mxu0 %v1090
      %v1150 = vpop.f32.mrb[0].mxu0
      %v1151 = vadd.f32 0.0, %v1150
      %v1152 = vpop.f32.mrb[0].mxu0
      %v1153 = vpop.f32.mrb[0].mxu0
      %v1154 = vadd.f32 0.0, %v1153
      %v1155 = vpop.f32.mrb[0].mxu0
      %1156 = vmatprep.mubr.bf16.mxu0 0
      %1157 = vmatmul.mubr.bf16.gmra.mrb[0].mxu0 %v1092
      %v1158 = vpop.f32.mrb[0].mxu0
      %v1159 = vadd.f32 0.0, %v1158
      %v1160 = vpop.f32.mrb[0].mxu0
      %v1161 = vpop.f32.mrb[0].mxu0
      %v1162 = vadd.f32 0.0, %v1161
      %v1163 = vpop.f32.mrb[0].mxu0
      %1164 = vmatprep.mubr.bf16.mxu0 0
      %1165 = vmatmul.mubr.bf16.gmra.mrb[0].mxu0 %v1094
      %v1166 = vpop.f32.mrb[0].mxu0
      %v1167 = vadd.f32 0.0, %v1166
      %v1168 = vpop.f32.mrb[0].mxu0
      %v1169 = vpop.f32.mrb[0].mxu0
      %v1170 = vadd.f32 0.0, %v1169
      %v1171 = vpop.f32.mrb[0].mxu0
      %1172 = vmatprep.mubr.bf16.mxu0 0
      %1173 = vmatmul.mubr.bf16.gmra.mrb[0].mxu0 %v1096
      %v1174 = vpop.f32.mrb[0].mxu0
      %v1175 = vadd.f32 0.0, %v1174
      %v1176 = vpop.f32.mrb[0].mxu0
      %v1177 = vpop.f32.mrb[0].mxu0
      %v1178 = vadd.f32 0.0, %v1177
      %v1179 = vpop.f32.mrb[0].mxu0
      %1180 = vmatprep.mubr.bf16.mxu0 0
      %1181 = vmatmul.mubr.bf16.gmra.mrb[0].mxu0 %v1098
      %v1182 = vpop.f32.mrb[0].mxu0
      %v1183 = vadd.f32 0.0, %v1182
      %v1184 = vpop.f32.mrb[0].mxu0
      %v1185 = vpop.f32.mrb[0].mxu0
      %v1186 = vadd.f32 0.0, %v1185
      %v1187 = vpop.f32.mrb[0].mxu0
      %1188 = vmatprep.mubr.bf16.mxu0 0
      %1189 = vmatmul.mubr.bf16.gmra.mrb[0].mxu0 %v1100
      %v1190 = vpop.f32.mrb[0].mxu0
      %v1191 = vadd.f32 0.0, %v1190
      %v1192 = vpop.f32.mrb[0].mxu0
      %v1193 = vpop.f32.mrb[0].mxu0
      %v1194 = vadd.f32 0.0, %v1193
      %v1195 = vpop.f32.mrb[0].mxu0
      %1196 = vmatprep.mubr.bf16.mxu0 0
      %1197 = vmatmul.mubr.bf16.gmra.mrb[0].mxu0 %v1102
      %v1198 = vpop.f32.mrb[0].mxu0
      %v1199 = vadd.f32 0.0, %v1198
      %v1200 = vpop.f32.mrb[0].mxu0
      %v1201 = vpop.f32.mrb[0].mxu0
      %v1202 = vadd.f32 0.0, %v1201
      %v1203 = vpop.f32.mrb[0].mxu0
      %1204 = vdwg.mxu0
      %v1207 = vunpack.c.l.b16 %v641
      %v1208 = vunpack.c.l.b16 %v642
      %v1209 = vpack.c.b16 %v1208, %v1207
      %v1210 = vsel %vm1087, %v626, 0
      %v1212 = vsel %vm1087, %v628, 0
      %v1214 = vsel %vm1087, %v630, 0
      %v1216 = vsel %vm1087, %v632, 0
      %v1218 = vsel %vm1087, %v634, 0
      %v1220 = vsel %vm1087, %v636, 0
      %v1222 = vsel %vm1087, %v638, 0
      %v1224 = vsel %vm1087, %v640, 0
      %v1227 = vsel %vm1104, %v1209, 0
      %1229 = vmatprep.subr.bf16.mxu0 0
      %1230 = vmatpush1.bf16.msra.mxu0 %v1227
      %1231 = vmatprep.subr.bf16.mxu0 0
      %1232 = vmatpush1.bf16.msra.mxu0 0
      %1233 = vmatprep.subr.bf16.mxu0 0
      %1234 = vmatpush1.bf16.msra.mxu0 0
      %1235 = vmatprep.subr.bf16.mxu0 0
      %1236 = vmatpush1.bf16.msra.mxu0 0
      %1237 = vmatprep.subr.bf16.mxu0 0
      %1238 = vmatpush1.bf16.msra.mxu0 0
      %1239 = vmatprep.subr.bf16.mxu0 0
      %1240 = vmatpush1.bf16.msra.mxu0 0
      %1241 = vmatprep.subr.bf16.mxu0 0
      %1242 = vmatpush1.bf16.msra.mxu0 0
      %1243 = vmatprep.subr.bf16.mxu0 0
      %1244 = vmatpush1.bf16.msra.mxu0 0
      %1245 = vmatprep.subr.bf16.mxu0 0
      %1246 = vmatpush1.bf16.msra.mxu0 0
      %1247 = vmatprep.subr.bf16.mxu0 0
      %1248 = vmatpush1.bf16.msra.mxu0 0
      %1249 = vmatprep.subr.bf16.mxu0 0
      %1250 = vmatpush1.bf16.msra.mxu0 0
      %1251 = vmatprep.subr.bf16.mxu0 0
      %1252 = vmatpush1.bf16.msra.mxu0 0
      %1253 = vmatprep.subr.bf16.mxu0 0
      %1254 = vmatpush1.bf16.msra.mxu0 0
      %1255 = vmatprep.subr.bf16.mxu0 0
      %1256 = vmatpush1.bf16.msra.mxu0 0
      %1257 = vmatprep.subr.bf16.mxu0 0
      %1258 = vmatpush1.bf16.msra.mxu0 0
      %1259 = vmatprep.subr.bf16.mxu0 0
      %1260 = vmatpush1.bf16.msra.mxu0 0
      %1261 = vmatprep.mubr.bf16.mxu0 0
      %1262 = vmatmul.mubr.bf16.gmra.mrb[0].mxu0 %v1210
      %v1263 = vpop.f32.mrb[0].mxu0
      %v1264 = vadd.f32 %v1143, %v1263
      %v1265 = vpop.f32.mrb[0].mxu0
      %v1266 = vpop.f32.mrb[0].mxu0
      %v1267 = vadd.f32 %v1146, %v1266
      %v1268 = vpop.f32.mrb[0].mxu0
      %1269 = vmatprep.mubr.bf16.mxu0 0
      %1270 = vmatmul.mubr.bf16.gmra.mrb[0].mxu0 %v1212
      %v1271 = vpop.f32.mrb[0].mxu0
      %v1272 = vadd.f32 %v1151, %v1271
      %v1273 = vpop.f32.mrb[0].mxu0
      %v1274 = vpop.f32.mrb[0].mxu0
      %v1275 = vadd.f32 %v1154, %v1274
      %v1276 = vpop.f32.mrb[0].mxu0
      %1277 = vmatprep.mubr.bf16.mxu0 0
      %1278 = vmatmul.mubr.bf16.gmra.mrb[0].mxu0 %v1214
      %v1279 = vpop.f32.mrb[0].mxu0
      %v1280 = vadd.f32 %v1159, %v1279
      %v1281 = vpop.f32.mrb[0].mxu0
      %v1282 = vpop.f32.mrb[0].mxu0
      %v1283 = vadd.f32 %v1162, %v1282
      %v1284 = vpop.f32.mrb[0].mxu0
      %1285 = vmatprep.mubr.bf16.mxu0 0
      %1286 = vmatmul.mubr.bf16.gmra.mrb[0].mxu0 %v1216
      %v1287 = vpop.f32.mrb[0].mxu0
      %v1288 = vadd.f32 %v1167, %v1287
      %v1289 = vpop.f32.mrb[0].mxu0
      %v1290 = vpop.f32.mrb[0].mxu0
      %v1291 = vadd.f32 %v1170, %v1290
      %v1292 = vpop.f32.mrb[0].mxu0
      %1293 = vmatprep.mubr.bf16.mxu0 0
      %1294 = vmatmul.mubr.bf16.gmra.mrb[0].mxu0 %v1218
      %v1295 = vpop.f32.mrb[0].mxu0
      %v1296 = vadd.f32 %v1175, %v1295
      %v1297 = vpop.f32.mrb[0].mxu0
      %v1298 = vpop.f32.mrb[0].mxu0
      %v1299 = vadd.f32 %v1178, %v1298
      %v1300 = vpop.f32.mrb[0].mxu0
      %1301 = vmatprep.mubr.bf16.mxu0 0
      %1302 = vmatmul.mubr.bf16.gmra.mrb[0].mxu0 %v1220
      %v1303 = vpop.f32.mrb[0].mxu0
      %v1304 = vadd.f32 %v1183, %v1303
      %v1305 = vpop.f32.mrb[0].mxu0
      %v1306 = vpop.f32.mrb[0].mxu0
      %v1307 = vadd.f32 %v1186, %v1306
      %v1308 = vpop.f32.mrb[0].mxu0
      %1309 = vmatprep.mubr.bf16.mxu0 0
      %1310 = vmatmul.mubr.bf16.gmra.mrb[0].mxu0 %v1222
      %v1311 = vpop.f32.mrb[0].mxu0
      %v1312 = vadd.f32 %v1191, %v1311
      %v1313 = vpop.f32.mrb[0].mxu0
      %v1314 = vpop.f32.mrb[0].mxu0
      %v1315 = vadd.f32 %v1194, %v1314
      %v1316 = vpop.f32.mrb[0].mxu0
      %1317 = vmatprep.mubr.bf16.mxu0 0
      %1318 = vmatmul.mubr.bf16.gmra.mrb[0].mxu0 %v1224
      %v1319 = vpop.f32.mrb[0].mxu0
      %v1320 = vadd.f32 %v1199, %v1319
      %v1321 = vpop.f32.mrb[0].mxu0
      %v1322 = vpop.f32.mrb[0].mxu0
      %v1323 = vadd.f32 %v1202, %v1322
      %v1324 = vpop.f32.mrb[0].mxu0
      %1325 = vdwg.mxu0
      %s1326 = sadd.s32 %s197, 2
      %s1327 = smul.u32 %s1326, 3
      %s1328 = smul.addr %s1327, 4
      %s1329 = scalar_lea.vmem %s184, %s1328
      %v1330 = vld [vmem:[%s1329] sm:$0xf]
      %v1331 = vld [vmem:[%s1329 + $0x4] sm:$0xf]
      %v1332 = vld [vmem:[%s1329 + $0x8] sm:$0x3]
      %v1333 = vld [vmem:[%s1329 + $0xc] sm:$0xf]
      %v1334 = vld [vmem:[%s1329 + $0x10] sm:$0xf]
      %v1335 = vld [vmem:[%s1329 + $0x14] sm:$0x3]
      %v1336 = vld [vmem:[%s1329 + $0x18] sm:$0xf]
      %v1337 = vld [vmem:[%s1329 + $0x1c] sm:$0xf]
      %v1338 = vld [vmem:[%s1329 + $0x20] sm:$0x3]
      %v1339 = vld [vmem:[%s1329 + $0x24] sm:$0xf]
      %v1340 = vld [vmem:[%s1329 + $0x28] sm:$0xf]
      %v1341 = vld [vmem:[%s1329 + $0x2c] sm:$0x3]
      %v1342 = vld [vmem:[%s1329 + $0x30] sm:$0xf]
      %v1343 = vld [vmem:[%s1329 + $0x34] sm:$0xf]
      %v1344 = vld [vmem:[%s1329 + $0x38] sm:$0x3]
      %v1345 = vld [vmem:[%s1329 + $0x3c] sm:$0xf]
      %v1346 = vld [vmem:[%s1329 + $0x40] sm:$0xf]
      %v1347 = vld [vmem:[%s1329 + $0x44] sm:$0x3]
      %v1348 = vld [vmem:[%s1329 + $0x48] sm:$0xf]
      %v1349 = vld [vmem:[%s1329 + $0x4c] sm:$0xf]
      %v1350 = vld [vmem:[%s1329 + $0x50] sm:$0x3]
      %v1351 = vld [vmem:[%s1329 + $0x54] sm:$0xf]
      %v1352 = vld [vmem:[%s1329 + $0x58] sm:$0xf]
      %v1353 = vld [vmem:[%s1329 + $0x5c] sm:$0x3]
      %v1370 = vunpack.c.l.b16 %v1330
      %v1371 = vunpack.c.l.b16 %v1331
      %v1372 = vunpack.c.l.b16 %v1333
      %v1373 = vunpack.c.l.b16 %v1334
      %v1374 = vunpack.c.l.b16 %v1336
      %v1375 = vunpack.c.l.b16 %v1337
      %v1376 = vunpack.c.l.b16 %v1339
      %v1377 = vunpack.c.l.b16 %v1340
      %v1378 = vunpack.c.l.b16 %v1342
      %v1379 = vunpack.c.l.b16 %v1343
      %v1380 = vunpack.c.l.b16 %v1345
      %v1381 = vunpack.c.l.b16 %v1346
      %v1382 = vunpack.c.l.b16 %v1348
      %v1383 = vunpack.c.l.b16 %v1349
      %v1384 = vunpack.c.l.b16 %v1351
      %v1385 = vunpack.c.l.b16 %v1352
      %v1386 = vpack.c.b16 %v1371, %v1370
      %v1387 = vpack.c.b16 %v1373, %v1372
      %v1388 = vpack.c.b16 %v1375, %v1374
      %v1389 = vpack.c.b16 %v1377, %v1376
      %v1390 = vpack.c.b16 %v1379, %v1378
      %v1391 = vpack.c.b16 %v1381, %v1380
      %v1392 = vpack.c.b16 %v1383, %v1382
      %v1393 = vpack.c.b16 %v1385, %v1384
      %v1402 = vunpack.c.l.b16 %v1332
      %v1403 = vunpack.c.l.b16 %v1335
      %v1404 = vunpack.c.l.b16 %v1338
      %v1405 = vunpack.c.l.b16 %v1341
      %v1406 = vunpack.c.l.b16 %v1344
      %v1407 = vunpack.c.l.b16 %v1347
      %v1408 = vunpack.c.l.b16 %v1350
      %v1409 = vunpack.c.l.b16 %v1353
      %v1410 = vpack.c.b16 %v1402, %v1402
      %v1411 = vpack.c.b16 %v1403, %v1403
      %v1412 = vpack.c.b16 %v1404, %v1404
      %v1413 = vpack.c.b16 %v1405, %v1405
      %v1414 = vpack.c.b16 %v1406, %v1406
      %v1415 = vpack.c.b16 %v1407, %v1407
      %v1416 = vpack.c.b16 %v1408, %v1408
      %v1417 = vpack.c.b16 %v1409, %v1409
      %v1419 = vshrl.u32 %v1386, 16
      %v1421 = vshll.u32 %v1386, 16
      %v1423 = vrot.slane %v1421, 1
      %v1424 = vor.u32 %v1419, %v1423
      %v1426 = vshll.u32 %v1410, 16
      %v1428 = vrot.slane %v1426, 1
      %v1429 = vsel %vm289, %v1424, %v1428
      %v1431 = vshrl.u32 %v1387, 16
      %v1433 = vshll.u32 %v1387, 16
      %v1435 = vrot.slane %v1433, 1
      %v1436 = vor.u32 %v1431, %v1435
      %v1438 = vshll.u32 %v1411, 16
      %v1440 = vrot.slane %v1438, 1
      %v1441 = vsel %vm289, %v1436, %v1440
      %v1443 = vshrl.u32 %v1388, 16
      %v1445 = vshll.u32 %v1388, 16
      %v1447 = vrot.slane %v1445, 1
      %v1448 = vor.u32 %v1443, %v1447
      %v1450 = vshll.u32 %v1412, 16
      %v1452 = vrot.slane %v1450, 1
      %v1453 = vsel %vm289, %v1448, %v1452
      %v1455 = vshrl.u32 %v1389, 16
      %v1457 = vshll.u32 %v1389, 16
      %v1459 = vrot.slane %v1457, 1
      %v1460 = vor.u32 %v1455, %v1459
      %v1462 = vshll.u32 %v1413, 16
      %v1464 = vrot.slane %v1462, 1
      %v1465 = vsel %vm289, %v1460, %v1464
      %v1467 = vshrl.u32 %v1390, 16
      %v1469 = vshll.u32 %v1390, 16
      %v1471 = vrot.slane %v1469, 1
      %v1472 = vor.u32 %v1467, %v1471
      %v1474 = vshll.u32 %v1414, 16
      %v1476 = vrot.slane %v1474, 1
      %v1477 = vsel %vm289, %v1472, %v1476
      %v1479 = vshrl.u32 %v1391, 16
      %v1481 = vshll.u32 %v1391, 16
      %v1483 = vrot.slane %v1481, 1
      %v1484 = vor.u32 %v1479, %v1483
      %v1486 = vshll.u32 %v1415, 16
      %v1488 = vrot.slane %v1486, 1
      %v1489 = vsel %vm289, %v1484, %v1488
      %v1491 = vshrl.u32 %v1392, 16
      %v1493 = vshll.u32 %v1392, 16
      %v1495 = vrot.slane %v1493, 1
      %v1496 = vor.u32 %v1491, %v1495
      %v1498 = vshll.u32 %v1416, 16
      %v1500 = vrot.slane %v1498, 1
      %v1501 = vsel %vm289, %v1496, %v1500
      %v1503 = vshrl.u32 %v1393, 16
      %v1505 = vshll.u32 %v1393, 16
      %v1507 = vrot.slane %v1505, 1
      %v1508 = vor.u32 %v1503, %v1507
      %v1510 = vshll.u32 %v1417, 16
      %v1512 = vrot.slane %v1510, 1
      %v1513 = vsel %vm289, %v1508, %v1512
      %1514 = vrot.lane.b32.xlu0 %v1429, 2
      %v1515 = vpop.permute.xlu0 %1514
      %1516 = vrot.lane.b32.xlu0 %v1441, 2
      %v1517 = vpop.permute.xlu0 %1516
      %1518 = vrot.lane.b32.xlu0 %v1453, 2
      %v1519 = vpop.permute.xlu0 %1518
      %1520 = vrot.lane.b32.xlu0 %v1465, 2
      %v1521 = vpop.permute.xlu0 %1520
      %1522 = vrot.lane.b32.xlu0 %v1477, 2
      %v1523 = vpop.permute.xlu0 %1522
      %1524 = vrot.lane.b32.xlu0 %v1489, 2
      %v1525 = vpop.permute.xlu0 %1524
      %1526 = vrot.lane.b32.xlu0 %v1501, 2
      %v1527 = vpop.permute.xlu0 %1526
      %1528 = vrot.lane.b32.xlu0 %v1513, 2
      %v1529 = vpop.permute.xlu0 %1528
      %v1530 = vrot.slane %v1386, 1
      %v1531 = vrot.slane %v1410, 1
      %v1532 = vsel %vm402, %v1530, %v1531
      %v1533 = vrot.slane %v1387, 1
      %v1534 = vrot.slane %v1411, 1
      %v1535 = vsel %vm402, %v1533, %v1534
      %v1536 = vrot.slane %v1388, 1
      %v1537 = vrot.slane %v1412, 1
      %v1538 = vsel %vm402, %v1536, %v1537
      %v1539 = vrot.slane %v1389, 1
      %v1540 = vrot.slane %v1413, 1
      %v1541 = vsel %vm402, %v1539, %v1540
      %v1542 = vrot.slane %v1390, 1
      %v1543 = vrot.slane %v1414, 1
      %v1544 = vsel %vm402, %v1542, %v1543
      %v1545 = vrot.slane %v1391, 1
      %v1546 = vrot.slane %v1415, 1
      %v1547 = vsel %vm402, %v1545, %v1546
      %v1548 = vrot.slane %v1392, 1
      %v1549 = vrot.slane %v1416, 1
      %v1550 = vsel %vm402, %v1548, %v1549
      %v1551 = vrot.slane %v1393, 1
      %v1552 = vrot.slane %v1417, 1
      %v1553 = vsel %vm402, %v1551, %v1552
      %1554 = vrot.lane.b32.xlu0 %v1532, 4
      %v1555 = vpop.permute.xlu0 %1554
      %1556 = vrot.lane.b32.xlu0 %v1535, 4
      %v1557 = vpop.permute.xlu0 %1556
      %1558 = vrot.lane.b32.xlu0 %v1538, 4
      %v1559 = vpop.permute.xlu0 %1558
      %1560 = vrot.lane.b32.xlu0 %v1541, 4
      %v1561 = vpop.permute.xlu0 %1560
      %1562 = vrot.lane.b32.xlu0 %v1544, 4
      %v1563 = vpop.permute.xlu0 %1562
      %1564 = vrot.lane.b32.xlu0 %v1547, 4
      %v1565 = vpop.permute.xlu0 %1564
      %1566 = vrot.lane.b32.xlu0 %v1550, 4
      %v1567 = vpop.permute.xlu0 %1566
      %1568 = vrot.lane.b32.xlu0 %v1553, 4
      %v1569 = vpop.permute.xlu0 %1568
      %v1570 = vrot.slane %v1419, 1
      %v1571 = vrot.slane %v1421, 2
      %v1572 = vor.u32 %v1570, %v1571
      %v1573 = vshrl.u32 %v1410, 16
      %v1575 = vrot.slane %v1573, 1
      %v1576 = vrot.slane %v1426, 2
      %v1577 = vor.u32 %v1575, %v1576
      %v1578 = vsel %vm443, %v1572, %v1577
      %v1579 = vrot.slane %v1431, 1
      %v1580 = vrot.slane %v1433, 2
      %v1581 = vor.u32 %v1579, %v1580
      %v1582 = vshrl.u32 %v1411, 16
      %v1584 = vrot.slane %v1582, 1
      %v1585 = vrot.slane %v1438, 2
      %v1586 = vor.u32 %v1584, %v1585
      %v1587 = vsel %vm443, %v1581, %v1586
      %v1588 = vrot.slane %v1443, 1
      %v1589 = vrot.slane %v1445, 2
      %v1590 = vor.u32 %v1588, %v1589
      %v1591 = vshrl.u32 %v1412, 16
      %v1593 = vrot.slane %v1591, 1
      %v1594 = vrot.slane %v1450, 2
      %v1595 = vor.u32 %v1593, %v1594
      %v1596 = vsel %vm443, %v1590, %v1595
      %v1597 = vrot.slane %v1455, 1
      %v1598 = vrot.slane %v1457, 2
      %v1599 = vor.u32 %v1597, %v1598
      %v1600 = vshrl.u32 %v1413, 16
      %v1602 = vrot.slane %v1600, 1
      %v1603 = vrot.slane %v1462, 2
      %v1604 = vor.u32 %v1602, %v1603
      %v1605 = vsel %vm443, %v1599, %v1604
      %v1606 = vrot.slane %v1467, 1
      %v1607 = vrot.slane %v1469, 2
      %v1608 = vor.u32 %v1606, %v1607
      %v1609 = vshrl.u32 %v1414, 16
      %v1611 = vrot.slane %v1609, 1
      %v1612 = vrot.slane %v1474, 2
      %v1613 = vor.u32 %v1611, %v1612
      %v1614 = vsel %vm443, %v1608, %v1613
      %v1615 = vrot.slane %v1479, 1
      %v1616 = vrot.slane %v1481, 2
      %v1617 = vor.u32 %v1615, %v1616
      %v1618 = vshrl.u32 %v1415, 16
      %v1620 = vrot.slane %v1618, 1
      %v1621 = vrot.slane %v1486, 2
      %v1622 = vor.u32 %v1620, %v1621
      %v1623 = vsel %vm443, %v1617, %v1622
      %v1624 = vrot.slane %v1491, 1
      %v1625 = vrot.slane %v1493, 2
      %v1626 = vor.u32 %v1624, %v1625
      %v1627 = vshrl.u32 %v1416, 16
      %v1629 = vrot.slane %v1627, 1
      %v1630 = vrot.slane %v1498, 2
      %v1631 = vor.u32 %v1629, %v1630
      %v1632 = vsel %vm443, %v1626, %v1631
      %v1633 = vrot.slane %v1503, 1
      %v1634 = vrot.slane %v1505, 2
      %v1635 = vor.u32 %v1633, %v1634
      %v1636 = vshrl.u32 %v1417, 16
      %v1638 = vrot.slane %v1636, 1
      %v1639 = vrot.slane %v1510, 2
      %v1640 = vor.u32 %v1638, %v1639
      %v1641 = vsel %vm443, %v1635, %v1640
      %1642 = vrot.lane.b32.xlu0 %v1578, 6
      %v1643 = vpop.permute.xlu0 %1642
      %1644 = vrot.lane.b32.xlu0 %v1587, 6
      %v1645 = vpop.permute.xlu0 %1644
      %1646 = vrot.lane.b32.xlu0 %v1596, 6
      %v1647 = vpop.permute.xlu0 %1646
      %1648 = vrot.lane.b32.xlu0 %v1605, 6
      %v1649 = vpop.permute.xlu0 %1648
      %1650 = vrot.lane.b32.xlu0 %v1614, 6
      %v1651 = vpop.permute.xlu0 %1650
      %1652 = vrot.lane.b32.xlu0 %v1623, 6
      %v1653 = vpop.permute.xlu0 %1652
      %1654 = vrot.lane.b32.xlu0 %v1632, 6
      %v1655 = vpop.permute.xlu0 %1654
      %1656 = vrot.lane.b32.xlu0 %v1641, 6
      %v1657 = vpop.permute.xlu0 %1656
      %v1658 = vrot.slane %v1386, 2
      %v1659 = vrot.slane %v1410, 2
      %v1660 = vsel %vm532, %v1658, %v1659
      %v1661 = vrot.slane %v1387, 2
      %v1662 = vrot.slane %v1411, 2
      %v1663 = vsel %vm532, %v1661, %v1662
      %v1664 = vrot.slane %v1388, 2
      %v1665 = vrot.slane %v1412, 2
      %v1666 = vsel %vm532, %v1664, %v1665
      %v1667 = vrot.slane %v1389, 2
      %v1668 = vrot.slane %v1413, 2
      %v1669 = vsel %vm532, %v1667, %v1668
      %v1670 = vrot.slane %v1390, 2
      %v1671 = vrot.slane %v1414, 2
      %v1672 = vsel %vm532, %v1670, %v1671
      %v1673 = vrot.slane %v1391, 2
      %v1674 = vrot.slane %v1415, 2
      %v1675 = vsel %vm532, %v1673, %v1674
      %v1676 = vrot.slane %v1392, 2
      %v1677 = vrot.slane %v1416, 2
      %v1678 = vsel %vm532, %v1676, %v1677
      %v1679 = vrot.slane %v1393, 2
      %v1680 = vrot.slane %v1417, 2
      %v1681 = vsel %vm532, %v1679, %v1680
      %1682 = vrot.lane.b32.xlu0 %v1660, 8
      %v1683 = vpop.permute.xlu0 %1682
      %1684 = vrot.lane.b32.xlu0 %v1663, 8
      %v1685 = vpop.permute.xlu0 %1684
      %1686 = vrot.lane.b32.xlu0 %v1666, 8
      %v1687 = vpop.permute.xlu0 %1686
      %1688 = vrot.lane.b32.xlu0 %v1669, 8
      %v1689 = vpop.permute.xlu0 %1688
      %1690 = vrot.lane.b32.xlu0 %v1672, 8
      %v1691 = vpop.permute.xlu0 %1690
      %1692 = vrot.lane.b32.xlu0 %v1675, 8
      %v1693 = vpop.permute.xlu0 %1692
      %1694 = vrot.lane.b32.xlu0 %v1678, 8
      %v1695 = vpop.permute.xlu0 %1694
      %1696 = vrot.lane.b32.xlu0 %v1681, 8
      %v1697 = vpop.permute.xlu0 %1696
      %v1699 = vsel %vm573, %v1386, %v1515
      %v1701 = vsel %vm573, %v1387, %v1517
      %v1703 = vsel %vm573, %v1388, %v1519
      %v1705 = vsel %vm573, %v1389, %v1521
      %v1707 = vsel %vm573, %v1390, %v1523
      %v1709 = vsel %vm573, %v1391, %v1525
      %v1711 = vsel %vm573, %v1392, %v1527
      %v1713 = vsel %vm573, %v1393, %v1529
      %v1715 = vsel %vm590, %v1699, %v1555
      %v1717 = vsel %vm590, %v1701, %v1557
      %v1719 = vsel %vm590, %v1703, %v1559
      %v1721 = vsel %vm590, %v1705, %v1561
      %v1723 = vsel %vm590, %v1707, %v1563
      %v1725 = vsel %vm590, %v1709, %v1565
      %v1727 = vsel %vm590, %v1711, %v1567
      %v1729 = vsel %vm590, %v1713, %v1569
      %v1731 = vsel %vm607, %v1715, %v1643
      %v1733 = vsel %vm607, %v1717, %v1645
      %v1735 = vsel %vm607, %v1719, %v1647
      %v1737 = vsel %vm607, %v1721, %v1649
      %v1739 = vsel %vm607, %v1723, %v1651
      %v1741 = vsel %vm607, %v1725, %v1653
      %v1743 = vsel %vm607, %v1727, %v1655
      %v1745 = vsel %vm607, %v1729, %v1657
      %v1747 = vsel %vm624, %v1731, %v1683
      %v1749 = vsel %vm624, %v1733, %v1685
      %v1751 = vsel %vm624, %v1735, %v1687
      %v1753 = vsel %vm624, %v1737, %v1689
      %v1755 = vsel %vm624, %v1739, %v1691
      %v1757 = vsel %vm624, %v1741, %v1693
      %v1759 = vsel %vm624, %v1743, %v1695
      %v1761 = vsel %vm624, %v1745, %v1697
      %s1762 = scalar_lea.vmem %s1, 16
      %v1763 = vld [vmem:[%s1762] sm:$0xf]
      %v1764 = vld [vmem:[%s1762 + $0x4] sm:$0x1]
      %v1767 = vunpack.c.l.b16 %v1763
      %v1768 = vunpack.c.l.b16 %v1764
      %v1769 = vpack.c.b16 %v1768, %v1767
      %v1770 = vsel %vm1087, %v1747, 0
      %v1772 = vsel %vm1087, %v1749, 0
      %v1774 = vsel %vm1087, %v1751, 0
      %v1776 = vsel %vm1087, %v1753, 0
      %v1778 = vsel %vm1087, %v1755, 0
      %v1780 = vsel %vm1087, %v1757, 0
      %v1782 = vsel %vm1087, %v1759, 0
      %v1784 = vsel %vm1087, %v1761, 0
      %v1787 = vsel %vm1104, %v1769, 0
      %1789 = vmatprep.subr.bf16.mxu0 0
      %1790 = vmatpush1.bf16.msra.mxu0 %v1787
      %1791 = vmatprep.subr.bf16.mxu0 0
      %1792 = vmatpush1.bf16.msra.mxu0 0
      %1793 = vmatprep.subr.bf16.mxu0 0
      %1794 = vmatpush1.bf16.msra.mxu0 0
      %1795 = vmatprep.subr.bf16.mxu0 0
      %1796 = vmatpush1.bf16.msra.mxu0 0
      %1797 = vmatprep.subr.bf16.mxu0 0
      %1798 = vmatpush1.bf16.msra.mxu0 0
      %1799 = vmatprep.subr.bf16.mxu0 0
      %1800 = vmatpush1.bf16.msra.mxu0 0
      %1801 = vmatprep.subr.bf16.mxu0 0
      %1802 = vmatpush1.bf16.msra.mxu0 0
      %1803 = vmatprep.subr.bf16.mxu0 0
      %1804 = vmatpush1.bf16.msra.mxu0 0
      %1805 = vmatprep.subr.bf16.mxu0 0
      %1806 = vmatpush1.bf16.msra.mxu0 0
      %1807 = vmatprep.subr.bf16.mxu0 0
      %1808 = vmatpush1.bf16.msra.mxu0 0
      %1809 = vmatprep.subr.bf16.mxu0 0
      %1810 = vmatpush1.bf16.msra.mxu0 0
      %1811 = vmatprep.subr.bf16.mxu0 0
      %1812 = vmatpush1.bf16.msra.mxu0 0
      %1813 = vmatprep.subr.bf16.mxu0 0
      %1814 = vmatpush1.bf16.msra.mxu0 0
      %1815 = vmatprep.subr.bf16.mxu0 0
      %1816 = vmatpush1.bf16.msra.mxu0 0
      %1817 = vmatprep.subr.bf16.mxu0 0
      %1818 = vmatpush1.bf16.msra.mxu0 0
      %1819 = vmatprep.subr.bf16.mxu0 0
      %1820 = vmatpush1.bf16.msra.mxu0 0
      %1821 = vmatprep.mubr.bf16.mxu0 0
      %1822 = vmatmul.mubr.bf16.gmra.mrb[0].mxu0 %v1770
      %v1823 = vpop.f32.mrb[0].mxu0
      %v1824 = vadd.f32 0.0, %v1823
      %v1825 = vpop.f32.mrb[0].mxu0
      %v1826 = vpop.f32.mrb[0].mxu0
      %v1827 = vadd.f32 0.0, %v1826
      %v1828 = vpop.f32.mrb[0].mxu0
      %1829 = vmatprep.mubr.bf16.mxu0 0
      %1830 = vmatmul.mubr.bf16.gmra.mrb[0].mxu0 %v1772
      %v1831 = vpop.f32.mrb[0].mxu0
      %v1832 = vadd.f32 0.0, %v1831
      %v1833 = vpop.f32.mrb[0].mxu0
      %v1834 = vpop.f32.mrb[0].mxu0
      %v1835 = vadd.f32 0.0, %v1834
      %v1836 = vpop.f32.mrb[0].mxu0
      %1837 = vmatprep.mubr.bf16.mxu0 0
      %1838 = vmatmul.mubr.bf16.gmra.mrb[0].mxu0 %v1774
      %v1839 = vpop.f32.mrb[0].mxu0
      %v1840 = vadd.f32 0.0, %v1839
      %v1841 = vpop.f32.mrb[0].mxu0
      %v1842 = vpop.f32.mrb[0].mxu0
      %v1843 = vadd.f32 0.0, %v1842
      %v1844 = vpop.f32.mrb[0].mxu0
      %1845 = vmatprep.mubr.bf16.mxu0 0
      %1846 = vmatmul.mubr.bf16.gmra.mrb[0].mxu0 %v1776
      %v1847 = vpop.f32.mrb[0].mxu0
      %v1848 = vadd.f32 0.0, %v1847
      %v1849 = vpop.f32.mrb[0].mxu0
      %v1850 = vpop.f32.mrb[0].mxu0
      %v1851 = vadd.f32 0.0, %v1850
      %v1852 = vpop.f32.mrb[0].mxu0
      %1853 = vmatprep.mubr.bf16.mxu0 0
      %1854 = vmatmul.mubr.bf16.gmra.mrb[0].mxu0 %v1778
      %v1855 = vpop.f32.mrb[0].mxu0
      %v1856 = vadd.f32 0.0, %v1855
      %v1857 = vpop.f32.mrb[0].mxu0
      %v1858 = vpop.f32.mrb[0].mxu0
      %v1859 = vadd.f32 0.0, %v1858
      %v1860 = vpop.f32.mrb[0].mxu0
      %1861 = vmatprep.mubr.bf16.mxu0 0
      %1862 = vmatmul.mubr.bf16.gmra.mrb[0].mxu0 %v1780
      %v1863 = vpop.f32.mrb[0].mxu0
      %v1864 = vadd.f32 0.0, %v1863
      %v1865 = vpop.f32.mrb[0].mxu0
      %v1866 = vpop.f32.mrb[0].mxu0
      %v1867 = vadd.f32 0.0, %v1866
      %v1868 = vpop.f32.mrb[0].mxu0
      %1869 = vmatprep.mubr.bf16.mxu0 0
      %1870 = vmatmul.mubr.bf16.gmra.mrb[0].mxu0 %v1782
      %v1871 = vpop.f32.mrb[0].mxu0
      %v1872 = vadd.f32 0.0, %v1871
      %v1873 = vpop.f32.mrb[0].mxu0
      %v1874 = vpop.f32.mrb[0].mxu0
      %v1875 = vadd.f32 0.0, %v1874
      %v1876 = vpop.f32.mrb[0].mxu0
      %1877 = vmatprep.mubr.bf16.mxu0 0
      %1878 = vmatmul.mubr.bf16.gmra.mrb[0].mxu0 %v1784
      %v1879 = vpop.f32.mrb[0].mxu0
      %v1880 = vadd.f32 0.0, %v1879
      %v1881 = vpop.f32.mrb[0].mxu0
      %v1882 = vpop.f32.mrb[0].mxu0
      %v1883 = vadd.f32 0.0, %v1882
      %v1884 = vpop.f32.mrb[0].mxu0
      %1885 = vdwg.mxu0
      %v1886 = vadd.f32 %v1264, %v1824
      %v1887 = vadd.f32 %v1267, %v1827
      %v1888 = vadd.f32 %v1272, %v1832
      %v1889 = vadd.f32 %v1275, %v1835
      %v1890 = vadd.f32 %v1280, %v1840
      %v1891 = vadd.f32 %v1283, %v1843
      %v1892 = vadd.f32 %v1288, %v1848
      %v1893 = vadd.f32 %v1291, %v1851
      %v1894 = vadd.f32 %v1296, %v1856
      %v1895 = vadd.f32 %v1299, %v1859
      %v1896 = vadd.f32 %v1304, %v1864
      %v1897 = vadd.f32 %v1307, %v1867
      %v1898 = vadd.f32 %v1312, %v1872
      %v1899 = vadd.f32 %v1315, %v1875
      %v1900 = vadd.f32 %v1320, %v1880
      %v1901 = vadd.f32 %v1323, %v1883
      %s1902 = sadd.s32 %s197, 3
      %s1903 = smul.u32 %s1902, 3
      %s1904 = smul.addr %s1903, 4
      %s1905 = scalar_lea.vmem %s184, %s1904
      %v1906 = vld [vmem:[%s1905] sm:$0xf]
      %v1907 = vld [vmem:[%s1905 + $0x4] sm:$0xf]
      %v1908 = vld [vmem:[%s1905 + $0x8] sm:$0x3]
      %v1909 = vld [vmem:[%s1905 + $0xc] sm:$0xf]
      %v1910 = vld [vmem:[%s1905 + $0x10] sm:$0xf]
      %v1911 = vld [vmem:[%s1905 + $0x14] sm:$0x3]
      %v1912 = vld [vmem:[%s1905 + $0x18] sm:$0xf]
      %v1913 = vld [vmem:[%s1905 + $0x1c] sm:$0xf]
      %v1914 = vld [vmem:[%s1905 + $0x20] sm:$0x3]
      %v1915 = vld [vmem:[%s1905 + $0x24] sm:$0xf]
      %v1916 = vld [vmem:[%s1905 + $0x28] sm:$0xf]
      %v1917 = vld [vmem:[%s1905 + $0x2c] sm:$0x3]
      %v1918 = vld [vmem:[%s1905 + $0x30] sm:$0xf]
      %v1919 = vld [vmem:[%s1905 + $0x34] sm:$0xf]
      %v1920 = vld [vmem:[%s1905 + $0x38] sm:$0x3]
      %v1921 = vld [vmem:[%s1905 + $0x3c] sm:$0xf]
      %v1922 = vld [vmem:[%s1905 + $0x40] sm:$0xf]
      %v1923 = vld [vmem:[%s1905 + $0x44] sm:$0x3]
      %v1924 = vld [vmem:[%s1905 + $0x48] sm:$0xf]
      %v1925 = vld [vmem:[%s1905 + $0x4c] sm:$0xf]
      %v1926 = vld [vmem:[%s1905 + $0x50] sm:$0x3]
      %v1927 = vld [vmem:[%s1905 + $0x54] sm:$0xf]
      %v1928 = vld [vmem:[%s1905 + $0x58] sm:$0xf]
      %v1929 = vld [vmem:[%s1905 + $0x5c] sm:$0x3]
      %v1946 = vunpack.c.l.b16 %v1906
      %v1947 = vunpack.c.l.b16 %v1907
      %v1948 = vunpack.c.l.b16 %v1909
      %v1949 = vunpack.c.l.b16 %v1910
      %v1950 = vunpack.c.l.b16 %v1912
      %v1951 = vunpack.c.l.b16 %v1913
      %v1952 = vunpack.c.l.b16 %v1915
      %v1953 = vunpack.c.l.b16 %v1916
      %v1954 = vunpack.c.l.b16 %v1918
      %v1955 = vunpack.c.l.b16 %v1919
      %v1956 = vunpack.c.l.b16 %v1921
      %v1957 = vunpack.c.l.b16 %v1922
      %v1958 = vunpack.c.l.b16 %v1924
      %v1959 = vunpack.c.l.b16 %v1925
      %v1960 = vunpack.c.l.b16 %v1927
      %v1961 = vunpack.c.l.b16 %v1928
      %v1962 = vpack.c.b16 %v1947, %v1946
      %v1963 = vpack.c.b16 %v1949, %v1948
      %v1964 = vpack.c.b16 %v1951, %v1950
      %v1965 = vpack.c.b16 %v1953, %v1952
      %v1966 = vpack.c.b16 %v1955, %v1954
      %v1967 = vpack.c.b16 %v1957, %v1956
      %v1968 = vpack.c.b16 %v1959, %v1958
      %v1969 = vpack.c.b16 %v1961, %v1960
      %v1978 = vunpack.c.l.b16 %v1908
      %v1979 = vunpack.c.l.b16 %v1911
      %v1980 = vunpack.c.l.b16 %v1914
      %v1981 = vunpack.c.l.b16 %v1917
      %v1982 = vunpack.c.l.b16 %v1920
      %v1983 = vunpack.c.l.b16 %v1923
      %v1984 = vunpack.c.l.b16 %v1926
      %v1985 = vunpack.c.l.b16 %v1929
      %v1986 = vpack.c.b16 %v1978, %v1978
      %v1987 = vpack.c.b16 %v1979, %v1979
      %v1988 = vpack.c.b16 %v1980, %v1980
      %v1989 = vpack.c.b16 %v1981, %v1981
      %v1990 = vpack.c.b16 %v1982, %v1982
      %v1991 = vpack.c.b16 %v1983, %v1983
      %v1992 = vpack.c.b16 %v1984, %v1984
      %v1993 = vpack.c.b16 %v1985, %v1985
      %v1995 = vshrl.u32 %v1962, 16
      %v1997 = vshll.u32 %v1962, 16
      %v1999 = vrot.slane %v1997, 1
      %v2000 = vor.u32 %v1995, %v1999
      %v2002 = vshll.u32 %v1986, 16
      %v2004 = vrot.slane %v2002, 1
      %v2005 = vsel %vm289, %v2000, %v2004
      %v2007 = vshrl.u32 %v1963, 16
      %v2009 = vshll.u32 %v1963, 16
      %v2011 = vrot.slane %v2009, 1
      %v2012 = vor.u32 %v2007, %v2011
      %v2014 = vshll.u32 %v1987, 16
      %v2016 = vrot.slane %v2014, 1
      %v2017 = vsel %vm289, %v2012, %v2016
      %v2019 = vshrl.u32 %v1964, 16
      %v2021 = vshll.u32 %v1964, 16
      %v2023 = vrot.slane %v2021, 1
      %v2024 = vor.u32 %v2019, %v2023
      %v2026 = vshll.u32 %v1988, 16
      %v2028 = vrot.slane %v2026, 1
      %v2029 = vsel %vm289, %v2024, %v2028
      %v2031 = vshrl.u32 %v1965, 16
      %v2033 = vshll.u32 %v1965, 16
      %v2035 = vrot.slane %v2033, 1
      %v2036 = vor.u32 %v2031, %v2035
      %v2038 = vshll.u32 %v1989, 16
      %v2040 = vrot.slane %v2038, 1
      %v2041 = vsel %vm289, %v2036, %v2040
      %v2043 = vshrl.u32 %v1966, 16
      %v2045 = vshll.u32 %v1966, 16
      %v2047 = vrot.slane %v2045, 1
      %v2048 = vor.u32 %v2043, %v2047
      %v2050 = vshll.u32 %v1990, 16
      %v2052 = vrot.slane %v2050, 1
      %v2053 = vsel %vm289, %v2048, %v2052
      %v2055 = vshrl.u32 %v1967, 16
      %v2057 = vshll.u32 %v1967, 16
      %v2059 = vrot.slane %v2057, 1
      %v2060 = vor.u32 %v2055, %v2059
      %v2062 = vshll.u32 %v1991, 16
      %v2064 = vrot.slane %v2062, 1
      %v2065 = vsel %vm289, %v2060, %v2064
      %v2067 = vshrl.u32 %v1968, 16
      %v2069 = vshll.u32 %v1968, 16
      %v2071 = vrot.slane %v2069, 1
      %v2072 = vor.u32 %v2067, %v2071
      %v2074 = vshll.u32 %v1992, 16
      %v2076 = vrot.slane %v2074, 1
      %v2077 = vsel %vm289, %v2072, %v2076
      %v2079 = vshrl.u32 %v1969, 16
      %v2081 = vshll.u32 %v1969, 16
      %v2083 = vrot.slane %v2081, 1
      %v2084 = vor.u32 %v2079, %v2083
      %v2086 = vshll.u32 %v1993, 16
      %v2088 = vrot.slane %v2086, 1
      %v2089 = vsel %vm289, %v2084, %v2088
      %2090 = vrot.lane.b32.xlu0 %v2005, 2
      %v2091 = vpop.permute.xlu0 %2090
      %2092 = vrot.lane.b32.xlu0 %v2017, 2
      %v2093 = vpop.permute.xlu0 %2092
      %2094 = vrot.lane.b32.xlu0 %v2029, 2
      %v2095 = vpop.permute.xlu0 %2094
      %2096 = vrot.lane.b32.xlu0 %v2041, 2
      %v2097 = vpop.permute.xlu0 %2096
      %2098 = vrot.lane.b32.xlu0 %v2053, 2
      %v2099 = vpop.permute.xlu0 %2098
      %2100 = vrot.lane.b32.xlu0 %v2065, 2
      %v2101 = vpop.permute.xlu0 %2100
      %2102 = vrot.lane.b32.xlu0 %v2077, 2
      %v2103 = vpop.permute.xlu0 %2102
      %2104 = vrot.lane.b32.xlu0 %v2089, 2
      %v2105 = vpop.permute.xlu0 %2104
      %v2106 = vrot.slane %v1962, 1
      %v2107 = vrot.slane %v1986, 1
      %v2108 = vsel %vm402, %v2106, %v2107
      %v2109 = vrot.slane %v1963, 1
      %v2110 = vrot.slane %v1987, 1
      %v2111 = vsel %vm402, %v2109, %v2110
      %v2112 = vrot.slane %v1964, 1
      %v2113 = vrot.slane %v1988, 1
      %v2114 = vsel %vm402, %v2112, %v2113
      %v2115 = vrot.slane %v1965, 1
      %v2116 = vrot.slane %v1989, 1
      %v2117 = vsel %vm402, %v2115, %v2116
      %v2118 = vrot.slane %v1966, 1
      %v2119 = vrot.slane %v1990, 1
      %v2120 = vsel %vm402, %v2118, %v2119
      %v2121 = vrot.slane %v1967, 1
      %v2122 = vrot.slane %v1991, 1
      %v2123 = vsel %vm402, %v2121, %v2122
      %v2124 = vrot.slane %v1968, 1
      %v2125 = vrot.slane %v1992, 1
      %v2126 = vsel %vm402, %v2124, %v2125
      %v2127 = vrot.slane %v1969, 1
      %v2128 = vrot.slane %v1993, 1
      %v2129 = vsel %vm402, %v2127, %v2128
      %2130 = vrot.lane.b32.xlu0 %v2108, 4
      %v2131 = vpop.permute.xlu0 %2130
      %2132 = vrot.lane.b32.xlu0 %v2111, 4
      %v2133 = vpop.permute.xlu0 %2132
      %2134 = vrot.lane.b32.xlu0 %v2114, 4
      %v2135 = vpop.permute.xlu0 %2134
      %2136 = vrot.lane.b32.xlu0 %v2117, 4
      %v2137 = vpop.permute.xlu0 %2136
      %2138 = vrot.lane.b32.xlu0 %v2120, 4
      %v2139 = vpop.permute.xlu0 %2138
      %2140 = vrot.lane.b32.xlu0 %v2123, 4
      %v2141 = vpop.permute.xlu0 %2140
      %2142 = vrot.lane.b32.xlu0 %v2126, 4
      %v2143 = vpop.permute.xlu0 %2142
      %2144 = vrot.lane.b32.xlu0 %v2129, 4
      %v2145 = vpop.permute.xlu0 %2144
      %v2146 = vrot.slane %v1995, 1
      %v2147 = vrot.slane %v1997, 2
      %v2148 = vor.u32 %v2146, %v2147
      %v2149 = vshrl.u32 %v1986, 16
      %v2151 = vrot.slane %v2149, 1
      %v2152 = vrot.slane %v2002, 2
      %v2153 = vor.u32 %v2151, %v2152
      %v2154 = vsel %vm443, %v2148, %v2153
      %v2155 = vrot.slane %v2007, 1
      %v2156 = vrot.slane %v2009, 2
      %v2157 = vor.u32 %v2155, %v2156
      %v2158 = vshrl.u32 %v1987, 16
      %v2160 = vrot.slane %v2158, 1
      %v2161 = vrot.slane %v2014, 2
      %v2162 = vor.u32 %v2160, %v2161
      %v2163 = vsel %vm443, %v2157, %v2162
      %v2164 = vrot.slane %v2019, 1
      %v2165 = vrot.slane %v2021, 2
      %v2166 = vor.u32 %v2164, %v2165
      %v2167 = vshrl.u32 %v1988, 16
      %v2169 = vrot.slane %v2167, 1
      %v2170 = vrot.slane %v2026, 2
      %v2171 = vor.u32 %v2169, %v2170
      %v2172 = vsel %vm443, %v2166, %v2171
      %v2173 = vrot.slane %v2031, 1
      %v2174 = vrot.slane %v2033, 2
      %v2175 = vor.u32 %v2173, %v2174
      %v2176 = vshrl.u32 %v1989, 16
      %v2178 = vrot.slane %v2176, 1
      %v2179 = vrot.slane %v2038, 2
      %v2180 = vor.u32 %v2178, %v2179
      %v2181 = vsel %vm443, %v2175, %v2180
      %v2182 = vrot.slane %v2043, 1
      %v2183 = vrot.slane %v2045, 2
      %v2184 = vor.u32 %v2182, %v2183
      %v2185 = vshrl.u32 %v1990, 16
      %v2187 = vrot.slane %v2185, 1
      %v2188 = vrot.slane %v2050, 2
      %v2189 = vor.u32 %v2187, %v2188
      %v2190 = vsel %vm443, %v2184, %v2189
      %v2191 = vrot.slane %v2055, 1
      %v2192 = vrot.slane %v2057, 2
      %v2193 = vor.u32 %v2191, %v2192
      %v2194 = vshrl.u32 %v1991, 16
      %v2196 = vrot.slane %v2194, 1
      %v2197 = vrot.slane %v2062, 2
      %v2198 = vor.u32 %v2196, %v2197
      %v2199 = vsel %vm443, %v2193, %v2198
      %v2200 = vrot.slane %v2067, 1
      %v2201 = vrot.slane %v2069, 2
      %v2202 = vor.u32 %v2200, %v2201
      %v2203 = vshrl.u32 %v1992, 16
      %v2205 = vrot.slane %v2203, 1
      %v2206 = vrot.slane %v2074, 2
      %v2207 = vor.u32 %v2205, %v2206
      %v2208 = vsel %vm443, %v2202, %v2207
      %v2209 = vrot.slane %v2079, 1
      %v2210 = vrot.slane %v2081, 2
      %v2211 = vor.u32 %v2209, %v2210
      %v2212 = vshrl.u32 %v1993, 16
      %v2214 = vrot.slane %v2212, 1
      %v2215 = vrot.slane %v2086, 2
      %v2216 = vor.u32 %v2214, %v2215
      %v2217 = vsel %vm443, %v2211, %v2216
      %2218 = vrot.lane.b32.xlu0 %v2154, 6
      %v2219 = vpop.permute.xlu0 %2218
      %2220 = vrot.lane.b32.xlu0 %v2163, 6
      %v2221 = vpop.permute.xlu0 %2220
      %2222 = vrot.lane.b32.xlu0 %v2172, 6
      %v2223 = vpop.permute.xlu0 %2222
      %2224 = vrot.lane.b32.xlu0 %v2181, 6
      %v2225 = vpop.permute.xlu0 %2224
      %2226 = vrot.lane.b32.xlu0 %v2190, 6
      %v2227 = vpop.permute.xlu0 %2226
      %2228 = vrot.lane.b32.xlu0 %v2199, 6
      %v2229 = vpop.permute.xlu0 %2228
      %2230 = vrot.lane.b32.xlu0 %v2208, 6
      %v2231 = vpop.permute.xlu0 %2230
      %2232 = vrot.lane.b32.xlu0 %v2217, 6
      %v2233 = vpop.permute.xlu0 %2232
      %v2234 = vrot.slane %v1962, 2
      %v2235 = vrot.slane %v1986, 2
      %v2236 = vsel %vm532, %v2234, %v2235
      %v2237 = vrot.slane %v1963, 2
      %v2238 = vrot.slane %v1987, 2
      %v2239 = vsel %vm532, %v2237, %v2238
      %v2240 = vrot.slane %v1964, 2
      %v2241 = vrot.slane %v1988, 2
      %v2242 = vsel %vm532, %v2240, %v2241
      %v2243 = vrot.slane %v1965, 2
      %v2244 = vrot.slane %v1989, 2
      %v2245 = vsel %vm532, %v2243, %v2244
      %v2246 = vrot.slane %v1966, 2
      %v2247 = vrot.slane %v1990, 2
      %v2248 = vsel %vm532, %v2246, %v2247
      %v2249 = vrot.slane %v1967, 2
      %v2250 = vrot.slane %v1991, 2
      %v2251 = vsel %vm532, %v2249, %v2250
      %v2252 = vrot.slane %v1968, 2
      %v2253 = vrot.slane %v1992, 2
      %v2254 = vsel %vm532, %v2252, %v2253
      %v2255 = vrot.slane %v1969, 2
      %v2256 = vrot.slane %v1993, 2
      %v2257 = vsel %vm532, %v2255, %v2256
      %2258 = vrot.lane.b32.xlu0 %v2236, 8
      %v2259 = vpop.permute.xlu0 %2258
      %2260 = vrot.lane.b32.xlu0 %v2239, 8
      %v2261 = vpop.permute.xlu0 %2260
      %2262 = vrot.lane.b32.xlu0 %v2242, 8
      %v2263 = vpop.permute.xlu0 %2262
      %2264 = vrot.lane.b32.xlu0 %v2245, 8
      %v2265 = vpop.permute.xlu0 %2264
      %2266 = vrot.lane.b32.xlu0 %v2248, 8
      %v2267 = vpop.permute.xlu0 %2266
      %2268 = vrot.lane.b32.xlu0 %v2251, 8
      %v2269 = vpop.permute.xlu0 %2268
      %2270 = vrot.lane.b32.xlu0 %v2254, 8
      %v2271 = vpop.permute.xlu0 %2270
      %2272 = vrot.lane.b32.xlu0 %v2257, 8
      %v2273 = vpop.permute.xlu0 %2272
      %v2275 = vsel %vm573, %v1962, %v2091
      %v2277 = vsel %vm573, %v1963, %v2093
      %v2279 = vsel %vm573, %v1964, %v2095
      %v2281 = vsel %vm573, %v1965, %v2097
      %v2283 = vsel %vm573, %v1966, %v2099
      %v2285 = vsel %vm573, %v1967, %v2101
      %v2287 = vsel %vm573, %v1968, %v2103
      %v2289 = vsel %vm573, %v1969, %v2105
      %v2291 = vsel %vm590, %v2275, %v2131
      %v2293 = vsel %vm590, %v2277, %v2133
      %v2295 = vsel %vm590, %v2279, %v2135
      %v2297 = vsel %vm590, %v2281, %v2137
      %v2299 = vsel %vm590, %v2283, %v2139
      %v2301 = vsel %vm590, %v2285, %v2141
      %v2303 = vsel %vm590, %v2287, %v2143
      %v2305 = vsel %vm590, %v2289, %v2145
      %v2307 = vsel %vm607, %v2291, %v2219
      %v2309 = vsel %vm607, %v2293, %v2221
      %v2311 = vsel %vm607, %v2295, %v2223
      %v2313 = vsel %vm607, %v2297, %v2225
      %v2315 = vsel %vm607, %v2299, %v2227
      %v2317 = vsel %vm607, %v2301, %v2229
      %v2319 = vsel %vm607, %v2303, %v2231
      %v2321 = vsel %vm607, %v2305, %v2233
      %v2323 = vsel %vm624, %v2307, %v2259
      %v2325 = vsel %vm624, %v2309, %v2261
      %v2327 = vsel %vm624, %v2311, %v2263
      %v2329 = vsel %vm624, %v2313, %v2265
      %v2331 = vsel %vm624, %v2315, %v2267
      %v2333 = vsel %vm624, %v2317, %v2269
      %v2335 = vsel %vm624, %v2319, %v2271
      %v2337 = vsel %vm624, %v2321, %v2273
      %s2338 = scalar_lea.vmem %s1, 24
      %v2339 = vld [vmem:[%s2338] sm:$0xf]
      %v2340 = vld [vmem:[%s2338 + $0x4] sm:$0x1]
      %v2343 = vunpack.c.l.b16 %v2339
      %v2344 = vunpack.c.l.b16 %v2340
      %v2345 = vpack.c.b16 %v2344, %v2343
      %v2346 = vsel %vm1087, %v2323, 0
      %v2348 = vsel %vm1087, %v2325, 0
      %v2350 = vsel %vm1087, %v2327, 0
      %v2352 = vsel %vm1087, %v2329, 0
      %v2354 = vsel %vm1087, %v2331, 0
      %v2356 = vsel %vm1087, %v2333, 0
      %v2358 = vsel %vm1087, %v2335, 0
      %v2360 = vsel %vm1087, %v2337, 0
      %v2363 = vsel %vm1104, %v2345, 0
      %2365 = vmatprep.subr.bf16.mxu0 0
      %2366 = vmatpush1.bf16.msra.mxu0 %v2363
      %2367 = vmatprep.subr.bf16.mxu0 0
      %2368 = vmatpush1.bf16.msra.mxu0 0
      %2369 = vmatprep.subr.bf16.mxu0 0
      %2370 = vmatpush1.bf16.msra.mxu0 0
      %2371 = vmatprep.subr.bf16.mxu0 0
      %2372 = vmatpush1.bf16.msra.mxu0 0
      %2373 = vmatprep.subr.bf16.mxu0 0
      %2374 = vmatpush1.bf16.msra.mxu0 0
      %2375 = vmatprep.subr.bf16.mxu0 0
      %2376 = vmatpush1.bf16.msra.mxu0 0
      %2377 = vmatprep.subr.bf16.mxu0 0
      %2378 = vmatpush1.bf16.msra.mxu0 0
      %2379 = vmatprep.subr.bf16.mxu0 0
      %2380 = vmatpush1.bf16.msra.mxu0 0
      %2381 = vmatprep.subr.bf16.mxu0 0
      %2382 = vmatpush1.bf16.msra.mxu0 0
      %2383 = vmatprep.subr.bf16.mxu0 0
      %2384 = vmatpush1.bf16.msra.mxu0 0
      %2385 = vmatprep.subr.bf16.mxu0 0
      %2386 = vmatpush1.bf16.msra.mxu0 0
      %2387 = vmatprep.subr.bf16.mxu0 0
      %2388 = vmatpush1.bf16.msra.mxu0 0
      %2389 = vmatprep.subr.bf16.mxu0 0
      %2390 = vmatpush1.bf16.msra.mxu0 0
      %2391 = vmatprep.subr.bf16.mxu0 0
      %2392 = vmatpush1.bf16.msra.mxu0 0
      %2393 = vmatprep.subr.bf16.mxu0 0
      %2394 = vmatpush1.bf16.msra.mxu0 0
      %2395 = vmatprep.subr.bf16.mxu0 0
      %2396 = vmatpush1.bf16.msra.mxu0 0
      %2397 = vmatprep.mubr.bf16.mxu0 0
      %2398 = vmatmul.mubr.bf16.gmra.mrb[0].mxu0 %v2346
      %v2399 = vpop.f32.mrb[0].mxu0
      %v2400 = vadd.f32 0.0, %v2399
      %v2401 = vpop.f32.mrb[0].mxu0
      %v2402 = vpop.f32.mrb[0].mxu0
      %v2403 = vadd.f32 0.0, %v2402
      %v2404 = vpop.f32.mrb[0].mxu0
      %2405 = vmatprep.mubr.bf16.mxu0 0
      %2406 = vmatmul.mubr.bf16.gmra.mrb[0].mxu0 %v2348
      %v2407 = vpop.f32.mrb[0].mxu0
      %v2408 = vadd.f32 0.0, %v2407
      %v2409 = vpop.f32.mrb[0].mxu0
      %v2410 = vpop.f32.mrb[0].mxu0
      %v2411 = vadd.f32 0.0, %v2410
      %v2412 = vpop.f32.mrb[0].mxu0
      %2413 = vmatprep.mubr.bf16.mxu0 0
      %2414 = vmatmul.mubr.bf16.gmra.mrb[0].mxu0 %v2350
      %v2415 = vpop.f32.mrb[0].mxu0
      %v2416 = vadd.f32 0.0, %v2415
      %v2417 = vpop.f32.mrb[0].mxu0
      %v2418 = vpop.f32.mrb[0].mxu0
      %v2419 = vadd.f32 0.0, %v2418
      %v2420 = vpop.f32.mrb[0].mxu0
      %2421 = vmatprep.mubr.bf16.mxu0 0
      %2422 = vmatmul.mubr.bf16.gmra.mrb[0].mxu0 %v2352
      %v2423 = vpop.f32.mrb[0].mxu0
      %v2424 = vadd.f32 0.0, %v2423
      %v2425 = vpop.f32.mrb[0].mxu0
      %v2426 = vpop.f32.mrb[0].mxu0
      %v2427 = vadd.f32 0.0, %v2426
      %v2428 = vpop.f32.mrb[0].mxu0
      %2429 = vmatprep.mubr.bf16.mxu0 0
      %2430 = vmatmul.mubr.bf16.gmra.mrb[0].mxu0 %v2354
      %v2431 = vpop.f32.mrb[0].mxu0
      %v2432 = vadd.f32 0.0, %v2431
      %v2433 = vpop.f32.mrb[0].mxu0
      %v2434 = vpop.f32.mrb[0].mxu0
      %v2435 = vadd.f32 0.0, %v2434
      %v2436 = vpop.f32.mrb[0].mxu0
      %2437 = vmatprep.mubr.bf16.mxu0 0
      %2438 = vmatmul.mubr.bf16.gmra.mrb[0].mxu0 %v2356
      %v2439 = vpop.f32.mrb[0].mxu0
      %v2440 = vadd.f32 0.0, %v2439
      %v2441 = vpop.f32.mrb[0].mxu0
      %v2442 = vpop.f32.mrb[0].mxu0
      %v2443 = vadd.f32 0.0, %v2442
      %v2444 = vpop.f32.mrb[0].mxu0
      %2445 = vmatprep.mubr.bf16.mxu0 0
      %2446 = vmatmul.mubr.bf16.gmra.mrb[0].mxu0 %v2358
      %v2447 = vpop.f32.mrb[0].mxu0
      %v2448 = vadd.f32 0.0, %v2447
      %v2449 = vpop.f32.mrb[0].mxu0
      %v2450 = vpop.f32.mrb[0].mxu0
      %v2451 = vadd.f32 0.0, %v2450
      %v2452 = vpop.f32.mrb[0].mxu0
      %2453 = vmatprep.mubr.bf16.mxu0 0
      %2454 = vmatmul.mubr.bf16.gmra.mrb[0].mxu0 %v2360
      %v2455 = vpop.f32.mrb[0].mxu0
      %v2456 = vadd.f32 0.0, %v2455
      %v2457 = vpop.f32.mrb[0].mxu0
      %v2458 = vpop.f32.mrb[0].mxu0
      %v2459 = vadd.f32 0.0, %v2458
      %v2460 = vpop.f32.mrb[0].mxu0
      %2461 = vdwg.mxu0
      %v2462 = vadd.f32 %v1886, %v2400
      %v2463 = vadd.f32 %v1887, %v2403
      %v2464 = vadd.f32 %v1888, %v2408
      %v2465 = vadd.f32 %v1889, %v2411
      %v2466 = vadd.f32 %v1890, %v2416
      %v2467 = vadd.f32 %v1891, %v2419
      %v2468 = vadd.f32 %v1892, %v2424
      %v2469 = vadd.f32 %v1893, %v2427
      %v2470 = vadd.f32 %v1894, %v2432
      %v2471 = vadd.f32 %v1895, %v2435
      %v2472 = vadd.f32 %v1896, %v2440
      %v2473 = vadd.f32 %v1897, %v2443
      %v2474 = vadd.f32 %v1898, %v2448
      %v2475 = vadd.f32 %v1899, %v2451
      %v2476 = vadd.f32 %v1900, %v2456
      %v2477 = vadd.f32 %v1901, %v2459
      %s2478 = sadd.s32 %s197, 4
      %s2479 = smul.u32 %s2478, 3
      %s2480 = smul.addr %s2479, 4
      %s2481 = scalar_lea.vmem %s184, %s2480
      %v2482 = vld [vmem:[%s2481] sm:$0xf]
      %v2483 = vld [vmem:[%s2481 + $0x4] sm:$0xf]
      %v2484 = vld [vmem:[%s2481 + $0x8] sm:$0x3]
      %v2485 = vld [vmem:[%s2481 + $0xc] sm:$0xf]
      %v2486 = vld [vmem:[%s2481 + $0x10] sm:$0xf]
      %v2487 = vld [vmem:[%s2481 + $0x14] sm:$0x3]
      %v2488 = vld [vmem:[%s2481 + $0x18] sm:$0xf]
      %v2489 = vld [vmem:[%s2481 + $0x1c] sm:$0xf]
      %v2490 = vld [vmem:[%s2481 + $0x20] sm:$0x3]
      %v2491 = vld [vmem:[%s2481 + $0x24] sm:$0xf]
      %v2492 = vld [vmem:[%s2481 + $0x28] sm:$0xf]
      %v2493 = vld [vmem:[%s2481 + $0x2c] sm:$0x3]
      %v2494 = vld [vmem:[%s2481 + $0x30] sm:$0xf]
      %v2495 = vld [vmem:[%s2481 + $0x34] sm:$0xf]
      %v2496 = vld [vmem:[%s2481 + $0x38] sm:$0x3]
      %v2497 = vld [vmem:[%s2481 + $0x3c] sm:$0xf]
      %v2498 = vld [vmem:[%s2481 + $0x40] sm:$0xf]
      %v2499 = vld [vmem:[%s2481 + $0x44] sm:$0x3]
      %v2500 = vld [vmem:[%s2481 + $0x48] sm:$0xf]
      %v2501 = vld [vmem:[%s2481 + $0x4c] sm:$0xf]
      %v2502 = vld [vmem:[%s2481 + $0x50] sm:$0x3]
      %v2503 = vld [vmem:[%s2481 + $0x54] sm:$0xf]
      %v2504 = vld [vmem:[%s2481 + $0x58] sm:$0xf]
      %v2505 = vld [vmem:[%s2481 + $0x5c] sm:$0x3]
      %v2522 = vunpack.c.l.b16 %v2482
      %v2523 = vunpack.c.l.b16 %v2483
      %v2524 = vunpack.c.l.b16 %v2485
      %v2525 = vunpack.c.l.b16 %v2486
      %v2526 = vunpack.c.l.b16 %v2488
      %v2527 = vunpack.c.l.b16 %v2489
      %v2528 = vunpack.c.l.b16 %v2491
      %v2529 = vunpack.c.l.b16 %v2492
      %v2530 = vunpack.c.l.b16 %v2494
      %v2531 = vunpack.c.l.b16 %v2495
      %v2532 = vunpack.c.l.b16 %v2497
      %v2533 = vunpack.c.l.b16 %v2498
      %v2534 = vunpack.c.l.b16 %v2500
      %v2535 = vunpack.c.l.b16 %v2501
      %v2536 = vunpack.c.l.b16 %v2503
      %v2537 = vunpack.c.l.b16 %v2504
      %v2538 = vpack.c.b16 %v2523, %v2522
      %v2539 = vpack.c.b16 %v2525, %v2524
      %v2540 = vpack.c.b16 %v2527, %v2526
      %v2541 = vpack.c.b16 %v2529, %v2528
      %v2542 = vpack.c.b16 %v2531, %v2530
      %v2543 = vpack.c.b16 %v2533, %v2532
      %v2544 = vpack.c.b16 %v2535, %v2534
      %v2545 = vpack.c.b16 %v2537, %v2536
      %v2554 = vunpack.c.l.b16 %v2484
      %v2555 = vunpack.c.l.b16 %v2487
      %v2556 = vunpack.c.l.b16 %v2490
      %v2557 = vunpack.c.l.b16 %v2493
      %v2558 = vunpack.c.l.b16 %v2496
      %v2559 = vunpack.c.l.b16 %v2499
      %v2560 = vunpack.c.l.b16 %v2502
      %v2561 = vunpack.c.l.b16 %v2505
      %v2562 = vpack.c.b16 %v2554, %v2554
      %v2563 = vpack.c.b16 %v2555, %v2555
      %v2564 = vpack.c.b16 %v2556, %v2556
      %v2565 = vpack.c.b16 %v2557, %v2557
      %v2566 = vpack.c.b16 %v2558, %v2558
      %v2567 = vpack.c.b16 %v2559, %v2559
      %v2568 = vpack.c.b16 %v2560, %v2560
      %v2569 = vpack.c.b16 %v2561, %v2561
      %v2571 = vshrl.u32 %v2538, 16
      %v2573 = vshll.u32 %v2538, 16
      %v2575 = vrot.slane %v2573, 1
      %v2576 = vor.u32 %v2571, %v2575
      %v2578 = vshll.u32 %v2562, 16
      %v2580 = vrot.slane %v2578, 1
      %v2581 = vsel %vm289, %v2576, %v2580
      %v2583 = vshrl.u32 %v2539, 16
      %v2585 = vshll.u32 %v2539, 16
      %v2587 = vrot.slane %v2585, 1
      %v2588 = vor.u32 %v2583, %v2587
      %v2590 = vshll.u32 %v2563, 16
      %v2592 = vrot.slane %v2590, 1
      %v2593 = vsel %vm289, %v2588, %v2592
      %v2595 = vshrl.u32 %v2540, 16
      %v2597 = vshll.u32 %v2540, 16
      %v2599 = vrot.slane %v2597, 1
      %v2600 = vor.u32 %v2595, %v2599
      %v2602 = vshll.u32 %v2564, 16
      %v2604 = vrot.slane %v2602, 1
      %v2605 = vsel %vm289, %v2600, %v2604
      %v2607 = vshrl.u32 %v2541, 16
      %v2609 = vshll.u32 %v2541, 16
      %v2611 = vrot.slane %v2609, 1
      %v2612 = vor.u32 %v2607, %v2611
      %v2614 = vshll.u32 %v2565, 16
      %v2616 = vrot.slane %v2614, 1
      %v2617 = vsel %vm289, %v2612, %v2616
      %v2619 = vshrl.u32 %v2542, 16
      %v2621 = vshll.u32 %v2542, 16
      %v2623 = vrot.slane %v2621, 1
      %v2624 = vor.u32 %v2619, %v2623
      %v2626 = vshll.u32 %v2566, 16
      %v2628 = vrot.slane %v2626, 1
      %v2629 = vsel %vm289, %v2624, %v2628
      %v2631 = vshrl.u32 %v2543, 16
      %v2633 = vshll.u32 %v2543, 16
      %v2635 = vrot.slane %v2633, 1
      %v2636 = vor.u32 %v2631, %v2635
      %v2638 = vshll.u32 %v2567, 16
      %v2640 = vrot.slane %v2638, 1
      %v2641 = vsel %vm289, %v2636, %v2640
      %v2643 = vshrl.u32 %v2544, 16
      %v2645 = vshll.u32 %v2544, 16
      %v2647 = vrot.slane %v2645, 1
      %v2648 = vor.u32 %v2643, %v2647
      %v2650 = vshll.u32 %v2568, 16
      %v2652 = vrot.slane %v2650, 1
      %v2653 = vsel %vm289, %v2648, %v2652
      %v2655 = vshrl.u32 %v2545, 16
      %v2657 = vshll.u32 %v2545, 16
      %v2659 = vrot.slane %v2657, 1
      %v2660 = vor.u32 %v2655, %v2659
      %v2662 = vshll.u32 %v2569, 16
      %v2664 = vrot.slane %v2662, 1
      %v2665 = vsel %vm289, %v2660, %v2664
      %2666 = vrot.lane.b32.xlu0 %v2581, 2
      %v2667 = vpop.permute.xlu0 %2666
      %2668 = vrot.lane.b32.xlu0 %v2593, 2
      %v2669 = vpop.permute.xlu0 %2668
      %2670 = vrot.lane.b32.xlu0 %v2605, 2
      %v2671 = vpop.permute.xlu0 %2670
      %2672 = vrot.lane.b32.xlu0 %v2617, 2
      %v2673 = vpop.permute.xlu0 %2672
      %2674 = vrot.lane.b32.xlu0 %v2629, 2
      %v2675 = vpop.permute.xlu0 %2674
      %2676 = vrot.lane.b32.xlu0 %v2641, 2
      %v2677 = vpop.permute.xlu0 %2676
      %2678 = vrot.lane.b32.xlu0 %v2653, 2
      %v2679 = vpop.permute.xlu0 %2678
      %2680 = vrot.lane.b32.xlu0 %v2665, 2
      %v2681 = vpop.permute.xlu0 %2680
      %v2682 = vrot.slane %v2538, 1
      %v2683 = vrot.slane %v2562, 1
      %v2684 = vsel %vm402, %v2682, %v2683
      %v2685 = vrot.slane %v2539, 1
      %v2686 = vrot.slane %v2563, 1
      %v2687 = vsel %vm402, %v2685, %v2686
      %v2688 = vrot.slane %v2540, 1
      %v2689 = vrot.slane %v2564, 1
      %v2690 = vsel %vm402, %v2688, %v2689
      %v2691 = vrot.slane %v2541, 1
      %v2692 = vrot.slane %v2565, 1
      %v2693 = vsel %vm402, %v2691, %v2692
      %v2694 = vrot.slane %v2542, 1
      %v2695 = vrot.slane %v2566, 1
      %v2696 = vsel %vm402, %v2694, %v2695
      %v2697 = vrot.slane %v2543, 1
      %v2698 = vrot.slane %v2567, 1
      %v2699 = vsel %vm402, %v2697, %v2698
      %v2700 = vrot.slane %v2544, 1
      %v2701 = vrot.slane %v2568, 1
      %v2702 = vsel %vm402, %v2700, %v2701
      %v2703 = vrot.slane %v2545, 1
      %v2704 = vrot.slane %v2569, 1
      %v2705 = vsel %vm402, %v2703, %v2704
      %2706 = vrot.lane.b32.xlu0 %v2684, 4
      %v2707 = vpop.permute.xlu0 %2706
      %2708 = vrot.lane.b32.xlu0 %v2687, 4
      %v2709 = vpop.permute.xlu0 %2708
      %2710 = vrot.lane.b32.xlu0 %v2690, 4
      %v2711 = vpop.permute.xlu0 %2710
      %2712 = vrot.lane.b32.xlu0 %v2693, 4
      %v2713 = vpop.permute.xlu0 %2712
      %2714 = vrot.lane.b32.xlu0 %v2696, 4
      %v2715 = vpop.permute.xlu0 %2714
      %2716 = vrot.lane.b32.xlu0 %v2699, 4
      %v2717 = vpop.permute.xlu0 %2716
      %2718 = vrot.lane.b32.xlu0 %v2702, 4
      %v2719 = vpop.permute.xlu0 %2718
      %2720 = vrot.lane.b32.xlu0 %v2705, 4
      %v2721 = vpop.permute.xlu0 %2720
      %v2722 = vrot.slane %v2571, 1
      %v2723 = vrot.slane %v2573, 2
      %v2724 = vor.u32 %v2722, %v2723
      %v2725 = vshrl.u32 %v2562, 16
      %v2727 = vrot.slane %v2725, 1
      %v2728 = vrot.slane %v2578, 2
      %v2729 = vor.u32 %v2727, %v2728
      %v2730 = vsel %vm443, %v2724, %v2729
      %v2731 = vrot.slane %v2583, 1
      %v2732 = vrot.slane %v2585, 2
      %v2733 = vor.u32 %v2731, %v2732
      %v2734 = vshrl.u32 %v2563, 16
      %v2736 = vrot.slane %v2734, 1
      %v2737 = vrot.slane %v2590, 2
      %v2738 = vor.u32 %v2736, %v2737
      %v2739 = vsel %vm443, %v2733, %v2738
      %v2740 = vrot.slane %v2595, 1
      %v2741 = vrot.slane %v2597, 2
      %v2742 = vor.u32 %v2740, %v2741
      %v2743 = vshrl.u32 %v2564, 16
      %v2745 = vrot.slane %v2743, 1
      %v2746 = vrot.slane %v2602, 2
      %v2747 = vor.u32 %v2745, %v2746
      %v2748 = vsel %vm443, %v2742, %v2747
      %v2749 = vrot.slane %v2607, 1
      %v2750 = vrot.slane %v2609, 2
      %v2751 = vor.u32 %v2749, %v2750
      %v2752 = vshrl.u32 %v2565, 16
      %v2754 = vrot.slane %v2752, 1
      %v2755 = vrot.slane %v2614, 2
      %v2756 = vor.u32 %v2754, %v2755
      %v2757 = vsel %vm443, %v2751, %v2756
      %v2758 = vrot.slane %v2619, 1
      %v2759 = vrot.slane %v2621, 2
      %v2760 = vor.u32 %v2758, %v2759
      %v2761 = vshrl.u32 %v2566, 16
      %v2763 = vrot.slane %v2761, 1
      %v2764 = vrot.slane %v2626, 2
      %v2765 = vor.u32 %v2763, %v2764
      %v2766 = vsel %vm443, %v2760, %v2765
      %v2767 = vrot.slane %v2631, 1
      %v2768 = vrot.slane %v2633, 2
      %v2769 = vor.u32 %v2767, %v2768
      %v2770 = vshrl.u32 %v2567, 16
      %v2772 = vrot.slane %v2770, 1
      %v2773 = vrot.slane %v2638, 2
      %v2774 = vor.u32 %v2772, %v2773
      %v2775 = vsel %vm443, %v2769, %v2774
      %v2776 = vrot.slane %v2643, 1
      %v2777 = vrot.slane %v2645, 2
      %v2778 = vor.u32 %v2776, %v2777
      %v2779 = vshrl.u32 %v2568, 16
      %v2781 = vrot.slane %v2779, 1
      %v2782 = vrot.slane %v2650, 2
      %v2783 = vor.u32 %v2781, %v2782
      %v2784 = vsel %vm443, %v2778, %v2783
      %v2785 = vrot.slane %v2655, 1
      %v2786 = vrot.slane %v2657, 2
      %v2787 = vor.u32 %v2785, %v2786
      %v2788 = vshrl.u32 %v2569, 16
      %v2790 = vrot.slane %v2788, 1
      %v2791 = vrot.slane %v2662, 2
      %v2792 = vor.u32 %v2790, %v2791
      %v2793 = vsel %vm443, %v2787, %v2792
      %2794 = vrot.lane.b32.xlu0 %v2730, 6
      %v2795 = vpop.permute.xlu0 %2794
      %2796 = vrot.lane.b32.xlu0 %v2739, 6
      %v2797 = vpop.permute.xlu0 %2796
      %2798 = vrot.lane.b32.xlu0 %v2748, 6
      %v2799 = vpop.permute.xlu0 %2798
      %2800 = vrot.lane.b32.xlu0 %v2757, 6
      %v2801 = vpop.permute.xlu0 %2800
      %2802 = vrot.lane.b32.xlu0 %v2766, 6
      %v2803 = vpop.permute.xlu0 %2802
      %2804 = vrot.lane.b32.xlu0 %v2775, 6
      %v2805 = vpop.permute.xlu0 %2804
      %2806 = vrot.lane.b32.xlu0 %v2784, 6
      %v2807 = vpop.permute.xlu0 %2806
      %2808 = vrot.lane.b32.xlu0 %v2793, 6
      %v2809 = vpop.permute.xlu0 %2808
      %v2810 = vrot.slane %v2538, 2
      %v2811 = vrot.slane %v2562, 2
      %v2812 = vsel %vm532, %v2810, %v2811
      %v2813 = vrot.slane %v2539, 2
      %v2814 = vrot.slane %v2563, 2
      %v2815 = vsel %vm532, %v2813, %v2814
      %v2816 = vrot.slane %v2540, 2
      %v2817 = vrot.slane %v2564, 2
      %v2818 = vsel %vm532, %v2816, %v2817
      %v2819 = vrot.slane %v2541, 2
      %v2820 = vrot.slane %v2565, 2
      %v2821 = vsel %vm532, %v2819, %v2820
      %v2822 = vrot.slane %v2542, 2
      %v2823 = vrot.slane %v2566, 2
      %v2824 = vsel %vm532, %v2822, %v2823
      %v2825 = vrot.slane %v2543, 2
      %v2826 = vrot.slane %v2567, 2
      %v2827 = vsel %vm532, %v2825, %v2826
      %v2828 = vrot.slane %v2544, 2
      %v2829 = vrot.slane %v2568, 2
      %v2830 = vsel %vm532, %v2828, %v2829
      %v2831 = vrot.slane %v2545, 2
      %v2832 = vrot.slane %v2569, 2
      %v2833 = vsel %vm532, %v2831, %v2832
      %2834 = vrot.lane.b32.xlu0 %v2812, 8
      %v2835 = vpop.permute.xlu0 %2834
      %2836 = vrot.lane.b32.xlu0 %v2815, 8
      %v2837 = vpop.permute.xlu0 %2836
      %2838 = vrot.lane.b32.xlu0 %v2818, 8
      %v2839 = vpop.permute.xlu0 %2838
      %2840 = vrot.lane.b32.xlu0 %v2821, 8
      %v2841 = vpop.permute.xlu0 %2840
      %2842 = vrot.lane.b32.xlu0 %v2824, 8
      %v2843 = vpop.permute.xlu0 %2842
      %2844 = vrot.lane.b32.xlu0 %v2827, 8
      %v2845 = vpop.permute.xlu0 %2844
      %2846 = vrot.lane.b32.xlu0 %v2830, 8
      %v2847 = vpop.permute.xlu0 %2846
      %2848 = vrot.lane.b32.xlu0 %v2833, 8
      %v2849 = vpop.permute.xlu0 %2848
      %v2851 = vsel %vm573, %v2538, %v2667
      %v2853 = vsel %vm573, %v2539, %v2669
      %v2855 = vsel %vm573, %v2540, %v2671
      %v2857 = vsel %vm573, %v2541, %v2673
      %v2859 = vsel %vm573, %v2542, %v2675
      %v2861 = vsel %vm573, %v2543, %v2677
      %v2863 = vsel %vm573, %v2544, %v2679
      %v2865 = vsel %vm573, %v2545, %v2681
      %v2867 = vsel %vm590, %v2851, %v2707
      %v2869 = vsel %vm590, %v2853, %v2709
      %v2871 = vsel %vm590, %v2855, %v2711
      %v2873 = vsel %vm590, %v2857, %v2713
      %v2875 = vsel %vm590, %v2859, %v2715
      %v2877 = vsel %vm590, %v2861, %v2717
      %v2879 = vsel %vm590, %v2863, %v2719
      %v2881 = vsel %vm590, %v2865, %v2721
      %v2883 = vsel %vm607, %v2867, %v2795
      %v2885 = vsel %vm607, %v2869, %v2797
      %v2887 = vsel %vm607, %v2871, %v2799
      %v2889 = vsel %vm607, %v2873, %v2801
      %v2891 = vsel %vm607, %v2875, %v2803
      %v2893 = vsel %vm607, %v2877, %v2805
      %v2895 = vsel %vm607, %v2879, %v2807
      %v2897 = vsel %vm607, %v2881, %v2809
      %v2899 = vsel %vm624, %v2883, %v2835
      %v2901 = vsel %vm624, %v2885, %v2837
      %v2903 = vsel %vm624, %v2887, %v2839
      %v2905 = vsel %vm624, %v2889, %v2841
      %v2907 = vsel %vm624, %v2891, %v2843
      %v2909 = vsel %vm624, %v2893, %v2845
      %v2911 = vsel %vm624, %v2895, %v2847
      %v2913 = vsel %vm624, %v2897, %v2849
      %s2914 = scalar_lea.vmem %s1, 32
      %v2915 = vld [vmem:[%s2914] sm:$0xf]
      %v2916 = vld [vmem:[%s2914 + $0x4] sm:$0x1]
      %v2919 = vunpack.c.l.b16 %v2915
      %v2920 = vunpack.c.l.b16 %v2916
      %v2921 = vpack.c.b16 %v2920, %v2919
      %v2922 = vsel %vm1087, %v2899, 0
      %v2924 = vsel %vm1087, %v2901, 0
      %v2926 = vsel %vm1087, %v2903, 0
      %v2928 = vsel %vm1087, %v2905, 0
      %v2930 = vsel %vm1087, %v2907, 0
      %v2932 = vsel %vm1087, %v2909, 0
      %v2934 = vsel %vm1087, %v2911, 0
      %v2936 = vsel %vm1087, %v2913, 0
      %v2939 = vsel %vm1104, %v2921, 0
      %2941 = vmatprep.subr.bf16.mxu0 0
      %2942 = vmatpush1.bf16.msra.mxu0 %v2939
      %2943 = vmatprep.subr.bf16.mxu0 0
      %2944 = vmatpush1.bf16.msra.mxu0 0
      %2945 = vmatprep.subr.bf16.mxu0 0
      %2946 = vmatpush1.bf16.msra.mxu0 0
      %2947 = vmatprep.subr.bf16.mxu0 0
      %2948 = vmatpush1.bf16.msra.mxu0 0
      %2949 = vmatprep.subr.bf16.mxu0 0
      %2950 = vmatpush1.bf16.msra.mxu0 0
      %2951 = vmatprep.subr.bf16.mxu0 0
      %2952 = vmatpush1.bf16.msra.mxu0 0
      %2953 = vmatprep.subr.bf16.mxu0 0
      %2954 = vmatpush1.bf16.msra.mxu0 0
      %2955 = vmatprep.subr.bf16.mxu0 0
      %2956 = vmatpush1.bf16.msra.mxu0 0
      %2957 = vmatprep.subr.bf16.mxu0 0
      %2958 = vmatpush1.bf16.msra.mxu0 0
      %2959 = vmatprep.subr.bf16.mxu0 0
      %2960 = vmatpush1.bf16.msra.mxu0 0
      %2961 = vmatprep.subr.bf16.mxu0 0
      %2962 = vmatpush1.bf16.msra.mxu0 0
      %2963 = vmatprep.subr.bf16.mxu0 0
      %2964 = vmatpush1.bf16.msra.mxu0 0
      %2965 = vmatprep.subr.bf16.mxu0 0
      %2966 = vmatpush1.bf16.msra.mxu0 0
      %2967 = vmatprep.subr.bf16.mxu0 0
      %2968 = vmatpush1.bf16.msra.mxu0 0
      %2969 = vmatprep.subr.bf16.mxu0 0
      %2970 = vmatpush1.bf16.msra.mxu0 0
      %2971 = vmatprep.subr.bf16.mxu0 0
      %2972 = vmatpush1.bf16.msra.mxu0 0
      %2973 = vmatprep.mubr.bf16.mxu0 0
      %2974 = vmatmul.mubr.bf16.gmra.mrb[0].mxu0 %v2922
      %v2975 = vpop.f32.mrb[0].mxu0
      %v2976 = vadd.f32 0.0, %v2975
      %v2977 = vpop.f32.mrb[0].mxu0
      %v2978 = vpop.f32.mrb[0].mxu0
      %v2979 = vadd.f32 0.0, %v2978
      %v2980 = vpop.f32.mrb[0].mxu0
      %2981 = vmatprep.mubr.bf16.mxu0 0
      %2982 = vmatmul.mubr.bf16.gmra.mrb[0].mxu0 %v2924
      %v2983 = vpop.f32.mrb[0].mxu0
      %v2984 = vadd.f32 0.0, %v2983
      %v2985 = vpop.f32.mrb[0].mxu0
      %v2986 = vpop.f32.mrb[0].mxu0
      %v2987 = vadd.f32 0.0, %v2986
      %v2988 = vpop.f32.mrb[0].mxu0
      %2989 = vmatprep.mubr.bf16.mxu0 0
      %2990 = vmatmul.mubr.bf16.gmra.mrb[0].mxu0 %v2926
      %v2991 = vpop.f32.mrb[0].mxu0
      %v2992 = vadd.f32 0.0, %v2991
      %v2993 = vpop.f32.mrb[0].mxu0
      %v2994 = vpop.f32.mrb[0].mxu0
      %v2995 = vadd.f32 0.0, %v2994
      %v2996 = vpop.f32.mrb[0].mxu0
      %2997 = vmatprep.mubr.bf16.mxu0 0
      %2998 = vmatmul.mubr.bf16.gmra.mrb[0].mxu0 %v2928
      %v2999 = vpop.f32.mrb[0].mxu0
      %v3000 = vadd.f32 0.0, %v2999
      %v3001 = vpop.f32.mrb[0].mxu0
      %v3002 = vpop.f32.mrb[0].mxu0
      %v3003 = vadd.f32 0.0, %v3002
      %v3004 = vpop.f32.mrb[0].mxu0
      %3005 = vmatprep.mubr.bf16.mxu0 0
      %3006 = vmatmul.mubr.bf16.gmra.mrb[0].mxu0 %v2930
      %v3007 = vpop.f32.mrb[0].mxu0
      %v3008 = vadd.f32 0.0, %v3007
      %v3009 = vpop.f32.mrb[0].mxu0
      %v3010 = vpop.f32.mrb[0].mxu0
      %v3011 = vadd.f32 0.0, %v3010
      %v3012 = vpop.f32.mrb[0].mxu0
      %3013 = vmatprep.mubr.bf16.mxu0 0
      %3014 = vmatmul.mubr.bf16.gmra.mrb[0].mxu0 %v2932
      %v3015 = vpop.f32.mrb[0].mxu0
      %v3016 = vadd.f32 0.0, %v3015
      %v3017 = vpop.f32.mrb[0].mxu0
      %v3018 = vpop.f32.mrb[0].mxu0
      %v3019 = vadd.f32 0.0, %v3018
      %v3020 = vpop.f32.mrb[0].mxu0
      %3021 = vmatprep.mubr.bf16.mxu0 0
      %3022 = vmatmul.mubr.bf16.gmra.mrb[0].mxu0 %v2934
      %v3023 = vpop.f32.mrb[0].mxu0
      %v3024 = vadd.f32 0.0, %v3023
      %v3025 = vpop.f32.mrb[0].mxu0
      %v3026 = vpop.f32.mrb[0].mxu0
      %v3027 = vadd.f32 0.0, %v3026
      %v3028 = vpop.f32.mrb[0].mxu0
      %3029 = vmatprep.mubr.bf16.mxu0 0
      %3030 = vmatmul.mubr.bf16.gmra.mrb[0].mxu0 %v2936
      %v3031 = vpop.f32.mrb[0].mxu0
      %v3032 = vadd.f32 0.0, %v3031
      %v3033 = vpop.f32.mrb[0].mxu0
      %v3034 = vpop.f32.mrb[0].mxu0
      %v3035 = vadd.f32 0.0, %v3034
      %v3036 = vpop.f32.mrb[0].mxu0
      %3037 = vdwg.mxu0
      %v3038 = vadd.f32 %v2462, %v2976
      %v3039 = vadd.f32 %v2463, %v2979
      %v3040 = vadd.f32 %v2464, %v2984
      %v3041 = vadd.f32 %v2465, %v2987
      %v3042 = vadd.f32 %v2466, %v2992
      %v3043 = vadd.f32 %v2467, %v2995
      %v3044 = vadd.f32 %v2468, %v3000
      %v3045 = vadd.f32 %v2469, %v3003
      %v3046 = vadd.f32 %v2470, %v3008
      %v3047 = vadd.f32 %v2471, %v3011
      %v3048 = vadd.f32 %v2472, %v3016
      %v3049 = vadd.f32 %v2473, %v3019
      %v3050 = vadd.f32 %v2474, %v3024
      %v3051 = vadd.f32 %v2475, %v3027
      %v3052 = vadd.f32 %v2476, %v3032
      %v3053 = vadd.f32 %v2477, %v3035
      %v3054 = vld [vmem:[%s2] sm:$0x1]
      %v3056 = vlaneseq
      %v3057 = vshrl.u32 %v3056, 7
      %v3058 = vsub.s32 0, %v3057
      %v3059 = vrot.slane %v3054, %v3058
      %v3061 = vadd.f32 %v3038, %v3059
      %v3062 = vadd.f32 %v3039, %v3059
      %v3063 = vadd.f32 %v3040, %v3059
      %v3064 = vadd.f32 %v3041, %v3059
      %v3065 = vadd.f32 %v3042, %v3059
      %v3066 = vadd.f32 %v3043, %v3059
      %v3067 = vadd.f32 %v3044, %v3059
      %v3068 = vadd.f32 %v3045, %v3059
      %v3069 = vadd.f32 %v3046, %v3059
      %v3070 = vadd.f32 %v3047, %v3059
      %v3071 = vadd.f32 %v3048, %v3059
      %v3072 = vadd.f32 %v3049, %v3059
      %v3073 = vadd.f32 %v3050, %v3059
      %v3074 = vadd.f32 %v3051, %v3059
      %v3075 = vadd.f32 %v3052, %v3059
      %v3076 = vadd.f32 %v3053, %v3059
      %v3077 = vmax.f32 %v3061, 0.0
      %v3078 = vmax.f32 %v3062, 0.0
      %v3079 = vmax.f32 %v3063, 0.0
      %v3080 = vmax.f32 %v3064, 0.0
      %v3081 = vmax.f32 %v3065, 0.0
      %v3082 = vmax.f32 %v3066, 0.0
      %v3083 = vmax.f32 %v3067, 0.0
      %v3084 = vmax.f32 %v3068, 0.0
      %v3085 = vmax.f32 %v3069, 0.0
      %v3086 = vmax.f32 %v3070, 0.0
      %v3087 = vmax.f32 %v3071, 0.0
      %v3088 = vmax.f32 %v3072, 0.0
      %v3089 = vmax.f32 %v3073, 0.0
      %v3090 = vmax.f32 %v3074, 0.0
      %v3091 = vmax.f32 %v3075, 0.0
      %v3092 = vmax.f32 %v3076, 0.0
      %3093 = vst.msk [vmem:[%s194] sm:$0xff] %vm590, %v3077
      %3094 = vst.msk [vmem:[%s194 + $0x8] sm:$0xff] %vm590, %v3078
      %3095 = vst.msk [vmem:[%s194 + $0x10] sm:$0xff] %vm590, %v3079
      %3096 = vst.msk [vmem:[%s194 + $0x18] sm:$0xff] %vm590, %v3080
      %3097 = vst.msk [vmem:[%s194 + $0x20] sm:$0xff] %vm590, %v3081
      %3098 = vst.msk [vmem:[%s194 + $0x28] sm:$0xff] %vm590, %v3082
      %3099 = vst.msk [vmem:[%s194 + $0x30] sm:$0xff] %vm590, %v3083
      %3100 = vst.msk [vmem:[%s194 + $0x38] sm:$0xff] %vm590, %v3084
      %3101 = vst.msk [vmem:[%s194 + $0x40] sm:$0xff] %vm590, %v3085
      %3102 = vst.msk [vmem:[%s194 + $0x48] sm:$0xff] %vm590, %v3086
      %3103 = vst.msk [vmem:[%s194 + $0x50] sm:$0xff] %vm590, %v3087
      %3104 = vst.msk [vmem:[%s194 + $0x58] sm:$0xff] %vm590, %v3088
      %3105 = vst.msk [vmem:[%s194 + $0x60] sm:$0xff] %vm590, %v3089
      %3106 = vst.msk [vmem:[%s194 + $0x68] sm:$0xff] %vm590, %v3090
      %3107 = vst.msk [vmem:[%s194 + $0x70] sm:$0xff] %vm590, %v3091
      %3108 = vst.msk [vmem:[%s194 + $0x78] sm:$0xff] %vm590, %v3092
      %s3109 = smul.u32 8, %s19
      %p3110 = scmp.lt.s32.totalorder %s18, 1
      %s3111 = scalar_select %p3110, %s18, 1
      %p3112 = scmp.lt.s32.totalorder %s3109, 15
      %s3113 = scalar_select %p3112, %s3109, 15
      %s3114 = smul.addr %s3113, 2
      %s3115 = smul.addr %s3111, 32
      %s3116 = sadd.s32 %s3114, %s3115
      %s3117 = smul.addr %s3116, 8
      %s3118 = scalar_lea.vmem %s3, %s3117
      // Predicated region
      $region33: #{inception_block.5} parent=31 // pred_check
        %p3119 = pneg %p114
      $region34: #{inception_block.5} parent=31 // pred_check_branch
        %3121 = sbr.rel (%p3119) target = $region36
      $region35: #{inception_block.5} parent=31 // pred_region
        %s3122 = smul.u32 8, %s19
      $region36: #{inception_block.5} parent=31 // pred_fallthru
        _
    $region32: #{inception_block.5} parent=5 // pred_fallthru
      _
    %p3123 = scmp.le.s32.totalorder 2, %s9
    // Predicated region
    $region37: #{inception_block.5} parent=5 // pred_check
      %p3124 = pneg %p3123
    $region38: #{inception_block.5} parent=5 // pred_check_branch
      %3126 = sbr.rel (%p3124) target = $region40
    $region39: #{inception_block.5} parent=5 // pred_region
      %s3127 = ssub.s32 %s9, 2
      // Predicated region
      $region41: #{inception_block.5} parent=39 // pred_check
        %p3128 = pneg %p120
      $region42: #{inception_block.5} parent=39 // pred_check_branch
        %3130 = sbr.rel (%p3128) target = $region44
      $region43: #{inception_block.5} parent=39 // pred_region
        %s3131 = smul.u32 8, %s21
        %p3132 = scmp.lt.s32.totalorder %s20, 1
        %s3133 = scalar_select %p3132, %s20, 1
        %p3134 = scmp.lt.s32.totalorder %s3131, 15
        %s3135 = scalar_select %p3134, %s3131, 15
        %s3136 = smul.addr %s3135, 2
        %s3137 = smul.addr %s3133, 32
        %s3138 = sadd.s32 %s3136, %s3137
        %s3139 = smul.addr %s3138, 8
        %s3140 = scalar_lea.vmem %s3, %s3139
      $region44: #{inception_block.5} parent=39 // pred_fallthru
        _
    $region40: #{inception_block.5} parent=5 // pred_fallthru
      _
  $region6: #{inception_block.5} parent=0 // loop_footer
    %s13 = sadd.s32 1, %s9
  $region7: #{inception_block.5} parent=0 // loop_footer_branch
    %8 = sbr.rel target = $region3
  $region8: #{inception_block.5} parent=0 // loop_exit
    _

</llo_original>
